<compile_context>
chip_gen: v7x
topology: tpu7x:2x2x1
jax: 0.10.0
libtpu: 0.0.40
codegen_flags: <defaults>
</compile_context>

<pallas_src>
import functools

import jax
import jax.numpy as jnp
from jax.experimental import pallas as pl
from jax.experimental.pallas import tpu as pltpu


# ----------------------------------------------------------------------------
# Pallas kernels (all operate in the transposed / channel-major layout)
# ----------------------------------------------------------------------------
def _mm_kernel(w_ref, a_ref, b_ref, o_ref, *, relu):
    # w: (Co, K) bf16   a: (K, bm) bf16   b: (Co, 1) f32   o: (Co, bm)
    y = jnp.dot(w_ref[...], a_ref[...], preferred_element_type=jnp.float32)
    y = y + b_ref[...]
    if relu:
        y = jnp.maximum(y, 0.0)
    o_ref[...] = y.astype(o_ref.dtype)


def _mm_res_kernel(w_ref, a_ref, b_ref, r_ref, o_ref, *, relu):
    # identity-shortcut variant: + residual (Co, bm) streamed in bf16
    y = jnp.dot(w_ref[...], a_ref[...], preferred_element_type=jnp.float32)
    y = y + b_ref[...] + r_ref[...].astype(jnp.float32)
    if relu:
        y = jnp.maximum(y, 0.0)
    o_ref[...] = y.astype(o_ref.dtype)


def _mm_scmm_kernel(w_ref, a_ref, b_ref, wsc_ref, xsc_ref, o_ref, *, relu):
    # conv-shortcut variant: the 1x1 shortcut conv (+ its folded BN) is a second
    # MXU dot fused into the same kernel; bias already holds b2 + b_sc.
    y = jnp.dot(w_ref[...], a_ref[...], preferred_element_type=jnp.float32)
    y = y + jnp.dot(wsc_ref[...], xsc_ref[...],
                    preferred_element_type=jnp.float32)
    y = y + b_ref[...]
    if relu:
        y = jnp.maximum(y, 0.0)
    o_ref[...] = y.astype(o_ref.dtype)


def _pool_linear_kernel(x_ref, p_ref, w_ref, b_ref, o_ref):
    # x: (C, N*HW)  p: (N*HW, N) pooling matrix  w: (NC, C)  b: (NC, 1)
    pooled = jnp.dot(x_ref[...], p_ref[...],
                     preferred_element_type=jnp.float32)          # (C, N)
    y = jnp.dot(w_ref[...], pooled.astype(jnp.bfloat16),
                preferred_element_type=jnp.float32)               # (NC, N)
    o_ref[...] = y + b_ref[...]


def _pick_block_m(m):
    # Biggest lane tile that divides M with >=2 grid steps (v7x megacore),
    # otherwise the whole (small) layer in one step — never pad M.
    for bm in (512, 256, 128):
        if m % bm == 0 and m // bm >= 2:
            return bm
    return m


def conv_mm(w, a, bias, *, relu, residual=None, shortcut=None,
            out_dtype=jnp.bfloat16):
    """out(Co, M) = act( w(Co,K) @ a(K,M) + bias [+ residual | + wsc @ xsc] )."""
    Co, K = w.shape
    K2, M = a.shape
    assert K == K2
    bm = _pick_block_m(M)
    grid = (M // bm,)

    in_specs = [
        pl.BlockSpec((Co, K), lambda i: (0, 0)),      # weights: resident
        pl.BlockSpec((K, bm), lambda i: (0, i)),      # patches: lane-tiled
        pl.BlockSpec((Co, 1), lambda i: (0, 0)),      # bias
    ]
    args = [w.astype(jnp.bfloat16), a.astype(jnp.bfloat16),
            bias.reshape(Co, 1).astype(jnp.float32)]

    if shortcut is not None:
        wsc, xsc = shortcut
        Ci = wsc.shape[1]
        in_specs += [pl.BlockSpec((Co, Ci), lambda i: (0, 0)),
                     pl.BlockSpec((Ci, bm), lambda i: (0, i))]
        args += [wsc.astype(jnp.bfloat16), xsc.astype(jnp.bfloat16)]
        kernel = functools.partial(_mm_scmm_kernel, relu=relu)
    elif residual is not None:
        in_specs += [pl.BlockSpec((Co, bm), lambda i: (0, i))]
        args += [residual.astype(jnp.bfloat16)]
        kernel = functools.partial(_mm_res_kernel, relu=relu)
    else:
        kernel = functools.partial(_mm_kernel, relu=relu)

    return pl.pallas_call(
        kernel,
        out_shape=jax.ShapeDtypeStruct((Co, M), out_dtype),
        grid=grid,
        in_specs=in_specs,
        out_specs=pl.BlockSpec((Co, bm), lambda i: (0, i)),
        compiler_params=pltpu.CompilerParams(
            dimension_semantics=("parallel",)),
    )(*args)


def pool_linear(x_cm, n, w_lin, b_lin):
    """Fused avg_pool2d(out, HxW) + Linear.  x_cm: (C, N*HW) -> (N, classes)."""
    C, M = x_cm.shape
    hw = M // n
    pool = (jnp.arange(M)[:, None] // hw == jnp.arange(n)[None, :])
    pool = (pool.astype(jnp.float32) / hw).astype(jnp.bfloat16)    # (M, N)
    nc = w_lin.shape[0]
    logits_t = pl.pallas_call(
        _pool_linear_kernel,
        out_shape=jax.ShapeDtypeStruct((nc, n), jnp.float32),
        grid=(1,),
        in_specs=[
            pl.BlockSpec((C, M), lambda i: (0, 0)),
            pl.BlockSpec((M, n), lambda i: (0, 0)),
            pl.BlockSpec((nc, C), lambda i: (0, 0)),
            pl.BlockSpec((nc, 1), lambda i: (0, 0)),
        ],
        out_specs=pl.BlockSpec((nc, n), lambda i: (0, 0)),
    )(x_cm.astype(jnp.bfloat16), pool,
      w_lin.astype(jnp.bfloat16), b_lin.reshape(nc, 1).astype(jnp.float32))
    return jnp.transpose(logits_t)                                 # (N, classes)


# ----------------------------------------------------------------------------
# Plain-JAX glue: channel-major im2col, weight reshaping + BN folding
# ----------------------------------------------------------------------------
def im2col_cm(x, kh, kw, stride, padding):
    """x: (C, N, H, W) -> A_T (kh*kw*C, N*Ho*Wo), Ho, Wo.  Tap-major K order."""
    C, N, H, W = x.shape
    xp = jnp.pad(x, ((0, 0), (0, 0), (padding, padding), (padding, padding)))
    Ho = (H + 2 * padding - kh) // stride + 1
    Wo = (W + 2 * padding - kw) // stride + 1
    taps = []
    for i in range(kh):
        for j in range(kw):
            taps.append(xp[:, :, i:i + stride * Ho:stride,
                              j:j + stride * Wo:stride])
    a = jnp.concatenate(taps, axis=0)                 # (kh*kw*C, N, Ho, Wo)
    return a.reshape(kh * kw * C, N * Ho * Wo), Ho, Wo


def conv_w_cm(w, scale):
    """(Cout, Cin, kh, kw) torch weight -> (Cout, kh*kw*Cin), BN scale folded."""
    cout, cin, kh, kw = w.shape
    wm = jnp.transpose(w, (0, 2, 3, 1)).reshape(cout, kh * kw * cin)
    return wm * scale[:, None]


def fold_bn(gamma, beta, mean, var, eps=1e-5):
    scale = gamma / jnp.sqrt(var + eps)
    bias = beta - mean * scale
    return scale, bias


# ----------------------------------------------------------------------------
# Parameter initialization (deterministic, PyTorch-shaped)
# ----------------------------------------------------------------------------
class KeyGen:
    def __init__(self, key):
        self.key = key

    def __call__(self):
        self.key, k = jax.random.split(self.key)
        return k


def conv_weight(key, cout, cin, kh, kw):
    fan_in = cin * kh * kw
    std = (2.0 / fan_in) ** 0.5
    return jax.random.normal(key, (cout, cin, kh, kw), jnp.float32) * std


def bn_params(key, c):
    k1, k2, k3, k4 = jax.random.split(key, 4)
    gamma = 1.0 + 0.1 * jax.random.normal(k1, (c,), jnp.float32)
    beta = 0.1 * jax.random.normal(k2, (c,), jnp.float32)
    mean = 0.1 * jax.random.normal(k3, (c,), jnp.float32)
    var = 1.0 + 0.1 * jnp.abs(jax.random.normal(k4, (c,), jnp.float32))
    return gamma, beta, mean, var


NUM_BLOCKS = [1, 1, 1, 1]
NUM_CLASSES = 10


def init_params(key):
    kg = KeyGen(key)
    params = {
        "conv1": conv_weight(kg(), 8, 3, 3, 3),
        "bn1": bn_params(kg(), 8),
    }
    in_planes = 8
    layers = []
    for planes, nb, stride in [(8, NUM_BLOCKS[0], 1), (16, NUM_BLOCKS[1], 2),
                               (32, NUM_BLOCKS[2], 2), (64, NUM_BLOCKS[3], 2)]:
        stage = []
        strides = [stride] + [1] * (nb - 1)
        for s in strides:
            blk = {
                "stride": s,
                "planes": planes,
                "w1": conv_weight(kg(), planes, in_planes, 3, 3),
                "bn1": bn_params(kg(), planes),
                "w2": conv_weight(kg(), planes, planes, 3, 3),
                "bn2": bn_params(kg(), planes),
            }
            if s != 1 or in_planes != planes:
                blk["sc_w"] = conv_weight(kg(), planes, in_planes, 1, 1)
                blk["sc_bn"] = bn_params(kg(), planes)
            stage.append(blk)
            in_planes = planes
        layers.append(stage)
    params["layers"] = layers
    params["linear"] = {
        "w": jax.random.normal(kg(), (NUM_CLASSES, 64), jnp.float32) * (1.0 / 64) ** 0.5,
        "b": 0.01 * jax.random.normal(kg(), (NUM_CLASSES,), jnp.float32),
    }
    return params


# ----------------------------------------------------------------------------
# Model forward (channel-major activations throughout)
# ----------------------------------------------------------------------------
def basic_block_forward(x, blk):
    # x: (Cin, N, H, W) channel-major bf16
    Cin, N, H, W = x.shape
    stride = blk["stride"]
    planes = blk["planes"]

    s1, b1 = fold_bn(*blk["bn1"])
    s2, b2 = fold_bn(*blk["bn2"])

    # conv1 3x3 (stride) -> bn1 -> relu
    a1, Ho, Wo = im2col_cm(x, 3, 3, stride, 1)
    h = conv_mm(conv_w_cm(blk["w1"], s1), a1, b1, relu=True)     # (planes, M)
    h4 = h.reshape(planes, N, Ho, Wo)

    # conv2 3x3 (stride 1) -> bn2 -> (+ shortcut) -> relu
    a2, _, _ = im2col_cm(h4, 3, 3, 1, 1)
    w2 = conv_w_cm(blk["w2"], s2)
    if "sc_w" in blk:
        # 1x1 conv (stride) + bn shortcut, fused into the conv2 kernel as a
        # second MXU dot; the two folded biases are combined outside.
        ssc, bsc = fold_bn(*blk["sc_bn"])
        wsc = conv_w_cm(blk["sc_w"], ssc)                         # (planes, Cin)
        xsc = x[:, :, ::stride, ::stride].reshape(Cin, N * Ho * Wo)
        out = conv_mm(w2, a2, b2 + bsc, relu=True, shortcut=(wsc, xsc))
    else:
        res = x.reshape(Cin, N * H * W)                           # identity
        out = conv_mm(w2, a2, b2, relu=True, residual=res)
    return out.reshape(planes, N, Ho, Wo)


def resnet_forward(params, x_nchw):
    # Input follows PyTorch NCHW convention -> channel-major (C, N, H, W) bf16.
    x = jnp.transpose(x_nchw, (1, 0, 2, 3)).astype(jnp.bfloat16)
    N = x_nchw.shape[0]

    # stem: conv1 -> bn1 -> relu
    s, b = fold_bn(*params["bn1"])
    a, Ho, Wo = im2col_cm(x, 3, 3, 1, 1)
    h = conv_mm(conv_w_cm(params["conv1"], s), a, b, relu=True)
    h = h.reshape(8, N, Ho, Wo)

    # residual stages
    for stage in params["layers"]:
        for blk in stage:
            h = basic_block_forward(h, blk)

    # avg_pool2d(out, 4) (global over the final 4x4) + Linear, fused.
    C, Nn, Hh, Ww = h.shape
    logits = pool_linear(h.reshape(C, Nn * Hh * Ww), Nn,
                         params["linear"]["w"], params["linear"]["b"])
    return logits


# ----------------------------------------------------------------------------
if __name__ == "__main__":
    key = jax.random.PRNGKey(0)
    pkey, xkey = jax.random.split(key)
    params = init_params(pkey)

    # small CIFAR-like input: batch=2, channels=3, spatial=32x32 (NCHW)
    x = jax.random.normal(xkey, (2, 3, 32, 32), jnp.float32)

    fwd = jax.jit(functools.partial(resnet_forward, params))
    out = fwd(x)
    out = jax.block_until_ready(out)
    assert out.shape == (2, NUM_CLASSES), out.shape
    assert bool(jnp.all(jnp.isfinite(out)))
    print("KERNEL_OK")
</pallas_src>

<mosaic_0001>
module attributes {stable_mosaic.version = 11 : i64} {
  func.func @_mm_kernel(%arg0: i32, %arg1: memref<8x27xbf16, #tpu.memory_space<vmem>>, %arg2: memref<27x512xbf16, #tpu.memory_space<vmem>>, %arg3: memref<8x1xf32, #tpu.memory_space<vmem>>, %arg4: memref<8x512xbf16, #tpu.memory_space<vmem>>) attributes {dimension_semantics = [#tpu.dimension_semantics<parallel>], iteration_bounds = array<i64: 4>, scalar_prefetch = 0 : i64, scratch_operands = 0 : i64, tpu.core_type = #tpu.core_type<tc>, window_params = [{pipeline_mode = #tpu.pipeline_mode<synchronous>, transform_indices = @transform_0, window_bounds = array<i64: 8, 27>}, {transform_indices = @transform_1, window_bounds = array<i64: 27, 512>}, {pipeline_mode = #tpu.pipeline_mode<synchronous>, transform_indices = @transform_2, window_bounds = array<i64: 8, 1>}, {transform_indices = @transform_3, window_bounds = array<i64: 8, 512>}]} {
    %c0 = arith.constant 0 : index
    %c0_0 = arith.constant 0 : index
    %0 = vector.load %arg1[%c0, %c0_0] : memref<8x27xbf16, #tpu.memory_space<vmem>>, vector<8x27xbf16>
    %c0_1 = arith.constant 0 : index
    %c0_2 = arith.constant 0 : index
    %1 = vector.load %arg2[%c0_1, %c0_2] : memref<27x512xbf16, #tpu.memory_space<vmem>>, vector<27x512xbf16>
    %cst = arith.constant dense<0.000000e+00> : vector<8x512xf32>
    %2 = tpu.matmul %0, %1, %cst {dimension_numbers = #tpu.dot_dimension_numbers<[1], [0], [0], [1], [0, 0, 1, 1], [], []>} : vector<8x27xbf16>, vector<27x512xbf16>, vector<8x512xf32> -> vector<8x512xf32>
    %c0_3 = arith.constant 0 : index
    %c0_4 = arith.constant 0 : index
    %3 = vector.load %arg3[%c0_3, %c0_4] : memref<8x1xf32, #tpu.memory_space<vmem>>, vector<8x1xf32>
    %4 = vector.broadcast %3 : vector<8x1xf32> to vector<8x512xf32>
    %5 = arith.addf %2, %4 : vector<8x512xf32>
    %cst_5 = arith.constant 0.000000e+00 : f32
    %6 = vector.broadcast %cst_5 : f32 to vector<8x512xf32>
    %7 = arith.maximumf %5, %6 : vector<8x512xf32>
    %8 = arith.truncf %7 : vector<8x512xf32> to vector<8x512xbf16>
    %c0_6 = arith.constant 0 : index
    %c0_7 = arith.constant 0 : index
    %9 = vector.load %arg4[%c0_6, %c0_7] : memref<8x512xbf16, #tpu.memory_space<vmem>>, vector<8x512xbf16>
    tpu.vector_store %arg4[%c0_6, %c0_7], %8 {strides = array<i32>} : memref<8x512xbf16, #tpu.memory_space<vmem>>, vector<8x512xbf16>,
    return
  }
  func.func @transform_0(%arg0: i32) -> (i32, i32) {
    %c0_i32 = arith.constant 0 : i32
    %c0_i32_0 = arith.constant 0 : i32
    %c0_i32_1 = arith.constant 0 : i32
    return %c0_i32, %c0_i32_0 : i32, i32
  }
  func.func @transform_1(%arg0: i32) -> (i32, i32) {
    %c0_i32 = arith.constant 0 : i32
    %c0_i32_0 = arith.constant 0 : i32
    return %c0_i32, %arg0 : i32, i32
  }
  func.func @transform_2(%arg0: i32) -> (i32, i32) {
    %c0_i32 = arith.constant 0 : i32
    %c0_i32_0 = arith.constant 0 : i32
    %c0_i32_1 = arith.constant 0 : i32
    return %c0_i32, %c0_i32_0 : i32, i32
  }
  func.func @transform_3(%arg0: i32) -> (i32, i32) {
    %c0_i32 = arith.constant 0 : i32
    %c0_i32_0 = arith.constant 0 : i32
    return %c0_i32, %arg0 : i32, i32
  }
}

module attributes {stable_mosaic.version = 11 : i64} {
  func.func @_mm_kernel(%arg0: i32, %arg1: memref<8x72xbf16, #tpu.memory_space<vmem>>, %arg2: memref<72x512xbf16, #tpu.memory_space<vmem>>, %arg3: memref<8x1xf32, #tpu.memory_space<vmem>>, %arg4: memref<8x512xbf16, #tpu.memory_space<vmem>>) attributes {dimension_semantics = [#tpu.dimension_semantics<parallel>], iteration_bounds = array<i64: 4>, scalar_prefetch = 0 : i64, scratch_operands = 0 : i64, tpu.core_type = #tpu.core_type<tc>, window_params = [{pipeline_mode = #tpu.pipeline_mode<synchronous>, transform_indices = @transform_0, window_bounds = array<i64: 8, 72>}, {transform_indices = @transform_1, window_bounds = array<i64: 72, 512>}, {pipeline_mode = #tpu.pipeline_mode<synchronous>, transform_indices = @transform_2, window_bounds = array<i64: 8, 1>}, {transform_indices = @transform_3, window_bounds = array<i64: 8, 512>}]} {
    %c0 = arith.constant 0 : index
    %c0_0 = arith.constant 0 : index
    %0 = vector.load %arg1[%c0, %c0_0] : memref<8x72xbf16, #tpu.memory_space<vmem>>, vector<8x72xbf16>
    %c0_1 = arith.constant 0 : index
    %c0_2 = arith.constant 0 : index
    %1 = vector.load %arg2[%c0_1, %c0_2] : memref<72x512xbf16, #tpu.memory_space<vmem>>, vector<72x512xbf16>
    %cst = arith.constant dense<0.000000e+00> : vector<8x512xf32>
    %2 = tpu.matmul %0, %1, %cst {dimension_numbers = #tpu.dot_dimension_numbers<[1], [0], [0], [1], [0, 0, 1, 1], [], []>} : vector<8x72xbf16>, vector<72x512xbf16>, vector<8x512xf32> -> vector<8x512xf32>
    %c0_3 = arith.constant 0 : index
    %c0_4 = arith.constant 0 : index
    %3 = vector.load %arg3[%c0_3, %c0_4] : memref<8x1xf32, #tpu.memory_space<vmem>>, vector<8x1xf32>
    %4 = vector.broadcast %3 : vector<8x1xf32> to vector<8x512xf32>
    %5 = arith.addf %2, %4 : vector<8x512xf32>
    %cst_5 = arith.constant 0.000000e+00 : f32
    %6 = vector.broadcast %cst_5 : f32 to vector<8x512xf32>
    %7 = arith.maximumf %5, %6 : vector<8x512xf32>
    %8 = arith.truncf %7 : vector<8x512xf32> to vector<8x512xbf16>
    %c0_6 = arith.constant 0 : index
    %c0_7 = arith.constant 0 : index
    %9 = vector.load %arg4[%c0_6, %c0_7] : memref<8x512xbf16, #tpu.memory_space<vmem>>, vector<8x512xbf16>
    tpu.vector_store %arg4[%c0_6, %c0_7], %8 {strides = array<i32>} : memref<8x512xbf16, #tpu.memory_space<vmem>>, vector<8x512xbf16>,
    return
  }
  func.func @transform_0(%arg0: i32) -> (i32, i32) {
    %c0_i32 = arith.constant 0 : i32
    %c0_i32_0 = arith.constant 0 : i32
    %c0_i32_1 = arith.constant 0 : i32
    return %c0_i32, %c0_i32_0 : i32, i32
  }
  func.func @transform_1(%arg0: i32) -> (i32, i32) {
    %c0_i32 = arith.constant 0 : i32
    %c0_i32_0 = arith.constant 0 : i32
    return %c0_i32, %arg0 : i32, i32
  }
  func.func @transform_2(%arg0: i32) -> (i32, i32) {
    %c0_i32 = arith.constant 0 : i32
    %c0_i32_0 = arith.constant 0 : i32
    %c0_i32_1 = arith.constant 0 : i32
    return %c0_i32, %c0_i32_0 : i32, i32
  }
  func.func @transform_3(%arg0: i32) -> (i32, i32) {
    %c0_i32 = arith.constant 0 : i32
    %c0_i32_0 = arith.constant 0 : i32
    return %c0_i32, %arg0 : i32, i32
  }
}

module attributes {stable_mosaic.version = 11 : i64} {
  func.func @_mm_res_kernel(%arg0: i32, %arg1: memref<8x72xbf16, #tpu.memory_space<vmem>>, %arg2: memref<72x512xbf16, #tpu.memory_space<vmem>>, %arg3: memref<8x1xf32, #tpu.memory_space<vmem>>, %arg4: memref<8x512xbf16, #tpu.memory_space<vmem>>, %arg5: memref<8x512xbf16, #tpu.memory_space<vmem>>) attributes {dimension_semantics = [#tpu.dimension_semantics<parallel>], iteration_bounds = array<i64: 4>, scalar_prefetch = 0 : i64, scratch_operands = 0 : i64, tpu.core_type = #tpu.core_type<tc>, window_params = [{pipeline_mode = #tpu.pipeline_mode<synchronous>, transform_indices = @transform_0, window_bounds = array<i64: 8, 72>}, {transform_indices = @transform_1, window_bounds = array<i64: 72, 512>}, {pipeline_mode = #tpu.pipeline_mode<synchronous>, transform_indices = @transform_2, window_bounds = array<i64: 8, 1>}, {transform_indices = @transform_3, window_bounds = array<i64: 8, 512>}, {transform_indices = @transform_4, window_bounds = array<i64: 8, 512>}]} {
    %c0 = arith.constant 0 : index
    %c0_0 = arith.constant 0 : index
    %0 = vector.load %arg1[%c0, %c0_0] : memref<8x72xbf16, #tpu.memory_space<vmem>>, vector<8x72xbf16>
    %c0_1 = arith.constant 0 : index
    %c0_2 = arith.constant 0 : index
    %1 = vector.load %arg2[%c0_1, %c0_2] : memref<72x512xbf16, #tpu.memory_space<vmem>>, vector<72x512xbf16>
    %cst = arith.constant dense<0.000000e+00> : vector<8x512xf32>
    %2 = tpu.matmul %0, %1, %cst {dimension_numbers = #tpu.dot_dimension_numbers<[1], [0], [0], [1], [0, 0, 1, 1], [], []>} : vector<8x72xbf16>, vector<72x512xbf16>, vector<8x512xf32> -> vector<8x512xf32>
    %c0_3 = arith.constant 0 : index
    %c0_4 = arith.constant 0 : index
    %3 = vector.load %arg3[%c0_3, %c0_4] : memref<8x1xf32, #tpu.memory_space<vmem>>, vector<8x1xf32>
    %4 = vector.broadcast %3 : vector<8x1xf32> to vector<8x512xf32>
    %5 = arith.addf %2, %4 : vector<8x512xf32>
    %c0_5 = arith.constant 0 : index
    %c0_6 = arith.constant 0 : index
    %6 = vector.load %arg4[%c0_5, %c0_6] : memref<8x512xbf16, #tpu.memory_space<vmem>>, vector<8x512xbf16>
    %7 = arith.extf %6 : vector<8x512xbf16> to vector<8x512xf32>
    %8 = arith.addf %5, %7 : vector<8x512xf32>
    %cst_7 = arith.constant 0.000000e+00 : f32
    %9 = vector.broadcast %cst_7 : f32 to vector<8x512xf32>
    %10 = arith.maximumf %8, %9 : vector<8x512xf32>
    %11 = arith.truncf %10 : vector<8x512xf32> to vector<8x512xbf16>
    %c0_8 = arith.constant 0 : index
    %c0_9 = arith.constant 0 : index
    %12 = vector.load %arg5[%c0_8, %c0_9] : memref<8x512xbf16, #tpu.memory_space<vmem>>, vector<8x512xbf16>
    tpu.vector_store %arg5[%c0_8, %c0_9], %11 {strides = array<i32>} : memref<8x512xbf16, #tpu.memory_space<vmem>>, vector<8x512xbf16>,
    return
  }
  func.func @transform_0(%arg0: i32) -> (i32, i32) {
    %c0_i32 = arith.constant 0 : i32
    %c0_i32_0 = arith.constant 0 : i32
    %c0_i32_1 = arith.constant 0 : i32
    return %c0_i32, %c0_i32_0 : i32, i32
  }
  func.func @transform_1(%arg0: i32) -> (i32, i32) {
    %c0_i32 = arith.constant 0 : i32
    %c0_i32_0 = arith.constant 0 : i32
    return %c0_i32, %arg0 : i32, i32
  }
  func.func @transform_2(%arg0: i32) -> (i32, i32) {
    %c0_i32 = arith.constant 0 : i32
    %c0_i32_0 = arith.constant 0 : i32
    %c0_i32_1 = arith.constant 0 : i32
    return %c0_i32, %c0_i32_0 : i32, i32
  }
  func.func @transform_3(%arg0: i32) -> (i32, i32) {
    %c0_i32 = arith.constant 0 : i32
    %c0_i32_0 = arith.constant 0 : i32
    return %c0_i32, %arg0 : i32, i32
  }
  func.func @transform_4(%arg0: i32) -> (i32, i32) {
    %c0_i32 = arith.constant 0 : i32
    %c0_i32_0 = arith.constant 0 : i32
    return %c0_i32, %arg0 : i32, i32
  }
}

module attributes {stable_mosaic.version = 11 : i64} {
  func.func @_mm_kernel(%arg0: i32, %arg1: memref<16x72xbf16, #tpu.memory_space<vmem>>, %arg2: memref<72x256xbf16, #tpu.memory_space<vmem>>, %arg3: memref<16x1xf32, #tpu.memory_space<vmem>>, %arg4: memref<16x256xbf16, #tpu.memory_space<vmem>>) attributes {dimension_semantics = [#tpu.dimension_semantics<parallel>], iteration_bounds = array<i64: 2>, scalar_prefetch = 0 : i64, scratch_operands = 0 : i64, tpu.core_type = #tpu.core_type<tc>, window_params = [{pipeline_mode = #tpu.pipeline_mode<synchronous>, transform_indices = @transform_0, window_bounds = array<i64: 16, 72>}, {transform_indices = @transform_1, window_bounds = array<i64: 72, 256>}, {pipeline_mode = #tpu.pipeline_mode<synchronous>, transform_indices = @transform_2, window_bounds = array<i64: 16, 1>}, {transform_indices = @transform_3, window_bounds = array<i64: 16, 256>}]} {
    %c0 = arith.constant 0 : index
    %c0_0 = arith.constant 0 : index
    %0 = vector.load %arg1[%c0, %c0_0] : memref<16x72xbf16, #tpu.memory_space<vmem>>, vector<16x72xbf16>
    %c0_1 = arith.constant 0 : index
    %c0_2 = arith.constant 0 : index
    %1 = vector.load %arg2[%c0_1, %c0_2] : memref<72x256xbf16, #tpu.memory_space<vmem>>, vector<72x256xbf16>
    %cst = arith.constant dense<0.000000e+00> : vector<16x256xf32>
    %2 = tpu.matmul %0, %1, %cst {dimension_numbers = #tpu.dot_dimension_numbers<[1], [0], [0], [1], [0, 0, 1, 1], [], []>} : vector<16x72xbf16>, vector<72x256xbf16>, vector<16x256xf32> -> vector<16x256xf32>
    %c0_3 = arith.constant 0 : index
    %c0_4 = arith.constant 0 : index
    %3 = vector.load %arg3[%c0_3, %c0_4] : memref<16x1xf32, #tpu.memory_space<vmem>>, vector<16x1xf32>
    %4 = vector.broadcast %3 : vector<16x1xf32> to vector<16x256xf32>
    %5 = arith.addf %2, %4 : vector<16x256xf32>
    %cst_5 = arith.constant 0.000000e+00 : f32
    %6 = vector.broadcast %cst_5 : f32 to vector<16x256xf32>
    %7 = arith.maximumf %5, %6 : vector<16x256xf32>
    %8 = arith.truncf %7 : vector<16x256xf32> to vector<16x256xbf16>
    %c0_6 = arith.constant 0 : index
    %c0_7 = arith.constant 0 : index
    %9 = vector.load %arg4[%c0_6, %c0_7] : memref<16x256xbf16, #tpu.memory_space<vmem>>, vector<16x256xbf16>
    tpu.vector_store %arg4[%c0_6, %c0_7], %8 {strides = array<i32>} : memref<16x256xbf16, #tpu.memory_space<vmem>>, vector<16x256xbf16>,
    return
  }
  func.func @transform_0(%arg0: i32) -> (i32, i32) {
    %c0_i32 = arith.constant 0 : i32
    %c0_i32_0 = arith.constant 0 : i32
    %c0_i32_1 = arith.constant 0 : i32
    return %c0_i32, %c0_i32_0 : i32, i32
  }
  func.func @transform_1(%arg0: i32) -> (i32, i32) {
    %c0_i32 = arith.constant 0 : i32
    %c0_i32_0 = arith.constant 0 : i32
    return %c0_i32, %arg0 : i32, i32
  }
  func.func @transform_2(%arg0: i32) -> (i32, i32) {
    %c0_i32 = arith.constant 0 : i32
    %c0_i32_0 = arith.constant 0 : i32
    %c0_i32_1 = arith.constant 0 : i32
    return %c0_i32, %c0_i32_0 : i32, i32
  }
  func.func @transform_3(%arg0: i32) -> (i32, i32) {
    %c0_i32 = arith.constant 0 : i32
    %c0_i32_0 = arith.constant 0 : i32
    return %c0_i32, %arg0 : i32, i32
  }
}

module attributes {stable_mosaic.version = 11 : i64} {
  func.func @_mm_scmm_kernel(%arg0: i32, %arg1: memref<16x144xbf16, #tpu.memory_space<vmem>>, %arg2: memref<144x256xbf16, #tpu.memory_space<vmem>>, %arg3: memref<16x1xf32, #tpu.memory_space<vmem>>, %arg4: memref<16x8xbf16, #tpu.memory_space<vmem>>, %arg5: memref<8x256xbf16, #tpu.memory_space<vmem>>, %arg6: memref<16x256xbf16, #tpu.memory_space<vmem>>) attributes {dimension_semantics = [#tpu.dimension_semantics<parallel>], iteration_bounds = array<i64: 2>, scalar_prefetch = 0 : i64, scratch_operands = 0 : i64, tpu.core_type = #tpu.core_type<tc>, window_params = [{pipeline_mode = #tpu.pipeline_mode<synchronous>, transform_indices = @transform_0, window_bounds = array<i64: 16, 144>}, {transform_indices = @transform_1, window_bounds = array<i64: 144, 256>}, {pipeline_mode = #tpu.pipeline_mode<synchronous>, transform_indices = @transform_2, window_bounds = array<i64: 16, 1>}, {pipeline_mode = #tpu.pipeline_mode<synchronous>, transform_indices = @transform_3, window_bounds = array<i64: 16, 8>}, {transform_indices = @transform_4, window_bounds = array<i64: 8, 256>}, {transform_indices = @transform_5, window_bounds = array<i64: 16, 256>}]} {
    %c0 = arith.constant 0 : index
    %c0_0 = arith.constant 0 : index
    %0 = vector.load %arg1[%c0, %c0_0] : memref<16x144xbf16, #tpu.memory_space<vmem>>, vector<16x144xbf16>
    %c0_1 = arith.constant 0 : index
    %c0_2 = arith.constant 0 : index
    %1 = vector.load %arg2[%c0_1, %c0_2] : memref<144x256xbf16, #tpu.memory_space<vmem>>, vector<144x256xbf16>
    %cst = arith.constant dense<0.000000e+00> : vector<16x256xf32>
    %2 = tpu.matmul %0, %1, %cst {dimension_numbers = #tpu.dot_dimension_numbers<[1], [0], [0], [1], [0, 0, 1, 1], [], []>} : vector<16x144xbf16>, vector<144x256xbf16>, vector<16x256xf32> -> vector<16x256xf32>
    %c0_3 = arith.constant 0 : index
    %c0_4 = arith.constant 0 : index
    %3 = vector.load %arg4[%c0_3, %c0_4] : memref<16x8xbf16, #tpu.memory_space<vmem>>, vector<16x8xbf16>
    %c0_5 = arith.constant 0 : index
    %c0_6 = arith.constant 0 : index
    %4 = vector.load %arg5[%c0_5, %c0_6] : memref<8x256xbf16, #tpu.memory_space<vmem>>, vector<8x256xbf16>
    %cst_7 = arith.constant dense<0.000000e+00> : vector<16x256xf32>
    %5 = tpu.matmul %3, %4, %cst_7 {dimension_numbers = #tpu.dot_dimension_numbers<[1], [0], [0], [1], [0, 0, 1, 1], [], []>} : vector<16x8xbf16>, vector<8x256xbf16>, vector<16x256xf32> -> vector<16x256xf32>
    %6 = arith.addf %2, %5 : vector<16x256xf32>
    %c0_8 = arith.constant 0 : index
    %c0_9 = arith.constant 0 : index
    %7 = vector.load %arg3[%c0_8, %c0_9] : memref<16x1xf32, #tpu.memory_space<vmem>>, vector<16x1xf32>
    %8 = vector.broadcast %7 : vector<16x1xf32> to vector<16x256xf32>
    %9 = arith.addf %6, %8 : vector<16x256xf32>
    %cst_10 = arith.constant 0.000000e+00 : f32
    %10 = vector.broadcast %cst_10 : f32 to vector<16x256xf32>
    %11 = arith.maximumf %9, %10 : vector<16x256xf32>
    %12 = arith.truncf %11 : vector<16x256xf32> to vector<16x256xbf16>
    %c0_11 = arith.constant 0 : index
    %c0_12 = arith.constant 0 : index
    %13 = vector.load %arg6[%c0_11, %c0_12] : memref<16x256xbf16, #tpu.memory_space<vmem>>, vector<16x256xbf16>
    tpu.vector_store %arg6[%c0_11, %c0_12], %12 {strides = array<i32>} : memref<16x256xbf16, #tpu.memory_space<vmem>>, vector<16x256xbf16>,
    return
  }
  func.func @transform_0(%arg0: i32) -> (i32, i32) {
    %c0_i32 = arith.constant 0 : i32
    %c0_i32_0 = arith.constant 0 : i32
    %c0_i32_1 = arith.constant 0 : i32
    return %c0_i32, %c0_i32_0 : i32, i32
  }
  func.func @transform_1(%arg0: i32) -> (i32, i32) {
    %c0_i32 = arith.constant 0 : i32
    %c0_i32_0 = arith.constant 0 : i32
    return %c0_i32, %arg0 : i32, i32
  }
  func.func @transform_2(%arg0: i32) -> (i32, i32) {
    %c0_i32 = arith.constant 0 : i32
    %c0_i32_0 = arith.constant 0 : i32
    %c0_i32_1 = arith.constant 0 : i32
    return %c0_i32, %c0_i32_0 : i32, i32
  }
  func.func @transform_3(%arg0: i32) -> (i32, i32) {
    %c0_i32 = arith.constant 0 : i32
    %c0_i32_0 = arith.constant 0 : i32
    %c0_i32_1 = arith.constant 0 : i32
    return %c0_i32, %c0_i32_0 : i32, i32
  }
  func.func @transform_4(%arg0: i32) -> (i32, i32) {
    %c0_i32 = arith.constant 0 : i32
    %c0_i32_0 = arith.constant 0 : i32
    return %c0_i32, %arg0 : i32, i32
  }
  func.func @transform_5(%arg0: i32) -> (i32, i32) {
    %c0_i32 = arith.constant 0 : i32
    %c0_i32_0 = arith.constant 0 : i32
    return %c0_i32, %arg0 : i32, i32
  }
}

module attributes {stable_mosaic.version = 11 : i64} {
  func.func @_mm_kernel(%arg0: i32, %arg1: memref<32x144xbf16, #tpu.memory_space<vmem>>, %arg2: memref<144x128xbf16, #tpu.memory_space<vmem>>, %arg3: memref<32x1xf32, #tpu.memory_space<vmem>>, %arg4: memref<32x128xbf16, #tpu.memory_space<vmem>>) attributes {dimension_semantics = [#tpu.dimension_semantics<parallel>], iteration_bounds = array<i64: 1>, scalar_prefetch = 0 : i64, scratch_operands = 0 : i64, tpu.core_type = #tpu.core_type<tc>, window_params = [{pipeline_mode = #tpu.pipeline_mode<synchronous>, transform_indices = @transform_0, window_bounds = array<i64: 32, 144>}, {transform_indices = @transform_1, window_bounds = array<i64: 144, 128>}, {pipeline_mode = #tpu.pipeline_mode<synchronous>, transform_indices = @transform_2, window_bounds = array<i64: 32, 1>}, {transform_indices = @transform_3, window_bounds = array<i64: 32, 128>}]} {
    %c0 = arith.constant 0 : index
    %c0_0 = arith.constant 0 : index
    %0 = vector.load %arg1[%c0, %c0_0] : memref<32x144xbf16, #tpu.memory_space<vmem>>, vector<32x144xbf16>
    %c0_1 = arith.constant 0 : index
    %c0_2 = arith.constant 0 : index
    %1 = vector.load %arg2[%c0_1, %c0_2] : memref<144x128xbf16, #tpu.memory_space<vmem>>, vector<144x128xbf16>
    %cst = arith.constant dense<0.000000e+00> : vector<32x128xf32>
    %2 = tpu.matmul %0, %1, %cst {dimension_numbers = #tpu.dot_dimension_numbers<[1], [0], [0], [1], [0, 0, 1, 1], [], []>} : vector<32x144xbf16>, vector<144x128xbf16>, vector<32x128xf32> -> vector<32x128xf32>
    %c0_3 = arith.constant 0 : index
    %c0_4 = arith.constant 0 : index
    %3 = vector.load %arg3[%c0_3, %c0_4] : memref<32x1xf32, #tpu.memory_space<vmem>>, vector<32x1xf32>
    %4 = vector.broadcast %3 : vector<32x1xf32> to vector<32x128xf32>
    %5 = arith.addf %2, %4 : vector<32x128xf32>
    %cst_5 = arith.constant 0.000000e+00 : f32
    %6 = vector.broadcast %cst_5 : f32 to vector<32x128xf32>
    %7 = arith.maximumf %5, %6 : vector<32x128xf32>
    %8 = arith.truncf %7 : vector<32x128xf32> to vector<32x128xbf16>
    %c0_6 = arith.constant 0 : index
    %c0_7 = arith.constant 0 : index
    %9 = vector.load %arg4[%c0_6, %c0_7] : memref<32x128xbf16, #tpu.memory_space<vmem>>, vector<32x128xbf16>
    tpu.vector_store %arg4[%c0_6, %c0_7], %8 {strides = array<i32>} : memref<32x128xbf16, #tpu.memory_space<vmem>>, vector<32x128xbf16>,
    return
  }
  func.func @transform_0(%arg0: i32) -> (i32, i32) {
    %c0_i32 = arith.constant 0 : i32
    %c0_i32_0 = arith.constant 0 : i32
    %c0_i32_1 = arith.constant 0 : i32
    return %c0_i32, %c0_i32_0 : i32, i32
  }
  func.func @transform_1(%arg0: i32) -> (i32, i32) {
    %c0_i32 = arith.constant 0 : i32
    %c0_i32_0 = arith.constant 0 : i32
    return %c0_i32, %arg0 : i32, i32
  }
  func.func @transform_2(%arg0: i32) -> (i32, i32) {
    %c0_i32 = arith.constant 0 : i32
    %c0_i32_0 = arith.constant 0 : i32
    %c0_i32_1 = arith.constant 0 : i32
    return %c0_i32, %c0_i32_0 : i32, i32
  }
  func.func @transform_3(%arg0: i32) -> (i32, i32) {
    %c0_i32 = arith.constant 0 : i32
    %c0_i32_0 = arith.constant 0 : i32
    return %c0_i32, %arg0 : i32, i32
  }
}

module attributes {stable_mosaic.version = 11 : i64} {
  func.func @_mm_scmm_kernel(%arg0: i32, %arg1: memref<32x288xbf16, #tpu.memory_space<vmem>>, %arg2: memref<288x128xbf16, #tpu.memory_space<vmem>>, %arg3: memref<32x1xf32, #tpu.memory_space<vmem>>, %arg4: memref<32x16xbf16, #tpu.memory_space<vmem>>, %arg5: memref<16x128xbf16, #tpu.memory_space<vmem>>, %arg6: memref<32x128xbf16, #tpu.memory_space<vmem>>) attributes {dimension_semantics = [#tpu.dimension_semantics<parallel>], iteration_bounds = array<i64: 1>, scalar_prefetch = 0 : i64, scratch_operands = 0 : i64, tpu.core_type = #tpu.core_type<tc>, window_params = [{pipeline_mode = #tpu.pipeline_mode<synchronous>, transform_indices = @transform_0, window_bounds = array<i64: 32, 288>}, {transform_indices = @transform_1, window_bounds = array<i64: 288, 128>}, {pipeline_mode = #tpu.pipeline_mode<synchronous>, transform_indices = @transform_2, window_bounds = array<i64: 32, 1>}, {pipeline_mode = #tpu.pipeline_mode<synchronous>, transform_indices = @transform_3, window_bounds = array<i64: 32, 16>}, {transform_indices = @transform_4, window_bounds = array<i64: 16, 128>}, {transform_indices = @transform_5, window_bounds = array<i64: 32, 128>}]} {
    %c0 = arith.constant 0 : index
    %c0_0 = arith.constant 0 : index
    %0 = vector.load %arg1[%c0, %c0_0] : memref<32x288xbf16, #tpu.memory_space<vmem>>, vector<32x288xbf16>
    %c0_1 = arith.constant 0 : index
    %c0_2 = arith.constant 0 : index
    %1 = vector.load %arg2[%c0_1, %c0_2] : memref<288x128xbf16, #tpu.memory_space<vmem>>, vector<288x128xbf16>
    %cst = arith.constant dense<0.000000e+00> : vector<32x128xf32>
    %2 = tpu.matmul %0, %1, %cst {dimension_numbers = #tpu.dot_dimension_numbers<[1], [0], [0], [1], [0, 0, 1, 1], [], []>} : vector<32x288xbf16>, vector<288x128xbf16>, vector<32x128xf32> -> vector<32x128xf32>
    %c0_3 = arith.constant 0 : index
    %c0_4 = arith.constant 0 : index
    %3 = vector.load %arg4[%c0_3, %c0_4] : memref<32x16xbf16, #tpu.memory_space<vmem>>, vector<32x16xbf16>
    %c0_5 = arith.constant 0 : index
    %c0_6 = arith.constant 0 : index
    %4 = vector.load %arg5[%c0_5, %c0_6] : memref<16x128xbf16, #tpu.memory_space<vmem>>, vector<16x128xbf16>
    %cst_7 = arith.constant dense<0.000000e+00> : vector<32x128xf32>
    %5 = tpu.matmul %3, %4, %cst_7 {dimension_numbers = #tpu.dot_dimension_numbers<[1], [0], [0], [1], [0, 0, 1, 1], [], []>} : vector<32x16xbf16>, vector<16x128xbf16>, vector<32x128xf32> -> vector<32x128xf32>
    %6 = arith.addf %2, %5 : vector<32x128xf32>
    %c0_8 = arith.constant 0 : index
    %c0_9 = arith.constant 0 : index
    %7 = vector.load %arg3[%c0_8, %c0_9] : memref<32x1xf32, #tpu.memory_space<vmem>>, vector<32x1xf32>
    %8 = vector.broadcast %7 : vector<32x1xf32> to vector<32x128xf32>
    %9 = arith.addf %6, %8 : vector<32x128xf32>
    %cst_10 = arith.constant 0.000000e+00 : f32
    %10 = vector.broadcast %cst_10 : f32 to vector<32x128xf32>
    %11 = arith.maximumf %9, %10 : vector<32x128xf32>
    %12 = arith.truncf %11 : vector<32x128xf32> to vector<32x128xbf16>
    %c0_11 = arith.constant 0 : index
    %c0_12 = arith.constant 0 : index
    %13 = vector.load %arg6[%c0_11, %c0_12] : memref<32x128xbf16, #tpu.memory_space<vmem>>, vector<32x128xbf16>
    tpu.vector_store %arg6[%c0_11, %c0_12], %12 {strides = array<i32>} : memref<32x128xbf16, #tpu.memory_space<vmem>>, vector<32x128xbf16>,
    return
  }
  func.func @transform_0(%arg0: i32) -> (i32, i32) {
    %c0_i32 = arith.constant 0 : i32
    %c0_i32_0 = arith.constant 0 : i32
    %c0_i32_1 = arith.constant 0 : i32
    return %c0_i32, %c0_i32_0 : i32, i32
  }
  func.func @transform_1(%arg0: i32) -> (i32, i32) {
    %c0_i32 = arith.constant 0 : i32
    %c0_i32_0 = arith.constant 0 : i32
    return %c0_i32, %arg0 : i32, i32
  }
  func.func @transform_2(%arg0: i32) -> (i32, i32) {
    %c0_i32 = arith.constant 0 : i32
    %c0_i32_0 = arith.constant 0 : i32
    %c0_i32_1 = arith.constant 0 : i32
    return %c0_i32, %c0_i32_0 : i32, i32
  }
  func.func @transform_3(%arg0: i32) -> (i32, i32) {
    %c0_i32 = arith.constant 0 : i32
    %c0_i32_0 = arith.constant 0 : i32
    %c0_i32_1 = arith.constant 0 : i32
    return %c0_i32, %c0_i32_0 : i32, i32
  }
  func.func @transform_4(%arg0: i32) -> (i32, i32) {
    %c0_i32 = arith.constant 0 : i32
    %c0_i32_0 = arith.constant 0 : i32
    return %c0_i32, %arg0 : i32, i32
  }
  func.func @transform_5(%arg0: i32) -> (i32, i32) {
    %c0_i32 = arith.constant 0 : i32
    %c0_i32_0 = arith.constant 0 : i32
    return %c0_i32, %arg0 : i32, i32
  }
}

module attributes {stable_mosaic.version = 11 : i64} {
  func.func @_mm_kernel(%arg0: i32, %arg1: memref<64x288xbf16, #tpu.memory_space<vmem>>, %arg2: memref<288x32xbf16, #tpu.memory_space<vmem>>, %arg3: memref<64x1xf32, #tpu.memory_space<vmem>>, %arg4: memref<64x32xbf16, #tpu.memory_space<vmem>>) attributes {dimension_semantics = [#tpu.dimension_semantics<parallel>], iteration_bounds = array<i64: 1>, scalar_prefetch = 0 : i64, scratch_operands = 0 : i64, tpu.core_type = #tpu.core_type<tc>, window_params = [{pipeline_mode = #tpu.pipeline_mode<synchronous>, transform_indices = @transform_0, window_bounds = array<i64: 64, 288>}, {transform_indices = @transform_1, window_bounds = array<i64: 288, 32>}, {pipeline_mode = #tpu.pipeline_mode<synchronous>, transform_indices = @transform_2, window_bounds = array<i64: 64, 1>}, {transform_indices = @transform_3, window_bounds = array<i64: 64, 32>}]} {
    %c0 = arith.constant 0 : index
    %c0_0 = arith.constant 0 : index
    %0 = vector.load %arg1[%c0, %c0_0] : memref<64x288xbf16, #tpu.memory_space<vmem>>, vector<64x288xbf16>
    %c0_1 = arith.constant 0 : index
    %c0_2 = arith.constant 0 : index
    %1 = vector.load %arg2[%c0_1, %c0_2] : memref<288x32xbf16, #tpu.memory_space<vmem>>, vector<288x32xbf16>
    %cst = arith.constant dense<0.000000e+00> : vector<64x32xf32>
    %2 = tpu.matmul %0, %1, %cst {dimension_numbers = #tpu.dot_dimension_numbers<[1], [0], [0], [1], [0, 0, 1, 1], [], []>} : vector<64x288xbf16>, vector<288x32xbf16>, vector<64x32xf32> -> vector<64x32xf32>
    %c0_3 = arith.constant 0 : index
    %c0_4 = arith.constant 0 : index
    %3 = vector.load %arg3[%c0_3, %c0_4] : memref<64x1xf32, #tpu.memory_space<vmem>>, vector<64x1xf32>
    %4 = vector.broadcast %3 : vector<64x1xf32> to vector<64x32xf32>
    %5 = arith.addf %2, %4 : vector<64x32xf32>
    %cst_5 = arith.constant 0.000000e+00 : f32
    %6 = vector.broadcast %cst_5 : f32 to vector<64x32xf32>
    %7 = arith.maximumf %5, %6 : vector<64x32xf32>
    %8 = arith.truncf %7 : vector<64x32xf32> to vector<64x32xbf16>
    %c0_6 = arith.constant 0 : index
    %c0_7 = arith.constant 0 : index
    %9 = vector.load %arg4[%c0_6, %c0_7] : memref<64x32xbf16, #tpu.memory_space<vmem>>, vector<64x32xbf16>
    tpu.vector_store %arg4[%c0_6, %c0_7], %8 {strides = array<i32>} : memref<64x32xbf16, #tpu.memory_space<vmem>>, vector<64x32xbf16>,
    return
  }
  func.func @transform_0(%arg0: i32) -> (i32, i32) {
    %c0_i32 = arith.constant 0 : i32
    %c0_i32_0 = arith.constant 0 : i32
    %c0_i32_1 = arith.constant 0 : i32
    return %c0_i32, %c0_i32_0 : i32, i32
  }
  func.func @transform_1(%arg0: i32) -> (i32, i32) {
    %c0_i32 = arith.constant 0 : i32
    %c0_i32_0 = arith.constant 0 : i32
    return %c0_i32, %arg0 : i32, i32
  }
  func.func @transform_2(%arg0: i32) -> (i32, i32) {
    %c0_i32 = arith.constant 0 : i32
    %c0_i32_0 = arith.constant 0 : i32
    %c0_i32_1 = arith.constant 0 : i32
    return %c0_i32, %c0_i32_0 : i32, i32
  }
  func.func @transform_3(%arg0: i32) -> (i32, i32) {
    %c0_i32 = arith.constant 0 : i32
    %c0_i32_0 = arith.constant 0 : i32
    return %c0_i32, %arg0 : i32, i32
  }
}

module attributes {stable_mosaic.version = 11 : i64} {
  func.func @_pool_linear_kernel(%arg0: i32, %arg1: memref<64x32xbf16, #tpu.memory_space<vmem>>, %arg2: memref<32x2xbf16, #tpu.memory_space<vmem>>, %arg3: memref<10x64xbf16, #tpu.memory_space<vmem>>, %arg4: memref<10x1xf32, #tpu.memory_space<vmem>>, %arg5: memref<10x2xf32, #tpu.memory_space<vmem>>) attributes {dimension_semantics = [#tpu.dimension_semantics<arbitrary>], iteration_bounds = array<i64: 1>, scalar_prefetch = 0 : i64, scratch_operands = 0 : i64, tpu.core_type = #tpu.core_type<tc>, window_params = [{pipeline_mode = #tpu.pipeline_mode<synchronous>, transform_indices = @transform_0, window_bounds = array<i64: 64, 32>}, {pipeline_mode = #tpu.pipeline_mode<synchronous>, transform_indices = @transform_1, window_bounds = array<i64: 32, 2>}, {pipeline_mode = #tpu.pipeline_mode<synchronous>, transform_indices = @transform_2, window_bounds = array<i64: 10, 64>}, {pipeline_mode = #tpu.pipeline_mode<synchronous>, transform_indices = @transform_3, window_bounds = array<i64: 10, 1>}, {pipeline_mode = #tpu.pipeline_mode<synchronous>, transform_indices = @transform_4, window_bounds = array<i64: 10, 2>}]} {
    %c0 = arith.constant 0 : index
    %c0_0 = arith.constant 0 : index
    %0 = vector.load %arg1[%c0, %c0_0] : memref<64x32xbf16, #tpu.memory_space<vmem>>, vector<64x32xbf16>
    %c0_1 = arith.constant 0 : index
    %c0_2 = arith.constant 0 : index
    %1 = vector.load %arg2[%c0_1, %c0_2] : memref<32x2xbf16, #tpu.memory_space<vmem>>, vector<32x2xbf16>
    %cst = arith.constant dense<0.000000e+00> : vector<64x2xf32>
    %2 = tpu.matmul %0, %1, %cst {dimension_numbers = #tpu.dot_dimension_numbers<[1], [0], [0], [1], [0, 0, 1, 1], [], []>} : vector<64x32xbf16>, vector<32x2xbf16>, vector<64x2xf32> -> vector<64x2xf32>
    %c0_3 = arith.constant 0 : index
    %c0_4 = arith.constant 0 : index
    %3 = vector.load %arg3[%c0_3, %c0_4] : memref<10x64xbf16, #tpu.memory_space<vmem>>, vector<10x64xbf16>
    %4 = arith.truncf %2 : vector<64x2xf32> to vector<64x2xbf16>
    %cst_5 = arith.constant dense<0.000000e+00> : vector<10x2xf32>
    %5 = tpu.matmul %3, %4, %cst_5 {dimension_numbers = #tpu.dot_dimension_numbers<[1], [0], [0], [1], [0, 0, 1, 1], [], []>} : vector<10x64xbf16>, vector<64x2xbf16>, vector<10x2xf32> -> vector<10x2xf32>
    %c0_6 = arith.constant 0 : index
    %c0_7 = arith.constant 0 : index
    %6 = vector.load %arg4[%c0_6, %c0_7] : memref<10x1xf32, #tpu.memory_space<vmem>>, vector<10x1xf32>
    %7 = vector.broadcast %6 : vector<10x1xf32> to vector<10x2xf32>
    %8 = arith.addf %5, %7 : vector<10x2xf32>
    %c0_8 = arith.constant 0 : index
    %c0_9 = arith.constant 0 : index
    %9 = vector.load %arg5[%c0_8, %c0_9] : memref<10x2xf32, #tpu.memory_space<vmem>>, vector<10x2xf32>
    tpu.vector_store %arg5[%c0_8, %c0_9], %8 {strides = array<i32>} : memref<10x2xf32, #tpu.memory_space<vmem>>, vector<10x2xf32>,
    return
  }
  func.func @transform_0(%arg0: i32) -> (i32, i32) {
    %c0_i32 = arith.constant 0 : i32
    %c0_i32_0 = arith.constant 0 : i32
    %c0_i32_1 = arith.constant 0 : i32
    return %c0_i32, %c0_i32_0 : i32, i32
  }
  func.func @transform_1(%arg0: i32) -> (i32, i32) {
    %c0_i32 = arith.constant 0 : i32
    %c0_i32_0 = arith.constant 0 : i32
    %c0_i32_1 = arith.constant 0 : i32
    return %c0_i32, %c0_i32_0 : i32, i32
  }
  func.func @transform_2(%arg0: i32) -> (i32, i32) {
    %c0_i32 = arith.constant 0 : i32
    %c0_i32_0 = arith.constant 0 : i32
    %c0_i32_1 = arith.constant 0 : i32
    return %c0_i32, %c0_i32_0 : i32, i32
  }
  func.func @transform_3(%arg0: i32) -> (i32, i32) {
    %c0_i32 = arith.constant 0 : i32
    %c0_i32_0 = arith.constant 0 : i32
    %c0_i32_1 = arith.constant 0 : i32
    return %c0_i32, %c0_i32_0 : i32, i32
  }
  func.func @transform_4(%arg0: i32) -> (i32, i32) {
    %c0_i32 = arith.constant 0 : i32
    %c0_i32_0 = arith.constant 0 : i32
    %c0_i32_1 = arith.constant 0 : i32
    return %c0_i32, %c0_i32_0 : i32, i32
  }
}

module attributes {stable_mosaic.version = 11 : i64} {
  func.func @_mm_scmm_kernel(%arg0: i32, %arg1: memref<64x576xbf16, #tpu.memory_space<vmem>>, %arg2: memref<576x32xbf16, #tpu.memory_space<vmem>>, %arg3: memref<64x1xf32, #tpu.memory_space<vmem>>, %arg4: memref<64x32xbf16, #tpu.memory_space<vmem>>, %arg5: memref<32x32xbf16, #tpu.memory_space<vmem>>, %arg6: memref<64x32xbf16, #tpu.memory_space<vmem>>) attributes {dimension_semantics = [#tpu.dimension_semantics<parallel>], iteration_bounds = array<i64: 1>, scalar_prefetch = 0 : i64, scratch_operands = 0 : i64, tpu.core_type = #tpu.core_type<tc>, window_params = [{pipeline_mode = #tpu.pipeline_mode<synchronous>, transform_indices = @transform_0, window_bounds = array<i64: 64, 576>}, {transform_indices = @transform_1, window_bounds = array<i64: 576, 32>}, {pipeline_mode = #tpu.pipeline_mode<synchronous>, transform_indices = @transform_2, window_bounds = array<i64: 64, 1>}, {pipeline_mode = #tpu.pipeline_mode<synchronous>, transform_indices = @transform_3, window_bounds = array<i64: 64, 32>}, {transform_indices = @transform_4, window_bounds = array<i64: 32, 32>}, {transform_indices = @transform_5, window_bounds = array<i64: 64, 32>}]} {
    %c0 = arith.constant 0 : index
    %c0_0 = arith.constant 0 : index
    %0 = vector.load %arg1[%c0, %c0_0] : memref<64x576xbf16, #tpu.memory_space<vmem>>, vector<64x576xbf16>
    %c0_1 = arith.constant 0 : index
    %c0_2 = arith.constant 0 : index
    %1 = vector.load %arg2[%c0_1, %c0_2] : memref<576x32xbf16, #tpu.memory_space<vmem>>, vector<576x32xbf16>
    %cst = arith.constant dense<0.000000e+00> : vector<64x32xf32>
    %2 = tpu.matmul %0, %1, %cst {dimension_numbers = #tpu.dot_dimension_numbers<[1], [0], [0], [1], [0, 0, 1, 1], [], []>} : vector<64x576xbf16>, vector<576x32xbf16>, vector<64x32xf32> -> vector<64x32xf32>
    %c0_3 = arith.constant 0 : index
    %c0_4 = arith.constant 0 : index
    %3 = vector.load %arg4[%c0_3, %c0_4] : memref<64x32xbf16, #tpu.memory_space<vmem>>, vector<64x32xbf16>
    %c0_5 = arith.constant 0 : index
    %c0_6 = arith.constant 0 : index
    %4 = vector.load %arg5[%c0_5, %c0_6] : memref<32x32xbf16, #tpu.memory_space<vmem>>, vector<32x32xbf16>
    %cst_7 = arith.constant dense<0.000000e+00> : vector<64x32xf32>
    %5 = tpu.matmul %3, %4, %cst_7 {dimension_numbers = #tpu.dot_dimension_numbers<[1], [0], [0], [1], [0, 0, 1, 1], [], []>} : vector<64x32xbf16>, vector<32x32xbf16>, vector<64x32xf32> -> vector<64x32xf32>
    %6 = arith.addf %2, %5 : vector<64x32xf32>
    %c0_8 = arith.constant 0 : index
    %c0_9 = arith.constant 0 : index
    %7 = vector.load %arg3[%c0_8, %c0_9] : memref<64x1xf32, #tpu.memory_space<vmem>>, vector<64x1xf32>
    %8 = vector.broadcast %7 : vector<64x1xf32> to vector<64x32xf32>
    %9 = arith.addf %6, %8 : vector<64x32xf32>
    %cst_10 = arith.constant 0.000000e+00 : f32
    %10 = vector.broadcast %cst_10 : f32 to vector<64x32xf32>
    %11 = arith.maximumf %9, %10 : vector<64x32xf32>
    %12 = arith.truncf %11 : vector<64x32xf32> to vector<64x32xbf16>
    %c0_11 = arith.constant 0 : index
    %c0_12 = arith.constant 0 : index
    %13 = vector.load %arg6[%c0_11, %c0_12] : memref<64x32xbf16, #tpu.memory_space<vmem>>, vector<64x32xbf16>
    tpu.vector_store %arg6[%c0_11, %c0_12], %12 {strides = array<i32>} : memref<64x32xbf16, #tpu.memory_space<vmem>>, vector<64x32xbf16>,
    return
  }
  func.func @transform_0(%arg0: i32) -> (i32, i32) {
    %c0_i32 = arith.constant 0 : i32
    %c0_i32_0 = arith.constant 0 : i32
    %c0_i32_1 = arith.constant 0 : i32
    return %c0_i32, %c0_i32_0 : i32, i32
  }
  func.func @transform_1(%arg0: i32) -> (i32, i32) {
    %c0_i32 = arith.constant 0 : i32
    %c0_i32_0 = arith.constant 0 : i32
    return %c0_i32, %arg0 : i32, i32
  }
  func.func @transform_2(%arg0: i32) -> (i32, i32) {
    %c0_i32 = arith.constant 0 : i32
    %c0_i32_0 = arith.constant 0 : i32
    %c0_i32_1 = arith.constant 0 : i32
    return %c0_i32, %c0_i32_0 : i32, i32
  }
  func.func @transform_3(%arg0: i32) -> (i32, i32) {
    %c0_i32 = arith.constant 0 : i32
    %c0_i32_0 = arith.constant 0 : i32
    %c0_i32_1 = arith.constant 0 : i32
    return %c0_i32, %c0_i32_0 : i32, i32
  }
  func.func @transform_4(%arg0: i32) -> (i32, i32) {
    %c0_i32 = arith.constant 0 : i32
    %c0_i32_0 = arith.constant 0 : i32
    return %c0_i32, %arg0 : i32, i32
  }
  func.func @transform_5(%arg0: i32) -> (i32, i32) {
    %c0_i32 = arith.constant 0 : i32
    %c0_i32_0 = arith.constant 0 : i32
    return %c0_i32, %arg0 : i32, i32
  }
}

</mosaic_0001>

<llo_original>
// kernel: resnet_forward.10
$region0: #{resnet_forward.10}
  #allocation0 [shape = 'u32[]', space=smem, size = 0x4, offset = 0x4, fixed_abs, tag = 'smem constant byte address 0x4 - core index']
  #allocation1 [shape = 'u32[144,128]{1,0:T(1,128)}', space=vmem, size = 0x12000, scoped, tag = 'internal scratch']
  %s0 = inlined_call_operand.vmem [shape: bf16[8,27], index: 0, kind: input, shape index: {}]
  %s1 = inlined_call_operand.vmem [shape: bf16[27,2048], index: 1, kind: input, shape index: {}]
  %s2 = inlined_call_operand.vmem [shape: f32[8,1], index: 2, kind: input, shape index: {}]
  %s3 = inlined_call_operand.vmem [shape: bf16[8,2048], index: 3, kind: output, shape index: {}]
  %s4 = sld [smem:[#allocation0]]
  $region68: #{resnet_forward.10} parent=0
    _
  %s6 = ssub.s32 1, %s4
  %s7 = scalar_select 0, %s6, %s4
  $region1: #{resnet_forward.10} parent=0
    #allocation2 [shape = 'u8[65536]{0}', space=vmem, size = 0x10000, scoped, tag = 'input window, operand 1']
    loop: start=0, step=1, limit=6
    $region2: #{resnet_forward.10} parent=1 // loop_pre_header
      _
    $region3: #{resnet_forward.10} parent=1 // loop_header
      %s9 = sphi 0, %s13
      %p10 = scmp.ge.s32.totalorder %s9, 6
      %s17 = sphi 0, %s17
      %s19 = sphi 0, %s17
      %s20 = sphi 0, %s19
      %s34 = sphi 0, %s20
      %s40 = sphi 0, %s42
      %s43 = sphi 0, %s40
      %s44 = sphi 0, %s43
      %s60 = sphi 0, %s44
      %s64 = sphi 0, %s64
      %s66 = sphi 0, %s64
      %s67 = sphi 0, %s66
      %s81 = sphi 0, %s67
      %s87 = sphi 0, %s89
      %s90 = sphi 0, %s87
      %s91 = sphi 0, %s90
      %s107 = sphi 0, %s91
    $region4: #{resnet_forward.10} parent=1 // loop_header_branch
      %12 = sbr.rel (%p10) target = $region8
    $region5: #{resnet_forward.10} parent=1 // loop_body
      %s14 = ssub.s32 %s9, 1
      %s15 = ssub.s32 %s9, 2
      %s16 = sadd.s32 %s9, 1
      %s18 = sadd.s32 %s17, 1
      %p21 = scmp.eq.s32.totalorder %s9, 3
      %p22 = scmp.ne.s32.totalorder %s17, %s19
      %p23 = scmp.eq.s32.totalorder %s9, 0
      %p24 = por %p22, %p23
      %p25 = scmp.ne.s32.totalorder %s17, %s19
      %p26 = scmp.eq.s32.totalorder %s14, 3
      %p27 = por %p25, %p26
      %p28 = scmp.ne.s32.totalorder %s19, %s20
      %p29 = scmp.eq.s32.totalorder %s14, 0
      %p30 = por %p28, %p29
      %p31 = scmp.ne.s32.totalorder %s19, %s20
      %p32 = scmp.eq.s32.totalorder %s15, 3
      %p33 = por %p31, %p32
      %p35 = scmp.ne.s32.totalorder %s20, %s34
      %p36 = scmp.eq.s32.totalorder %s15, 0
      %p37 = por %p35, %p36
      %s38 = ssub.s32 %s9, %s16
      %p39 = scmp.eq.s32.totalorder %s38, 0
      %s41 = sadd.s32 %s40, 1
      %s42 = scalar_select %p39, %s40, %s41
      %p45 = pneg %p39
      %p46 = scmp.eq.s32.totalorder %s9, 3
      %p47 = por %p45, %p46
      %p48 = scmp.ne.s32.totalorder %s40, %s43
      %p49 = scmp.eq.s32.totalorder %s9, 0
      %p50 = por %p48, %p49
      %p51 = scmp.ne.s32.totalorder %s40, %s43
      %p52 = scmp.eq.s32.totalorder %s14, 3
      %p53 = por %p51, %p52
      %p54 = scmp.ne.s32.totalorder %s43, %s44
      %p55 = scmp.eq.s32.totalorder %s14, 0
      %p56 = por %p54, %p55
      %p57 = scmp.ne.s32.totalorder %s43, %s44
      %p58 = scmp.eq.s32.totalorder %s15, 3
      %p59 = por %p57, %p58
      %p61 = scmp.ne.s32.totalorder %s44, %s60
      %p62 = scmp.eq.s32.totalorder %s15, 0
      %p63 = por %p61, %p62
      %s65 = sadd.s32 %s64, 1
      %p68 = scmp.eq.s32.totalorder %s9, 3
      %p69 = scmp.ne.s32.totalorder %s64, %s66
      %p70 = scmp.eq.s32.totalorder %s9, 0
      %p71 = por %p69, %p70
      %p72 = scmp.ne.s32.totalorder %s64, %s66
      %p73 = scmp.eq.s32.totalorder %s14, 3
      %p74 = por %p72, %p73
      %p75 = scmp.ne.s32.totalorder %s66, %s67
      %p76 = scmp.eq.s32.totalorder %s14, 0
      %p77 = por %p75, %p76
      %p78 = scmp.ne.s32.totalorder %s66, %s67
      %p79 = scmp.eq.s32.totalorder %s15, 3
      %p80 = por %p78, %p79
      %p82 = scmp.ne.s32.totalorder %s67, %s81
      %p83 = scmp.eq.s32.totalorder %s15, 0
      %p84 = por %p82, %p83
      %s85 = ssub.s32 %s9, %s16
      %p86 = scmp.eq.s32.totalorder %s85, 0
      %s88 = sadd.s32 %s87, 1
      %s89 = scalar_select %p86, %s87, %s88
      %p92 = pneg %p86
      %p93 = scmp.eq.s32.totalorder %s9, 3
      %p94 = por %p92, %p93
      %p95 = scmp.ne.s32.totalorder %s87, %s90
      %p96 = scmp.eq.s32.totalorder %s9, 0
      %p97 = por %p95, %p96
      %p98 = scmp.ne.s32.totalorder %s87, %s90
      %p99 = scmp.eq.s32.totalorder %s14, 3
      %p100 = por %p98, %p99
      %p101 = scmp.ne.s32.totalorder %s90, %s91
      %p102 = scmp.eq.s32.totalorder %s14, 0
      %p103 = por %p101, %p102
      %p104 = scmp.ne.s32.totalorder %s90, %s91
      %p105 = scmp.eq.s32.totalorder %s15, 3
      %p106 = por %p104, %p105
      %p108 = scmp.ne.s32.totalorder %s91, %s107
      %p109 = scmp.eq.s32.totalorder %s15, 0
      %p110 = por %p108, %p109
      %p111 = scmp.le.s32.totalorder 1, %s9
      %p112 = scmp.lt.s32.totalorder %s9, 5
      %p113 = pnand %p111, %p112
      %p114 = pneg %p113
      // Predicated region
      $region9: #{resnet_forward.10} parent=5 // pred_check
        _
      $region10: #{resnet_forward.10} parent=5 // pred_check_branch
        %116 = sbr.rel (%p113) target = $region12
      $region11: #{resnet_forward.10} parent=5 // pred_region
        %s117 = ssub.s32 %s9, 1
        // Predicated region
        $region13: #{resnet_forward.10} parent=11 // pred_check
          %p118 = pneg %p30
        $region14: #{resnet_forward.10} parent=11 // pred_check_branch
          %120 = sbr.rel (%p118) target = $region16
        $region15: #{resnet_forward.10} parent=11 // pred_region
          _
        $region16: #{resnet_forward.10} parent=11 // pred_fallthru
          _
        // Predicated region
        $region17: #{resnet_forward.10} parent=11 // pred_check
          %p121 = pneg %p77
        $region18: #{resnet_forward.10} parent=11 // pred_check_branch
          %123 = sbr.rel (%p121) target = $region20
        $region19: #{resnet_forward.10} parent=11 // pred_region
          _
        $region20: #{resnet_forward.10} parent=11 // pred_fallthru
          _
      $region12: #{resnet_forward.10} parent=5 // pred_fallthru
        _
      %p124 = scmp.lt.s32.totalorder %s9, 4
      // Predicated region
      $region21: #{resnet_forward.10} parent=5 // pred_check
        %p125 = pneg %p124
      $region22: #{resnet_forward.10} parent=5 // pred_check_branch
        %127 = sbr.rel (%p125) target = $region24
      $region23: #{resnet_forward.10} parent=5 // pred_region
        // Predicated region
        $region25: #{resnet_forward.10} parent=23 // pred_check
          %p128 = pneg %p50
        $region26: #{resnet_forward.10} parent=23 // pred_check_branch
          %130 = sbr.rel (%p128) target = $region28
        $region27: #{resnet_forward.10} parent=23 // pred_region
          %s131 = sand.u32 %s40, 1
          %s132 = sand.u32 %s40, 1
          %s133 = smul.addr %s132, 64
          %s134 = scalar_lea.vmem [#allocation2], %s133
          %s135 = smul.u32 4, %s9
          %s136 = smul.addr %s135, 4
          %s137 = scalar_lea.vmem %s1, %s136
          // Predicated region
          $region29: #{resnet_forward.10} parent=27 // pred_check
            _
          $region30: #{resnet_forward.10} parent=27 // pred_check_branch
            %139 = sbr.rel (0) target = $region32
          $region31: #{resnet_forward.10} parent=27 // pred_region
            // Predicated region
            $region33: #{resnet_forward.10} parent=31 // pred_check
              _
            $region34: #{resnet_forward.10} parent=31 // pred_check_branch
              %141 = sbr.rel (0) target = $region36
            $region35: #{resnet_forward.10} parent=31 // pred_region
              loop: start=0, step=1, limit=1
              $region37: #{resnet_forward.10} parent=35 // loop_pre_header
                _
              $region38: #{resnet_forward.10} parent=35 // loop_header
                %s143 = sphi 0, %s147
                %p144 = scmp.ge.s32.totalorder %s143, 1
                %s148 = sphi %s137, %s137
                %s149 = sphi %s134, %s134
              $region39: #{resnet_forward.10} parent=35 // loop_header_branch
                %146 = sbr.rel (%p144) target = $region43
              $region40: #{resnet_forward.10} parent=35 // loop_body
                %v150 = vld [vmem:[%s148] sm:$0xff]
                %151 = vst [vmem:[%s149] sm:$0xff] %v150
                %v152 = vld [vmem:[%s148 + $0x8] sm:$0xff]
                %153 = vst [vmem:[%s149 + $0x8] sm:$0xff] %v152
                %v154 = vld [vmem:[%s148 + $0x40] sm:$0xff]
                %155 = vst [vmem:[%s149 + $0x10] sm:$0xff] %v154
                %v156 = vld [vmem:[%s148 + $0x48] sm:$0xff]
                %157 = vst [vmem:[%s149 + $0x18] sm:$0xff] %v156
                %v158 = vld [vmem:[%s148 + $0x80] sm:$0xff]
                %159 = vst [vmem:[%s149 + $0x20] sm:$0xff] %v158
                %v160 = vld [vmem:[%s148 + $0x88] sm:$0xff]
                %161 = vst [vmem:[%s149 + $0x28] sm:$0xff] %v160
                %v162 = vld [vmem:[%s148 + $0xc0] sm:$0xff]
                %163 = vst [vmem:[%s149 + $0x30] sm:$0xff] %v162
                %v164 = vld [vmem:[%s148 + $0xc8] sm:$0xff]
                %165 = vst [vmem:[%s149 + $0x38] sm:$0xff] %v164
              $region41: #{resnet_forward.10} parent=35 // loop_footer
                %s147 = sadd.s32 1, %s143
              $region42: #{resnet_forward.10} parent=35 // loop_footer_branch
                %142 = sbr.rel target = $region38
              $region43: #{resnet_forward.10} parent=35 // loop_exit
                _
            $region36: #{resnet_forward.10} parent=31 // pred_fallthru
              _
            // Predicated region
            $region44: #{resnet_forward.10} parent=31 // pred_check
              _
            $region45: #{resnet_forward.10} parent=31 // pred_check_branch
              %167 = sbr.rel target = $region47
            $region46: #{resnet_forward.10} parent=31 // pred_region
              _
            $region47: #{resnet_forward.10} parent=31 // pred_fallthru
              _
          $region32: #{resnet_forward.10} parent=27 // pred_fallthru
            _
          %168 = vnop
        $region28: #{resnet_forward.10} parent=23 // pred_fallthru
          _
      $region24: #{resnet_forward.10} parent=5 // pred_fallthru
        _
      %p169 = scmp.le.s32.totalorder 1, %s9
      %p170 = scmp.lt.s32.totalorder %s9, 5
      %p171 = pnand %p169, %p170
      %p172 = pneg %p171
      // Predicated region
      $region48: #{resnet_forward.10} parent=5 // pred_check
        _
      $region49: #{resnet_forward.10} parent=5 // pred_check_branch
        %174 = sbr.rel (%p171) target = $region51
      $region50: #{resnet_forward.10} parent=5 // pred_region
        %s175 = ssub.s32 %s9, 1
        %s176 = sand.u32 %s43, 1
        %s177 = sand.u32 %s43, 1
        %s178 = smul.addr %s177, 64
        %s179 = scalar_lea.vmem [#allocation2], %s178
        // Predicated region
        $region52: #{resnet_forward.10} parent=50 // pred_check
          %p180 = pneg %p56
        $region53: #{resnet_forward.10} parent=50 // pred_check_branch
          %182 = sbr.rel (%p180) target = $region55
        $region54: #{resnet_forward.10} parent=50 // pred_region
          _
        $region55: #{resnet_forward.10} parent=50 // pred_fallthru
          _
        %p183 = pneg %p30
        %p184 = pneg %p27
        %s185 = sand.u32 %s43, 1
        %s186 = sand.u32 %s43, 1
        %s187 = smul.addr %s186, 64
        %s188 = scalar_lea.vmem [#allocation2], %s187
        %p189 = pneg %p56
        %p190 = pneg %p53
        %p191 = pneg %p77
        %p192 = pneg %p74
        %p193 = pneg %p103
        %p194 = pneg %p100
        %s195 = smul.u32 4, %s14
        %p196 = scmp.lt.s32.totalorder %s195, 15
        %s197 = scalar_select %p196, %s195, 15
        %s198 = smul.addr %s197, 4
        %s199 = scalar_lea.vmem %s3, %s198
        %s200 = smul.u32 4, %s14
        %s201 = smul.u32 4, %s14
        %p202 = scmp.lt.s32.totalorder %s201, 15
        %s203 = scalar_select %p202, %s201, 15
        %s204 = smul.addr %s203, 4
        %s205 = scalar_lea.vmem %s3, %s204
        %s206 = smul.u32 4, %s14
        %v208 = vld [vmem:[%s0] sm:$0xf]
        %v209 = vld [vmem:[%s179] sm:$0xff]
        %v210 = vld [vmem:[%s179 + $0x8] sm:$0xff]
        %v211 = vld [vmem:[%s179 + $0x10] sm:$0xff]
        %v212 = vld [vmem:[%s179 + $0x18] sm:$0xff]
        %v213 = vld [vmem:[%s179 + $0x20] sm:$0xff]
        %v214 = vld [vmem:[%s179 + $0x28] sm:$0xff]
        %v215 = vld [vmem:[%s179 + $0x30] sm:$0x33]
        %v216 = vld [vmem:[%s179 + $0x38] sm:$0x33]
        %v217 = vld [vmem:[%s2] sm:$0xff]
        %219 = vset.pattern.permute.xlu0 0
        %220 = vperm.xlu0 %219, %v217
        %v221 = vpop.permute.xlu0 %220
        %v231 = vunpack.c.l.b16 %v209
        %v232 = vunpack.c.h.b16 %v209
        %v233 = vunpack.c.l.b16 %v210
        %v234 = vunpack.c.h.b16 %v210
        %v235 = vunpack.c.l.b16 %v211
        %v236 = vunpack.c.h.b16 %v211
        %v237 = vunpack.c.l.b16 %v212
        %v238 = vunpack.c.h.b16 %v212
        %v239 = vunpack.c.l.b16 %v213
        %v240 = vunpack.c.h.b16 %v213
        %v241 = vunpack.c.l.b16 %v214
        %v242 = vunpack.c.h.b16 %v214
        %v243 = vunpack.c.l.b16 %v215
        %v244 = vunpack.c.h.b16 %v215
        %v245 = vunpack.c.l.b16 %v216
        %v246 = vunpack.c.h.b16 %v216
        %v247 = vpack.c.b16 %v235, %v231
        %v248 = vpack.c.b16 %v236, %v232
        %v249 = vpack.c.b16 %v237, %v233
        %v250 = vpack.c.b16 %v238, %v234
        %v251 = vpack.c.b16 %v243, %v239
        %v252 = vpack.c.b16 %v244, %v240
        %v253 = vpack.c.b16 %v245, %v241
        %v254 = vpack.c.b16 %v246, %v242
        %vm259 = vcmask 220160
        %v261 = vsel %vm259, %v208, 0
        %vm263 = vcmask 1044480
        %vm264 = vcmask 1045504
        %v265 = vsel %vm263, 4294967295, 65535
        %v266 = vsel %vm264, %v265, 0
        %v268 = vand.u32 %v251, %v266
        %v271 = vand.u32 %v252, %v266
        %v274 = vand.u32 %v253, %v266
        %v277 = vand.u32 %v254, %v266
        %279 = vmatprep.subr.bf16.mxu0 %v248
        %280 = vmatpush1.bf16.msra.mxu0 %v247
        %281 = vmatprep.subr.bf16.mxu0 %v271
        %282 = vmatpush1.bf16.msra.mxu0 %v268
        %283 = vmatprep.subr.bf16.mxu0 0
        %284 = vmatpush1.bf16.msra.mxu0 0
        %285 = vmatprep.subr.bf16.mxu0 0
        %286 = vmatpush1.bf16.msra.mxu0 0
        %287 = vmatprep.subr.bf16.mxu0 0
        %288 = vmatpush1.bf16.msra.mxu0 0
        %289 = vmatprep.subr.bf16.mxu0 0
        %290 = vmatpush1.bf16.msra.mxu0 0
        %291 = vmatprep.subr.bf16.mxu0 0
        %292 = vmatpush1.bf16.msra.mxu0 0
        %293 = vmatprep.subr.bf16.mxu0 0
        %294 = vmatpush1.bf16.msra.mxu0 0
        %295 = vmatprep.subr.bf16.mxu0 0
        %296 = vmatpush1.bf16.msra.mxu0 0
        %297 = vmatprep.subr.bf16.mxu0 0
        %298 = vmatpush1.bf16.msra.mxu0 0
        %299 = vmatprep.subr.bf16.mxu0 0
        %300 = vmatpush1.bf16.msra.mxu0 0
        %301 = vmatprep.subr.bf16.mxu0 0
        %302 = vmatpush1.bf16.msra.mxu0 0
        %303 = vmatprep.subr.bf16.mxu0 0
        %304 = vmatpush1.bf16.msra.mxu0 0
        %305 = vmatprep.subr.bf16.mxu0 0
        %306 = vmatpush1.bf16.msra.mxu0 0
        %307 = vmatprep.subr.bf16.mxu0 0
        %308 = vmatpush1.bf16.msra.mxu0 0
        %309 = vmatprep.subr.bf16.mxu0 0
        %310 = vmatpush1.bf16.msra.mxu0 0
        %311 = vmatprep.mubr.bf16.mxu0 0
        %312 = vmatmul.mubr.bf16.gmra.mrb[0].mxu0 %v261
        %v313 = vpop.f32.mrb[0].mxu0
        %v314 = vadd.f32 %v221, %v313
        %v315 = vpop.f32.mrb[0].mxu0
        %v316 = vadd.f32 %v221, %v315
        %v317 = vpop.f32.mrb[0].mxu0
        %v318 = vpop.f32.mrb[0].mxu0
        %319 = vdwg.mxu0
        %320 = vmatprep.subr.bf16.mxu0 %v250
        %321 = vmatpush1.bf16.msra.mxu0 %v249
        %322 = vmatprep.subr.bf16.mxu0 %v277
        %323 = vmatpush1.bf16.msra.mxu0 %v274
        %324 = vmatprep.subr.bf16.mxu0 0
        %325 = vmatpush1.bf16.msra.mxu0 0
        %326 = vmatprep.subr.bf16.mxu0 0
        %327 = vmatpush1.bf16.msra.mxu0 0
        %328 = vmatprep.subr.bf16.mxu0 0
        %329 = vmatpush1.bf16.msra.mxu0 0
        %330 = vmatprep.subr.bf16.mxu0 0
        %331 = vmatpush1.bf16.msra.mxu0 0
        %332 = vmatprep.subr.bf16.mxu0 0
        %333 = vmatpush1.bf16.msra.mxu0 0
        %334 = vmatprep.subr.bf16.mxu0 0
        %335 = vmatpush1.bf16.msra.mxu0 0
        %336 = vmatprep.subr.bf16.mxu0 0
        %337 = vmatpush1.bf16.msra.mxu0 0
        %338 = vmatprep.subr.bf16.mxu0 0
        %339 = vmatpush1.bf16.msra.mxu0 0
        %340 = vmatprep.subr.bf16.mxu0 0
        %341 = vmatpush1.bf16.msra.mxu0 0
        %342 = vmatprep.subr.bf16.mxu0 0
        %343 = vmatpush1.bf16.msra.mxu0 0
        %344 = vmatprep.subr.bf16.mxu0 0
        %345 = vmatpush1.bf16.msra.mxu0 0
        %346 = vmatprep.subr.bf16.mxu0 0
        %347 = vmatpush1.bf16.msra.mxu0 0
        %348 = vmatprep.subr.bf16.mxu0 0
        %349 = vmatpush1.bf16.msra.mxu0 0
        %350 = vmatprep.subr.bf16.mxu0 0
        %351 = vmatpush1.bf16.msra.mxu0 0
        %352 = vmatprep.mubr.bf16.mxu0 0
        %353 = vmatmul.mubr.bf16.gmra.mrb[0].mxu0 %v261
        %v354 = vpop.f32.mrb[0].mxu0
        %v355 = vadd.f32 %v221, %v354
        %v356 = vpop.f32.mrb[0].mxu0
        %v357 = vadd.f32 %v221, %v356
        %v358 = vpop.f32.mrb[0].mxu0
        %v359 = vpop.f32.mrb[0].mxu0
        %360 = vdwg.mxu0
        %v361 = vmax.f32 %v314, 0.0
        %v362 = vmax.f32 %v316, 0.0
        %v363 = vmax.f32 %v355, 0.0
        %v364 = vmax.f32 %v357, 0.0
        %v365 = vpack.c.bf16 %v361, %v361
        %v366 = vpack.c.bf16 %v362, %v362
        %v367 = vpack.c.bf16 %v363, %v363
        %v368 = vpack.c.bf16 %v364, %v364
        %v373 = vunpack.c.l.b16 %v365
        %v374 = vunpack.c.l.b16 %v366
        %v375 = vunpack.c.l.b16 %v367
        %v376 = vunpack.c.l.b16 %v368
        %v377 = vpack.c.b16 %v374, %v373
        %v378 = vpack.c.b16 %v376, %v375
        %381 = vst [vmem:[%s205] sm:$0xff] %v377
        %382 = vst [vmem:[%s205 + $0x8] sm:$0xff] %v378
        %s383 = smul.u32 4, %s14
        %p384 = scmp.lt.s32.totalorder %s383, 15
        %s385 = scalar_select %p384, %s383, 15
        %s386 = smul.addr %s385, 4
        %s387 = scalar_lea.vmem %s3, %s386
        // Predicated region
        $region56: #{resnet_forward.10} parent=50 // pred_check
          %p388 = pneg %p100
        $region57: #{resnet_forward.10} parent=50 // pred_check_branch
          %390 = sbr.rel (%p388) target = $region59
        $region58: #{resnet_forward.10} parent=50 // pred_region
          %s391 = smul.u32 4, %s14
        $region59: #{resnet_forward.10} parent=50 // pred_fallthru
          _
      $region51: #{resnet_forward.10} parent=5 // pred_fallthru
        _
      %p392 = scmp.le.s32.totalorder 2, %s9
      // Predicated region
      $region60: #{resnet_forward.10} parent=5 // pred_check
        %p393 = pneg %p392
      $region61: #{resnet_forward.10} parent=5 // pred_check_branch
        %395 = sbr.rel (%p393) target = $region63
      $region62: #{resnet_forward.10} parent=5 // pred_region
        %s396 = ssub.s32 %s9, 2
        // Predicated region
        $region64: #{resnet_forward.10} parent=62 // pred_check
          %p397 = pneg %p106
        $region65: #{resnet_forward.10} parent=62 // pred_check_branch
          %399 = sbr.rel (%p397) target = $region67
        $region66: #{resnet_forward.10} parent=62 // pred_region
          %s400 = smul.u32 4, %s15
          %p401 = scmp.lt.s32.totalorder %s400, 15
          %s402 = scalar_select %p401, %s400, 15
          %s403 = smul.addr %s402, 4
          %s404 = scalar_lea.vmem %s3, %s403
        $region67: #{resnet_forward.10} parent=62 // pred_fallthru
          _
      $region63: #{resnet_forward.10} parent=5 // pred_fallthru
        _
    $region6: #{resnet_forward.10} parent=1 // loop_footer
      %s13 = sadd.s32 1, %s9
    $region7: #{resnet_forward.10} parent=1 // loop_footer_branch
      %8 = sbr.rel target = $region3
    $region8: #{resnet_forward.10} parent=1 // loop_exit
      _

// kernel: resnet_forward.11
$region0: #{resnet_forward.11}
  #allocation0 [shape = 'u32[]', space=smem, size = 0x4, offset = 0x4, fixed_abs, tag = 'smem constant byte address 0x4 - core index']
  #allocation1 [shape = 'u32[144,128]{1,0:T(1,128)}', space=vmem, size = 0x12000, scoped, tag = 'internal scratch']
  %s0 = inlined_call_operand.vmem [shape: bf16[8,72], index: 0, kind: input, shape index: {}]
  %s1 = inlined_call_operand.vmem [shape: bf16[72,2048], index: 1, kind: input, shape index: {}]
  %s2 = inlined_call_operand.vmem [shape: f32[8,1], index: 2, kind: input, shape index: {}]
  %s3 = inlined_call_operand.vmem [shape: bf16[8,2048], index: 3, kind: output, shape index: {}]
  %s4 = sld [smem:[#allocation0]]
  $region68: #{resnet_forward.11} parent=0
    _
  %s6 = ssub.s32 1, %s4
  %s7 = scalar_select 0, %s6, %s4
  $region1: #{resnet_forward.11} parent=0
    #allocation2 [shape = 'u8[147456]{0}', space=vmem, size = 0x24000, scoped, tag = 'input window, operand 1']
    loop: start=0, step=1, limit=6
    $region2: #{resnet_forward.11} parent=1 // loop_pre_header
      _
    $region3: #{resnet_forward.11} parent=1 // loop_header
      %s9 = sphi 0, %s13
      %p10 = scmp.ge.s32.totalorder %s9, 6
      %s17 = sphi 0, %s17
      %s19 = sphi 0, %s17
      %s20 = sphi 0, %s19
      %s34 = sphi 0, %s20
      %s40 = sphi 0, %s42
      %s43 = sphi 0, %s40
      %s44 = sphi 0, %s43
      %s60 = sphi 0, %s44
      %s64 = sphi 0, %s64
      %s66 = sphi 0, %s64
      %s67 = sphi 0, %s66
      %s81 = sphi 0, %s67
      %s87 = sphi 0, %s89
      %s90 = sphi 0, %s87
      %s91 = sphi 0, %s90
      %s107 = sphi 0, %s91
    $region4: #{resnet_forward.11} parent=1 // loop_header_branch
      %12 = sbr.rel (%p10) target = $region8
    $region5: #{resnet_forward.11} parent=1 // loop_body
      %s14 = ssub.s32 %s9, 1
      %s15 = ssub.s32 %s9, 2
      %s16 = sadd.s32 %s9, 1
      %s18 = sadd.s32 %s17, 1
      %p21 = scmp.eq.s32.totalorder %s9, 3
      %p22 = scmp.ne.s32.totalorder %s17, %s19
      %p23 = scmp.eq.s32.totalorder %s9, 0
      %p24 = por %p22, %p23
      %p25 = scmp.ne.s32.totalorder %s17, %s19
      %p26 = scmp.eq.s32.totalorder %s14, 3
      %p27 = por %p25, %p26
      %p28 = scmp.ne.s32.totalorder %s19, %s20
      %p29 = scmp.eq.s32.totalorder %s14, 0
      %p30 = por %p28, %p29
      %p31 = scmp.ne.s32.totalorder %s19, %s20
      %p32 = scmp.eq.s32.totalorder %s15, 3
      %p33 = por %p31, %p32
      %p35 = scmp.ne.s32.totalorder %s20, %s34
      %p36 = scmp.eq.s32.totalorder %s15, 0
      %p37 = por %p35, %p36
      %s38 = ssub.s32 %s9, %s16
      %p39 = scmp.eq.s32.totalorder %s38, 0
      %s41 = sadd.s32 %s40, 1
      %s42 = scalar_select %p39, %s40, %s41
      %p45 = pneg %p39
      %p46 = scmp.eq.s32.totalorder %s9, 3
      %p47 = por %p45, %p46
      %p48 = scmp.ne.s32.totalorder %s40, %s43
      %p49 = scmp.eq.s32.totalorder %s9, 0
      %p50 = por %p48, %p49
      %p51 = scmp.ne.s32.totalorder %s40, %s43
      %p52 = scmp.eq.s32.totalorder %s14, 3
      %p53 = por %p51, %p52
      %p54 = scmp.ne.s32.totalorder %s43, %s44
      %p55 = scmp.eq.s32.totalorder %s14, 0
      %p56 = por %p54, %p55
      %p57 = scmp.ne.s32.totalorder %s43, %s44
      %p58 = scmp.eq.s32.totalorder %s15, 3
      %p59 = por %p57, %p58
      %p61 = scmp.ne.s32.totalorder %s44, %s60
      %p62 = scmp.eq.s32.totalorder %s15, 0
      %p63 = por %p61, %p62
      %s65 = sadd.s32 %s64, 1
      %p68 = scmp.eq.s32.totalorder %s9, 3
      %p69 = scmp.ne.s32.totalorder %s64, %s66
      %p70 = scmp.eq.s32.totalorder %s9, 0
      %p71 = por %p69, %p70
      %p72 = scmp.ne.s32.totalorder %s64, %s66
      %p73 = scmp.eq.s32.totalorder %s14, 3
      %p74 = por %p72, %p73
      %p75 = scmp.ne.s32.totalorder %s66, %s67
      %p76 = scmp.eq.s32.totalorder %s14, 0
      %p77 = por %p75, %p76
      %p78 = scmp.ne.s32.totalorder %s66, %s67
      %p79 = scmp.eq.s32.totalorder %s15, 3
      %p80 = por %p78, %p79
      %p82 = scmp.ne.s32.totalorder %s67, %s81
      %p83 = scmp.eq.s32.totalorder %s15, 0
      %p84 = por %p82, %p83
      %s85 = ssub.s32 %s9, %s16
      %p86 = scmp.eq.s32.totalorder %s85, 0
      %s88 = sadd.s32 %s87, 1
      %s89 = scalar_select %p86, %s87, %s88
      %p92 = pneg %p86
      %p93 = scmp.eq.s32.totalorder %s9, 3
      %p94 = por %p92, %p93
      %p95 = scmp.ne.s32.totalorder %s87, %s90
      %p96 = scmp.eq.s32.totalorder %s9, 0
      %p97 = por %p95, %p96
      %p98 = scmp.ne.s32.totalorder %s87, %s90
      %p99 = scmp.eq.s32.totalorder %s14, 3
      %p100 = por %p98, %p99
      %p101 = scmp.ne.s32.totalorder %s90, %s91
      %p102 = scmp.eq.s32.totalorder %s14, 0
      %p103 = por %p101, %p102
      %p104 = scmp.ne.s32.totalorder %s90, %s91
      %p105 = scmp.eq.s32.totalorder %s15, 3
      %p106 = por %p104, %p105
      %p108 = scmp.ne.s32.totalorder %s91, %s107
      %p109 = scmp.eq.s32.totalorder %s15, 0
      %p110 = por %p108, %p109
      %p111 = scmp.le.s32.totalorder 1, %s9
      %p112 = scmp.lt.s32.totalorder %s9, 5
      %p113 = pnand %p111, %p112
      %p114 = pneg %p113
      // Predicated region
      $region9: #{resnet_forward.11} parent=5 // pred_check
        _
      $region10: #{resnet_forward.11} parent=5 // pred_check_branch
        %116 = sbr.rel (%p113) target = $region12
      $region11: #{resnet_forward.11} parent=5 // pred_region
        %s117 = ssub.s32 %s9, 1
        // Predicated region
        $region13: #{resnet_forward.11} parent=11 // pred_check
          %p118 = pneg %p30
        $region14: #{resnet_forward.11} parent=11 // pred_check_branch
          %120 = sbr.rel (%p118) target = $region16
        $region15: #{resnet_forward.11} parent=11 // pred_region
          _
        $region16: #{resnet_forward.11} parent=11 // pred_fallthru
          _
        // Predicated region
        $region17: #{resnet_forward.11} parent=11 // pred_check
          %p121 = pneg %p77
        $region18: #{resnet_forward.11} parent=11 // pred_check_branch
          %123 = sbr.rel (%p121) target = $region20
        $region19: #{resnet_forward.11} parent=11 // pred_region
          _
        $region20: #{resnet_forward.11} parent=11 // pred_fallthru
          _
      $region12: #{resnet_forward.11} parent=5 // pred_fallthru
        _
      %p124 = scmp.lt.s32.totalorder %s9, 4
      // Predicated region
      $region21: #{resnet_forward.11} parent=5 // pred_check
        %p125 = pneg %p124
      $region22: #{resnet_forward.11} parent=5 // pred_check_branch
        %127 = sbr.rel (%p125) target = $region24
      $region23: #{resnet_forward.11} parent=5 // pred_region
        // Predicated region
        $region25: #{resnet_forward.11} parent=23 // pred_check
          %p128 = pneg %p50
        $region26: #{resnet_forward.11} parent=23 // pred_check_branch
          %130 = sbr.rel (%p128) target = $region28
        $region27: #{resnet_forward.11} parent=23 // pred_region
          %s131 = sand.u32 %s40, 1
          %s132 = sand.u32 %s40, 1
          %s133 = smul.addr %s132, 144
          %s134 = scalar_lea.vmem [#allocation2], %s133
          %s135 = smul.u32 4, %s9
          %s136 = smul.addr %s135, 4
          %s137 = scalar_lea.vmem %s1, %s136
          // Predicated region
          $region29: #{resnet_forward.11} parent=27 // pred_check
            _
          $region30: #{resnet_forward.11} parent=27 // pred_check_branch
            %139 = sbr.rel (0) target = $region32
          $region31: #{resnet_forward.11} parent=27 // pred_region
            // Predicated region
            $region33: #{resnet_forward.11} parent=31 // pred_check
              _
            $region34: #{resnet_forward.11} parent=31 // pred_check_branch
              %141 = sbr.rel (0) target = $region36
            $region35: #{resnet_forward.11} parent=31 // pred_region
              loop: start=0, step=1, limit=1
              $region37: #{resnet_forward.11} parent=35 // loop_pre_header
                _
              $region38: #{resnet_forward.11} parent=35 // loop_header
                %s143 = sphi 0, %s147
                %p144 = scmp.ge.s32.totalorder %s143, 1
                %s148 = sphi %s137, %s137
                %s149 = sphi %s134, %s134
              $region39: #{resnet_forward.11} parent=35 // loop_header_branch
                %146 = sbr.rel (%p144) target = $region43
              $region40: #{resnet_forward.11} parent=35 // loop_body
                %v150 = vld [vmem:[%s148] sm:$0xff]
                %151 = vst [vmem:[%s149] sm:$0xff] %v150
                %v152 = vld [vmem:[%s148 + $0x8] sm:$0xff]
                %153 = vst [vmem:[%s149 + $0x8] sm:$0xff] %v152
                %v154 = vld [vmem:[%s148 + $0x40] sm:$0xff]
                %155 = vst [vmem:[%s149 + $0x10] sm:$0xff] %v154
                %v156 = vld [vmem:[%s148 + $0x48] sm:$0xff]
                %157 = vst [vmem:[%s149 + $0x18] sm:$0xff] %v156
                %v158 = vld [vmem:[%s148 + $0x80] sm:$0xff]
                %159 = vst [vmem:[%s149 + $0x20] sm:$0xff] %v158
                %v160 = vld [vmem:[%s148 + $0x88] sm:$0xff]
                %161 = vst [vmem:[%s149 + $0x28] sm:$0xff] %v160
                %v162 = vld [vmem:[%s148 + $0xc0] sm:$0xff]
                %163 = vst [vmem:[%s149 + $0x30] sm:$0xff] %v162
                %v164 = vld [vmem:[%s148 + $0xc8] sm:$0xff]
                %165 = vst [vmem:[%s149 + $0x38] sm:$0xff] %v164
                %v166 = vld [vmem:[%s148 + $0x100] sm:$0xff]
                %167 = vst [vmem:[%s149 + $0x40] sm:$0xff] %v166
                %v168 = vld [vmem:[%s148 + $0x108] sm:$0xff]
                %169 = vst [vmem:[%s149 + $0x48] sm:$0xff] %v168
                %v170 = vld [vmem:[%s148 + $0x140] sm:$0xff]
                %171 = vst [vmem:[%s149 + $0x50] sm:$0xff] %v170
                %v172 = vld [vmem:[%s148 + $0x148] sm:$0xff]
                %173 = vst [vmem:[%s149 + $0x58] sm:$0xff] %v172
                %v174 = vld [vmem:[%s148 + $0x180] sm:$0xff]
                %175 = vst [vmem:[%s149 + $0x60] sm:$0xff] %v174
                %v176 = vld [vmem:[%s148 + $0x188] sm:$0xff]
                %177 = vst [vmem:[%s149 + $0x68] sm:$0xff] %v176
                %v178 = vld [vmem:[%s148 + $0x1c0] sm:$0xff]
                %179 = vst [vmem:[%s149 + $0x70] sm:$0xff] %v178
                %v180 = vld [vmem:[%s148 + $0x1c8] sm:$0xff]
                %181 = vst [vmem:[%s149 + $0x78] sm:$0xff] %v180
                %v182 = vld [vmem:[%s148 + $0x200] sm:$0xff]
                %183 = vst [vmem:[%s149 + $0x80] sm:$0xff] %v182
                %v184 = vld [vmem:[%s148 + $0x208] sm:$0xff]
                %185 = vst [vmem:[%s149 + $0x88] sm:$0xff] %v184
              $region41: #{resnet_forward.11} parent=35 // loop_footer
                %s147 = sadd.s32 1, %s143
              $region42: #{resnet_forward.11} parent=35 // loop_footer_branch
                %142 = sbr.rel target = $region38
              $region43: #{resnet_forward.11} parent=35 // loop_exit
                _
            $region36: #{resnet_forward.11} parent=31 // pred_fallthru
              _
            // Predicated region
            $region44: #{resnet_forward.11} parent=31 // pred_check
              _
            $region45: #{resnet_forward.11} parent=31 // pred_check_branch
              %187 = sbr.rel target = $region47
            $region46: #{resnet_forward.11} parent=31 // pred_region
              _
            $region47: #{resnet_forward.11} parent=31 // pred_fallthru
              _
          $region32: #{resnet_forward.11} parent=27 // pred_fallthru
            _
          %188 = vnop
        $region28: #{resnet_forward.11} parent=23 // pred_fallthru
          _
      $region24: #{resnet_forward.11} parent=5 // pred_fallthru
        _
      %p189 = scmp.le.s32.totalorder 1, %s9
      %p190 = scmp.lt.s32.totalorder %s9, 5
      %p191 = pnand %p189, %p190
      %p192 = pneg %p191
      // Predicated region
      $region48: #{resnet_forward.11} parent=5 // pred_check
        _
      $region49: #{resnet_forward.11} parent=5 // pred_check_branch
        %194 = sbr.rel (%p191) target = $region51
      $region50: #{resnet_forward.11} parent=5 // pred_region
        %s195 = ssub.s32 %s9, 1
        %s196 = sand.u32 %s43, 1
        %s197 = sand.u32 %s43, 1
        %s198 = smul.addr %s197, 144
        %s199 = scalar_lea.vmem [#allocation2], %s198
        // Predicated region
        $region52: #{resnet_forward.11} parent=50 // pred_check
          %p200 = pneg %p56
        $region53: #{resnet_forward.11} parent=50 // pred_check_branch
          %202 = sbr.rel (%p200) target = $region55
        $region54: #{resnet_forward.11} parent=50 // pred_region
          _
        $region55: #{resnet_forward.11} parent=50 // pred_fallthru
          _
        %p203 = pneg %p30
        %p204 = pneg %p27
        %s205 = sand.u32 %s43, 1
        %s206 = sand.u32 %s43, 1
        %s207 = smul.addr %s206, 144
        %s208 = scalar_lea.vmem [#allocation2], %s207
        %p209 = pneg %p56
        %p210 = pneg %p53
        %p211 = pneg %p77
        %p212 = pneg %p74
        %p213 = pneg %p103
        %p214 = pneg %p100
        %s215 = smul.u32 4, %s14
        %p216 = scmp.lt.s32.totalorder %s215, 15
        %s217 = scalar_select %p216, %s215, 15
        %s218 = smul.addr %s217, 4
        %s219 = scalar_lea.vmem %s3, %s218
        %s220 = smul.u32 4, %s14
        %s221 = smul.u32 4, %s14
        %p222 = scmp.lt.s32.totalorder %s221, 15
        %s223 = scalar_select %p222, %s221, 15
        %s224 = smul.addr %s223, 4
        %s225 = scalar_lea.vmem %s3, %s224
        %s226 = smul.u32 4, %s14
        %v228 = vld [vmem:[%s0] sm:$0xf]
        %v229 = vld [vmem:[%s199] sm:$0xff]
        %v230 = vld [vmem:[%s199 + $0x8] sm:$0xff]
        %v231 = vld [vmem:[%s199 + $0x10] sm:$0xff]
        %v232 = vld [vmem:[%s199 + $0x18] sm:$0xff]
        %v233 = vld [vmem:[%s199 + $0x20] sm:$0xff]
        %v234 = vld [vmem:[%s199 + $0x28] sm:$0xff]
        %v235 = vld [vmem:[%s199 + $0x30] sm:$0xff]
        %v236 = vld [vmem:[%s199 + $0x38] sm:$0xff]
        %v237 = vld [vmem:[%s199 + $0x40] sm:$0xff]
        %v238 = vld [vmem:[%s199 + $0x48] sm:$0xff]
        %v239 = vld [vmem:[%s199 + $0x50] sm:$0xff]
        %v240 = vld [vmem:[%s199 + $0x58] sm:$0xff]
        %v241 = vld [vmem:[%s199 + $0x60] sm:$0xff]
        %v242 = vld [vmem:[%s199 + $0x68] sm:$0xff]
        %v243 = vld [vmem:[%s199 + $0x70] sm:$0xff]
        %v244 = vld [vmem:[%s199 + $0x78] sm:$0xff]
        %v245 = vld [vmem:[%s199 + $0x80] sm:$0xff]
        %v246 = vld [vmem:[%s199 + $0x88] sm:$0xff]
        %v247 = vld [vmem:[%s2] sm:$0xff]
        %249 = vset.pattern.permute.xlu0 0
        %250 = vperm.xlu0 %249, %v247
        %v251 = vpop.permute.xlu0 %250
        %v271 = vunpack.c.l.b16 %v229
        %v272 = vunpack.c.h.b16 %v229
        %v273 = vunpack.c.l.b16 %v230
        %v274 = vunpack.c.h.b16 %v230
        %v275 = vunpack.c.l.b16 %v231
        %v276 = vunpack.c.h.b16 %v231
        %v277 = vunpack.c.l.b16 %v232
        %v278 = vunpack.c.h.b16 %v232
        %v279 = vunpack.c.l.b16 %v233
        %v280 = vunpack.c.h.b16 %v233
        %v281 = vunpack.c.l.b16 %v234
        %v282 = vunpack.c.h.b16 %v234
        %v283 = vunpack.c.l.b16 %v235
        %v284 = vunpack.c.h.b16 %v235
        %v285 = vunpack.c.l.b16 %v236
        %v286 = vunpack.c.h.b16 %v236
        %v287 = vunpack.c.l.b16 %v237
        %v288 = vunpack.c.h.b16 %v237
        %v289 = vunpack.c.l.b16 %v238
        %v290 = vunpack.c.h.b16 %v238
        %v291 = vunpack.c.l.b16 %v239
        %v292 = vunpack.c.h.b16 %v239
        %v293 = vunpack.c.l.b16 %v240
        %v294 = vunpack.c.h.b16 %v240
        %v295 = vunpack.c.l.b16 %v241
        %v296 = vunpack.c.h.b16 %v241
        %v297 = vunpack.c.l.b16 %v242
        %v298 = vunpack.c.h.b16 %v242
        %v299 = vunpack.c.l.b16 %v243
        %v300 = vunpack.c.h.b16 %v243
        %v301 = vunpack.c.l.b16 %v244
        %v302 = vunpack.c.h.b16 %v244
        %v303 = vunpack.c.l.b16 %v245
        %v304 = vunpack.c.h.b16 %v245
        %v305 = vunpack.c.l.b16 %v246
        %v306 = vunpack.c.h.b16 %v246
        %v307 = vpack.c.b16 %v275, %v271
        %v308 = vpack.c.b16 %v276, %v272
        %v309 = vpack.c.b16 %v277, %v273
        %v310 = vpack.c.b16 %v278, %v274
        %v311 = vpack.c.b16 %v283, %v279
        %v312 = vpack.c.b16 %v284, %v280
        %v313 = vpack.c.b16 %v285, %v281
        %v314 = vpack.c.b16 %v286, %v282
        %v315 = vpack.c.b16 %v291, %v287
        %v316 = vpack.c.b16 %v292, %v288
        %v317 = vpack.c.b16 %v293, %v289
        %v318 = vpack.c.b16 %v294, %v290
        %v319 = vpack.c.b16 %v299, %v295
        %v320 = vpack.c.b16 %v300, %v296
        %v321 = vpack.c.b16 %v301, %v297
        %v322 = vpack.c.b16 %v302, %v298
        %v323 = vpack.c.b16 %v303, %v303
        %v324 = vpack.c.b16 %v304, %v304
        %v325 = vpack.c.b16 %v305, %v305
        %v326 = vpack.c.b16 %v306, %v306
        %vm343 = vcmask 588800
        %v345 = vsel %vm343, %v228, 0
        %vm347 = vcmask 1043456
        %v349 = vsel %vm347, %v323, 0
        %v352 = vsel %vm347, %v324, 0
        %v355 = vsel %vm347, %v325, 0
        %v358 = vsel %vm347, %v326, 0
        %360 = vmatprep.subr.bf16.mxu0 %v308
        %361 = vmatpush1.bf16.msra.mxu0 %v307
        %362 = vmatprep.subr.bf16.mxu0 %v312
        %363 = vmatpush1.bf16.msra.mxu0 %v311
        %364 = vmatprep.subr.bf16.mxu0 %v316
        %365 = vmatpush1.bf16.msra.mxu0 %v315
        %366 = vmatprep.subr.bf16.mxu0 %v320
        %367 = vmatpush1.bf16.msra.mxu0 %v319
        %368 = vmatprep.subr.bf16.mxu0 %v352
        %369 = vmatpush1.bf16.msra.mxu0 %v349
        %370 = vmatprep.subr.bf16.mxu0 0
        %371 = vmatpush1.bf16.msra.mxu0 0
        %372 = vmatprep.subr.bf16.mxu0 0
        %373 = vmatpush1.bf16.msra.mxu0 0
        %374 = vmatprep.subr.bf16.mxu0 0
        %375 = vmatpush1.bf16.msra.mxu0 0
        %376 = vmatprep.subr.bf16.mxu0 0
        %377 = vmatpush1.bf16.msra.mxu0 0
        %378 = vmatprep.subr.bf16.mxu0 0
        %379 = vmatpush1.bf16.msra.mxu0 0
        %380 = vmatprep.subr.bf16.mxu0 0
        %381 = vmatpush1.bf16.msra.mxu0 0
        %382 = vmatprep.subr.bf16.mxu0 0
        %383 = vmatpush1.bf16.msra.mxu0 0
        %384 = vmatprep.subr.bf16.mxu0 0
        %385 = vmatpush1.bf16.msra.mxu0 0
        %386 = vmatprep.subr.bf16.mxu0 0
        %387 = vmatpush1.bf16.msra.mxu0 0
        %388 = vmatprep.subr.bf16.mxu0 0
        %389 = vmatpush1.bf16.msra.mxu0 0
        %390 = vmatprep.subr.bf16.mxu0 0
        %391 = vmatpush1.bf16.msra.mxu0 0
        %392 = vmatprep.mubr.bf16.mxu0 0
        %393 = vmatmul.mubr.bf16.gmra.mrb[0].mxu0 %v345
        %v394 = vpop.f32.mrb[0].mxu0
        %v395 = vadd.f32 %v251, %v394
        %v396 = vpop.f32.mrb[0].mxu0
        %v397 = vadd.f32 %v251, %v396
        %v398 = vpop.f32.mrb[0].mxu0
        %v399 = vpop.f32.mrb[0].mxu0
        %400 = vdwg.mxu0
        %401 = vmatprep.subr.bf16.mxu0 %v310
        %402 = vmatpush1.bf16.msra.mxu0 %v309
        %403 = vmatprep.subr.bf16.mxu0 %v314
        %404 = vmatpush1.bf16.msra.mxu0 %v313
        %405 = vmatprep.subr.bf16.mxu0 %v318
        %406 = vmatpush1.bf16.msra.mxu0 %v317
        %407 = vmatprep.subr.bf16.mxu0 %v322
        %408 = vmatpush1.bf16.msra.mxu0 %v321
        %409 = vmatprep.subr.bf16.mxu0 %v358
        %410 = vmatpush1.bf16.msra.mxu0 %v355
        %411 = vmatprep.subr.bf16.mxu0 0
        %412 = vmatpush1.bf16.msra.mxu0 0
        %413 = vmatprep.subr.bf16.mxu0 0
        %414 = vmatpush1.bf16.msra.mxu0 0
        %415 = vmatprep.subr.bf16.mxu0 0
        %416 = vmatpush1.bf16.msra.mxu0 0
        %417 = vmatprep.subr.bf16.mxu0 0
        %418 = vmatpush1.bf16.msra.mxu0 0
        %419 = vmatprep.subr.bf16.mxu0 0
        %420 = vmatpush1.bf16.msra.mxu0 0
        %421 = vmatprep.subr.bf16.mxu0 0
        %422 = vmatpush1.bf16.msra.mxu0 0
        %423 = vmatprep.subr.bf16.mxu0 0
        %424 = vmatpush1.bf16.msra.mxu0 0
        %425 = vmatprep.subr.bf16.mxu0 0
        %426 = vmatpush1.bf16.msra.mxu0 0
        %427 = vmatprep.subr.bf16.mxu0 0
        %428 = vmatpush1.bf16.msra.mxu0 0
        %429 = vmatprep.subr.bf16.mxu0 0
        %430 = vmatpush1.bf16.msra.mxu0 0
        %431 = vmatprep.subr.bf16.mxu0 0
        %432 = vmatpush1.bf16.msra.mxu0 0
        %433 = vmatprep.mubr.bf16.mxu0 0
        %434 = vmatmul.mubr.bf16.gmra.mrb[0].mxu0 %v345
        %v435 = vpop.f32.mrb[0].mxu0
        %v436 = vadd.f32 %v251, %v435
        %v437 = vpop.f32.mrb[0].mxu0
        %v438 = vadd.f32 %v251, %v437
        %v439 = vpop.f32.mrb[0].mxu0
        %v440 = vpop.f32.mrb[0].mxu0
        %441 = vdwg.mxu0
        %v442 = vmax.f32 %v395, 0.0
        %v443 = vmax.f32 %v397, 0.0
        %v444 = vmax.f32 %v436, 0.0
        %v445 = vmax.f32 %v438, 0.0
        %v446 = vpack.c.bf16 %v442, %v442
        %v447 = vpack.c.bf16 %v443, %v443
        %v448 = vpack.c.bf16 %v444, %v444
        %v449 = vpack.c.bf16 %v445, %v445
        %v454 = vunpack.c.l.b16 %v446
        %v455 = vunpack.c.l.b16 %v447
        %v456 = vunpack.c.l.b16 %v448
        %v457 = vunpack.c.l.b16 %v449
        %v458 = vpack.c.b16 %v455, %v454
        %v459 = vpack.c.b16 %v457, %v456
        %462 = vst [vmem:[%s225] sm:$0xff] %v458
        %463 = vst [vmem:[%s225 + $0x8] sm:$0xff] %v459
        %s464 = smul.u32 4, %s14
        %p465 = scmp.lt.s32.totalorder %s464, 15
        %s466 = scalar_select %p465, %s464, 15
        %s467 = smul.addr %s466, 4
        %s468 = scalar_lea.vmem %s3, %s467
        // Predicated region
        $region56: #{resnet_forward.11} parent=50 // pred_check
          %p469 = pneg %p100
        $region57: #{resnet_forward.11} parent=50 // pred_check_branch
          %471 = sbr.rel (%p469) target = $region59
        $region58: #{resnet_forward.11} parent=50 // pred_region
          %s472 = smul.u32 4, %s14
        $region59: #{resnet_forward.11} parent=50 // pred_fallthru
          _
      $region51: #{resnet_forward.11} parent=5 // pred_fallthru
        _
      %p473 = scmp.le.s32.totalorder 2, %s9
      // Predicated region
      $region60: #{resnet_forward.11} parent=5 // pred_check
        %p474 = pneg %p473
      $region61: #{resnet_forward.11} parent=5 // pred_check_branch
        %476 = sbr.rel (%p474) target = $region63
      $region62: #{resnet_forward.11} parent=5 // pred_region
        %s477 = ssub.s32 %s9, 2
        // Predicated region
        $region64: #{resnet_forward.11} parent=62 // pred_check
          %p478 = pneg %p106
        $region65: #{resnet_forward.11} parent=62 // pred_check_branch
          %480 = sbr.rel (%p478) target = $region67
        $region66: #{resnet_forward.11} parent=62 // pred_region
          %s481 = smul.u32 4, %s15
          %p482 = scmp.lt.s32.totalorder %s481, 15
          %s483 = scalar_select %p482, %s481, 15
          %s484 = smul.addr %s483, 4
          %s485 = scalar_lea.vmem %s3, %s484
        $region67: #{resnet_forward.11} parent=62 // pred_fallthru
          _
      $region63: #{resnet_forward.11} parent=5 // pred_fallthru
        _
    $region6: #{resnet_forward.11} parent=1 // loop_footer
      %s13 = sadd.s32 1, %s9
    $region7: #{resnet_forward.11} parent=1 // loop_footer_branch
      %8 = sbr.rel target = $region3
    $region8: #{resnet_forward.11} parent=1 // loop_exit
      _

// kernel: resnet_forward.12
$region0: #{resnet_forward.12}
  #allocation0 [shape = 'u32[]', space=smem, size = 0x4, offset = 0x4, fixed_abs, tag = 'smem constant byte address 0x4 - core index']
  #allocation1 [shape = 'u32[144,128]{1,0:T(1,128)}', space=vmem, size = 0x12000, scoped, tag = 'internal scratch']
  %s0 = inlined_call_operand.vmem [shape: bf16[8,72], index: 0, kind: input, shape index: {}]
  %s1 = inlined_call_operand.vmem [shape: bf16[72,2048], index: 1, kind: input, shape index: {}]
  %s2 = inlined_call_operand.vmem [shape: f32[8,1], index: 2, kind: input, shape index: {}]
  %s3 = inlined_call_operand.vmem [shape: bf16[8,2048], index: 3, kind: input, shape index: {}]
  %s4 = inlined_call_operand.vmem [shape: bf16[8,2048], index: 4, kind: output, shape index: {}]
  %s5 = sld [smem:[#allocation0]]
  $region72: #{resnet_forward.12} parent=0
    _
  %s7 = ssub.s32 1, %s5
  %s8 = scalar_select 0, %s7, %s5
  $region1: #{resnet_forward.12} parent=0
    #allocation2 [shape = 'u8[147456]{0}', space=vmem, size = 0x24000, scoped, tag = 'input window, operand 1']
    loop: start=0, step=1, limit=6
    $region2: #{resnet_forward.12} parent=1 // loop_pre_header
      _
    $region3: #{resnet_forward.12} parent=1 // loop_header
      %s10 = sphi 0, %s14
      %p11 = scmp.ge.s32.totalorder %s10, 6
      %s18 = sphi 0, %s18
      %s20 = sphi 0, %s18
      %s21 = sphi 0, %s20
      %s35 = sphi 0, %s21
      %s41 = sphi 0, %s43
      %s44 = sphi 0, %s41
      %s45 = sphi 0, %s44
      %s61 = sphi 0, %s45
      %s65 = sphi 0, %s65
      %s67 = sphi 0, %s65
      %s68 = sphi 0, %s67
      %s82 = sphi 0, %s68
      %s88 = sphi 0, %s90
      %s91 = sphi 0, %s88
      %s92 = sphi 0, %s91
      %s108 = sphi 0, %s92
      %s114 = sphi 0, %s116
      %s117 = sphi 0, %s114
      %s118 = sphi 0, %s117
      %s134 = sphi 0, %s118
    $region4: #{resnet_forward.12} parent=1 // loop_header_branch
      %13 = sbr.rel (%p11) target = $region8
    $region5: #{resnet_forward.12} parent=1 // loop_body
      %s15 = ssub.s32 %s10, 1
      %s16 = ssub.s32 %s10, 2
      %s17 = sadd.s32 %s10, 1
      %s19 = sadd.s32 %s18, 1
      %p22 = scmp.eq.s32.totalorder %s10, 3
      %p23 = scmp.ne.s32.totalorder %s18, %s20
      %p24 = scmp.eq.s32.totalorder %s10, 0
      %p25 = por %p23, %p24
      %p26 = scmp.ne.s32.totalorder %s18, %s20
      %p27 = scmp.eq.s32.totalorder %s15, 3
      %p28 = por %p26, %p27
      %p29 = scmp.ne.s32.totalorder %s20, %s21
      %p30 = scmp.eq.s32.totalorder %s15, 0
      %p31 = por %p29, %p30
      %p32 = scmp.ne.s32.totalorder %s20, %s21
      %p33 = scmp.eq.s32.totalorder %s16, 3
      %p34 = por %p32, %p33
      %p36 = scmp.ne.s32.totalorder %s21, %s35
      %p37 = scmp.eq.s32.totalorder %s16, 0
      %p38 = por %p36, %p37
      %s39 = ssub.s32 %s10, %s17
      %p40 = scmp.eq.s32.totalorder %s39, 0
      %s42 = sadd.s32 %s41, 1
      %s43 = scalar_select %p40, %s41, %s42
      %p46 = pneg %p40
      %p47 = scmp.eq.s32.totalorder %s10, 3
      %p48 = por %p46, %p47
      %p49 = scmp.ne.s32.totalorder %s41, %s44
      %p50 = scmp.eq.s32.totalorder %s10, 0
      %p51 = por %p49, %p50
      %p52 = scmp.ne.s32.totalorder %s41, %s44
      %p53 = scmp.eq.s32.totalorder %s15, 3
      %p54 = por %p52, %p53
      %p55 = scmp.ne.s32.totalorder %s44, %s45
      %p56 = scmp.eq.s32.totalorder %s15, 0
      %p57 = por %p55, %p56
      %p58 = scmp.ne.s32.totalorder %s44, %s45
      %p59 = scmp.eq.s32.totalorder %s16, 3
      %p60 = por %p58, %p59
      %p62 = scmp.ne.s32.totalorder %s45, %s61
      %p63 = scmp.eq.s32.totalorder %s16, 0
      %p64 = por %p62, %p63
      %s66 = sadd.s32 %s65, 1
      %p69 = scmp.eq.s32.totalorder %s10, 3
      %p70 = scmp.ne.s32.totalorder %s65, %s67
      %p71 = scmp.eq.s32.totalorder %s10, 0
      %p72 = por %p70, %p71
      %p73 = scmp.ne.s32.totalorder %s65, %s67
      %p74 = scmp.eq.s32.totalorder %s15, 3
      %p75 = por %p73, %p74
      %p76 = scmp.ne.s32.totalorder %s67, %s68
      %p77 = scmp.eq.s32.totalorder %s15, 0
      %p78 = por %p76, %p77
      %p79 = scmp.ne.s32.totalorder %s67, %s68
      %p80 = scmp.eq.s32.totalorder %s16, 3
      %p81 = por %p79, %p80
      %p83 = scmp.ne.s32.totalorder %s68, %s82
      %p84 = scmp.eq.s32.totalorder %s16, 0
      %p85 = por %p83, %p84
      %s86 = ssub.s32 %s10, %s17
      %p87 = scmp.eq.s32.totalorder %s86, 0
      %s89 = sadd.s32 %s88, 1
      %s90 = scalar_select %p87, %s88, %s89
      %p93 = pneg %p87
      %p94 = scmp.eq.s32.totalorder %s10, 3
      %p95 = por %p93, %p94
      %p96 = scmp.ne.s32.totalorder %s88, %s91
      %p97 = scmp.eq.s32.totalorder %s10, 0
      %p98 = por %p96, %p97
      %p99 = scmp.ne.s32.totalorder %s88, %s91
      %p100 = scmp.eq.s32.totalorder %s15, 3
      %p101 = por %p99, %p100
      %p102 = scmp.ne.s32.totalorder %s91, %s92
      %p103 = scmp.eq.s32.totalorder %s15, 0
      %p104 = por %p102, %p103
      %p105 = scmp.ne.s32.totalorder %s91, %s92
      %p106 = scmp.eq.s32.totalorder %s16, 3
      %p107 = por %p105, %p106
      %p109 = scmp.ne.s32.totalorder %s92, %s108
      %p110 = scmp.eq.s32.totalorder %s16, 0
      %p111 = por %p109, %p110
      %s112 = ssub.s32 %s10, %s17
      %p113 = scmp.eq.s32.totalorder %s112, 0
      %s115 = sadd.s32 %s114, 1
      %s116 = scalar_select %p113, %s114, %s115
      %p119 = pneg %p113
      %p120 = scmp.eq.s32.totalorder %s10, 3
      %p121 = por %p119, %p120
      %p122 = scmp.ne.s32.totalorder %s114, %s117
      %p123 = scmp.eq.s32.totalorder %s10, 0
      %p124 = por %p122, %p123
      %p125 = scmp.ne.s32.totalorder %s114, %s117
      %p126 = scmp.eq.s32.totalorder %s15, 3
      %p127 = por %p125, %p126
      %p128 = scmp.ne.s32.totalorder %s117, %s118
      %p129 = scmp.eq.s32.totalorder %s15, 0
      %p130 = por %p128, %p129
      %p131 = scmp.ne.s32.totalorder %s117, %s118
      %p132 = scmp.eq.s32.totalorder %s16, 3
      %p133 = por %p131, %p132
      %p135 = scmp.ne.s32.totalorder %s118, %s134
      %p136 = scmp.eq.s32.totalorder %s16, 0
      %p137 = por %p135, %p136
      %p138 = scmp.le.s32.totalorder 1, %s10
      %p139 = scmp.lt.s32.totalorder %s10, 5
      %p140 = pnand %p138, %p139
      %p141 = pneg %p140
      // Predicated region
      $region9: #{resnet_forward.12} parent=5 // pred_check
        _
      $region10: #{resnet_forward.12} parent=5 // pred_check_branch
        %143 = sbr.rel (%p140) target = $region12
      $region11: #{resnet_forward.12} parent=5 // pred_region
        %s144 = ssub.s32 %s10, 1
        // Predicated region
        $region13: #{resnet_forward.12} parent=11 // pred_check
          %p145 = pneg %p31
        $region14: #{resnet_forward.12} parent=11 // pred_check_branch
          %147 = sbr.rel (%p145) target = $region16
        $region15: #{resnet_forward.12} parent=11 // pred_region
          _
        $region16: #{resnet_forward.12} parent=11 // pred_fallthru
          _
        // Predicated region
        $region17: #{resnet_forward.12} parent=11 // pred_check
          %p148 = pneg %p78
        $region18: #{resnet_forward.12} parent=11 // pred_check_branch
          %150 = sbr.rel (%p148) target = $region20
        $region19: #{resnet_forward.12} parent=11 // pred_region
          _
        $region20: #{resnet_forward.12} parent=11 // pred_fallthru
          _
      $region12: #{resnet_forward.12} parent=5 // pred_fallthru
        _
      %p151 = scmp.lt.s32.totalorder %s10, 4
      // Predicated region
      $region21: #{resnet_forward.12} parent=5 // pred_check
        %p152 = pneg %p151
      $region22: #{resnet_forward.12} parent=5 // pred_check_branch
        %154 = sbr.rel (%p152) target = $region24
      $region23: #{resnet_forward.12} parent=5 // pred_region
        // Predicated region
        $region25: #{resnet_forward.12} parent=23 // pred_check
          %p155 = pneg %p51
        $region26: #{resnet_forward.12} parent=23 // pred_check_branch
          %157 = sbr.rel (%p155) target = $region28
        $region27: #{resnet_forward.12} parent=23 // pred_region
          %s158 = sand.u32 %s41, 1
          %s159 = sand.u32 %s41, 1
          %s160 = smul.addr %s159, 144
          %s161 = scalar_lea.vmem [#allocation2], %s160
          %s162 = smul.u32 4, %s10
          %s163 = smul.addr %s162, 4
          %s164 = scalar_lea.vmem %s1, %s163
          // Predicated region
          $region29: #{resnet_forward.12} parent=27 // pred_check
            _
          $region30: #{resnet_forward.12} parent=27 // pred_check_branch
            %166 = sbr.rel (0) target = $region32
          $region31: #{resnet_forward.12} parent=27 // pred_region
            // Predicated region
            $region33: #{resnet_forward.12} parent=31 // pred_check
              _
            $region34: #{resnet_forward.12} parent=31 // pred_check_branch
              %168 = sbr.rel (0) target = $region36
            $region35: #{resnet_forward.12} parent=31 // pred_region
              loop: start=0, step=1, limit=1
              $region37: #{resnet_forward.12} parent=35 // loop_pre_header
                _
              $region38: #{resnet_forward.12} parent=35 // loop_header
                %s170 = sphi 0, %s174
                %p171 = scmp.ge.s32.totalorder %s170, 1
                %s175 = sphi %s164, %s164
                %s176 = sphi %s161, %s161
              $region39: #{resnet_forward.12} parent=35 // loop_header_branch
                %173 = sbr.rel (%p171) target = $region43
              $region40: #{resnet_forward.12} parent=35 // loop_body
                %v177 = vld [vmem:[%s175] sm:$0xff]
                %178 = vst [vmem:[%s176] sm:$0xff] %v177
                %v179 = vld [vmem:[%s175 + $0x8] sm:$0xff]
                %180 = vst [vmem:[%s176 + $0x8] sm:$0xff] %v179
                %v181 = vld [vmem:[%s175 + $0x40] sm:$0xff]
                %182 = vst [vmem:[%s176 + $0x10] sm:$0xff] %v181
                %v183 = vld [vmem:[%s175 + $0x48] sm:$0xff]
                %184 = vst [vmem:[%s176 + $0x18] sm:$0xff] %v183
                %v185 = vld [vmem:[%s175 + $0x80] sm:$0xff]
                %186 = vst [vmem:[%s176 + $0x20] sm:$0xff] %v185
                %v187 = vld [vmem:[%s175 + $0x88] sm:$0xff]
                %188 = vst [vmem:[%s176 + $0x28] sm:$0xff] %v187
                %v189 = vld [vmem:[%s175 + $0xc0] sm:$0xff]
                %190 = vst [vmem:[%s176 + $0x30] sm:$0xff] %v189
                %v191 = vld [vmem:[%s175 + $0xc8] sm:$0xff]
                %192 = vst [vmem:[%s176 + $0x38] sm:$0xff] %v191
                %v193 = vld [vmem:[%s175 + $0x100] sm:$0xff]
                %194 = vst [vmem:[%s176 + $0x40] sm:$0xff] %v193
                %v195 = vld [vmem:[%s175 + $0x108] sm:$0xff]
                %196 = vst [vmem:[%s176 + $0x48] sm:$0xff] %v195
                %v197 = vld [vmem:[%s175 + $0x140] sm:$0xff]
                %198 = vst [vmem:[%s176 + $0x50] sm:$0xff] %v197
                %v199 = vld [vmem:[%s175 + $0x148] sm:$0xff]
                %200 = vst [vmem:[%s176 + $0x58] sm:$0xff] %v199
                %v201 = vld [vmem:[%s175 + $0x180] sm:$0xff]
                %202 = vst [vmem:[%s176 + $0x60] sm:$0xff] %v201
                %v203 = vld [vmem:[%s175 + $0x188] sm:$0xff]
                %204 = vst [vmem:[%s176 + $0x68] sm:$0xff] %v203
                %v205 = vld [vmem:[%s175 + $0x1c0] sm:$0xff]
                %206 = vst [vmem:[%s176 + $0x70] sm:$0xff] %v205
                %v207 = vld [vmem:[%s175 + $0x1c8] sm:$0xff]
                %208 = vst [vmem:[%s176 + $0x78] sm:$0xff] %v207
                %v209 = vld [vmem:[%s175 + $0x200] sm:$0xff]
                %210 = vst [vmem:[%s176 + $0x80] sm:$0xff] %v209
                %v211 = vld [vmem:[%s175 + $0x208] sm:$0xff]
                %212 = vst [vmem:[%s176 + $0x88] sm:$0xff] %v211
              $region41: #{resnet_forward.12} parent=35 // loop_footer
                %s174 = sadd.s32 1, %s170
              $region42: #{resnet_forward.12} parent=35 // loop_footer_branch
                %169 = sbr.rel target = $region38
              $region43: #{resnet_forward.12} parent=35 // loop_exit
                _
            $region36: #{resnet_forward.12} parent=31 // pred_fallthru
              _
            // Predicated region
            $region44: #{resnet_forward.12} parent=31 // pred_check
              _
            $region45: #{resnet_forward.12} parent=31 // pred_check_branch
              %214 = sbr.rel target = $region47
            $region46: #{resnet_forward.12} parent=31 // pred_region
              _
            $region47: #{resnet_forward.12} parent=31 // pred_fallthru
              _
          $region32: #{resnet_forward.12} parent=27 // pred_fallthru
            _
          %215 = vnop
        $region28: #{resnet_forward.12} parent=23 // pred_fallthru
          _
        // Predicated region
        $region48: #{resnet_forward.12} parent=23 // pred_check
          %p216 = pneg %p98
        $region49: #{resnet_forward.12} parent=23 // pred_check_branch
          %218 = sbr.rel (%p216) target = $region51
        $region50: #{resnet_forward.12} parent=23 // pred_region
          %s219 = smul.u32 4, %s10
          %p220 = scmp.lt.s32.totalorder %s219, 15
          %s221 = scalar_select %p220, %s219, 15
          %s222 = smul.addr %s221, 4
          %s223 = scalar_lea.vmem %s3, %s222
          %s224 = smul.u32 4, %s10
        $region51: #{resnet_forward.12} parent=23 // pred_fallthru
          _
      $region24: #{resnet_forward.12} parent=5 // pred_fallthru
        _
      %p225 = scmp.le.s32.totalorder 1, %s10
      %p226 = scmp.lt.s32.totalorder %s10, 5
      %p227 = pnand %p225, %p226
      %p228 = pneg %p227
      // Predicated region
      $region52: #{resnet_forward.12} parent=5 // pred_check
        _
      $region53: #{resnet_forward.12} parent=5 // pred_check_branch
        %230 = sbr.rel (%p227) target = $region55
      $region54: #{resnet_forward.12} parent=5 // pred_region
        %s231 = ssub.s32 %s10, 1
        %s232 = sand.u32 %s44, 1
        %s233 = sand.u32 %s44, 1
        %s234 = smul.addr %s233, 144
        %s235 = scalar_lea.vmem [#allocation2], %s234
        // Predicated region
        $region56: #{resnet_forward.12} parent=54 // pred_check
          %p236 = pneg %p57
        $region57: #{resnet_forward.12} parent=54 // pred_check_branch
          %238 = sbr.rel (%p236) target = $region59
        $region58: #{resnet_forward.12} parent=54 // pred_region
          _
        $region59: #{resnet_forward.12} parent=54 // pred_fallthru
          _
        %p239 = pneg %p31
        %p240 = pneg %p28
        %s241 = sand.u32 %s44, 1
        %s242 = sand.u32 %s44, 1
        %s243 = smul.addr %s242, 144
        %s244 = scalar_lea.vmem [#allocation2], %s243
        %p245 = pneg %p57
        %p246 = pneg %p54
        %p247 = pneg %p78
        %p248 = pneg %p75
        %s249 = smul.u32 4, %s15
        %p250 = scmp.lt.s32.totalorder %s249, 15
        %s251 = scalar_select %p250, %s249, 15
        %s252 = smul.addr %s251, 4
        %s253 = scalar_lea.vmem %s3, %s252
        %p254 = pneg %p104
        %p255 = pneg %p101
        %p256 = pneg %p130
        %p257 = pneg %p127
        %s258 = smul.u32 4, %s15
        %p259 = scmp.lt.s32.totalorder %s258, 15
        %s260 = scalar_select %p259, %s258, 15
        %s261 = smul.addr %s260, 4
        %s262 = scalar_lea.vmem %s4, %s261
        %s263 = smul.u32 4, %s15
        %s264 = smul.u32 4, %s15
        %p265 = scmp.lt.s32.totalorder %s264, 15
        %s266 = scalar_select %p265, %s264, 15
        %s267 = smul.addr %s266, 4
        %s268 = scalar_lea.vmem %s3, %s267
        %s269 = smul.u32 4, %s15
        %s270 = smul.u32 4, %s15
        %p271 = scmp.lt.s32.totalorder %s270, 15
        %s272 = scalar_select %p271, %s270, 15
        %s273 = smul.addr %s272, 4
        %s274 = scalar_lea.vmem %s4, %s273
        %s275 = smul.u32 4, %s15
        %v277 = vld [vmem:[%s0] sm:$0xf]
        %v278 = vld [vmem:[%s235] sm:$0xff]
        %v279 = vld [vmem:[%s235 + $0x8] sm:$0xff]
        %v280 = vld [vmem:[%s235 + $0x10] sm:$0xff]
        %v281 = vld [vmem:[%s235 + $0x18] sm:$0xff]
        %v282 = vld [vmem:[%s235 + $0x20] sm:$0xff]
        %v283 = vld [vmem:[%s235 + $0x28] sm:$0xff]
        %v284 = vld [vmem:[%s235 + $0x30] sm:$0xff]
        %v285 = vld [vmem:[%s235 + $0x38] sm:$0xff]
        %v286 = vld [vmem:[%s235 + $0x40] sm:$0xff]
        %v287 = vld [vmem:[%s235 + $0x48] sm:$0xff]
        %v288 = vld [vmem:[%s235 + $0x50] sm:$0xff]
        %v289 = vld [vmem:[%s235 + $0x58] sm:$0xff]
        %v290 = vld [vmem:[%s235 + $0x60] sm:$0xff]
        %v291 = vld [vmem:[%s235 + $0x68] sm:$0xff]
        %v292 = vld [vmem:[%s235 + $0x70] sm:$0xff]
        %v293 = vld [vmem:[%s235 + $0x78] sm:$0xff]
        %v294 = vld [vmem:[%s235 + $0x80] sm:$0xff]
        %v295 = vld [vmem:[%s235 + $0x88] sm:$0xff]
        %v296 = vld [vmem:[%s2] sm:$0xff]
        %298 = vset.pattern.permute.xlu0 0
        %299 = vperm.xlu0 %298, %v296
        %v300 = vpop.permute.xlu0 %299
        %v320 = vunpack.c.l.b16 %v278
        %v321 = vunpack.c.h.b16 %v278
        %v322 = vunpack.c.l.b16 %v279
        %v323 = vunpack.c.h.b16 %v279
        %v324 = vunpack.c.l.b16 %v280
        %v325 = vunpack.c.h.b16 %v280
        %v326 = vunpack.c.l.b16 %v281
        %v327 = vunpack.c.h.b16 %v281
        %v328 = vunpack.c.l.b16 %v282
        %v329 = vunpack.c.h.b16 %v282
        %v330 = vunpack.c.l.b16 %v283
        %v331 = vunpack.c.h.b16 %v283
        %v332 = vunpack.c.l.b16 %v284
        %v333 = vunpack.c.h.b16 %v284
        %v334 = vunpack.c.l.b16 %v285
        %v335 = vunpack.c.h.b16 %v285
        %v336 = vunpack.c.l.b16 %v286
        %v337 = vunpack.c.h.b16 %v286
        %v338 = vunpack.c.l.b16 %v287
        %v339 = vunpack.c.h.b16 %v287
        %v340 = vunpack.c.l.b16 %v288
        %v341 = vunpack.c.h.b16 %v288
        %v342 = vunpack.c.l.b16 %v289
        %v343 = vunpack.c.h.b16 %v289
        %v344 = vunpack.c.l.b16 %v290
        %v345 = vunpack.c.h.b16 %v290
        %v346 = vunpack.c.l.b16 %v291
        %v347 = vunpack.c.h.b16 %v291
        %v348 = vunpack.c.l.b16 %v292
        %v349 = vunpack.c.h.b16 %v292
        %v350 = vunpack.c.l.b16 %v293
        %v351 = vunpack.c.h.b16 %v293
        %v352 = vunpack.c.l.b16 %v294
        %v353 = vunpack.c.h.b16 %v294
        %v354 = vunpack.c.l.b16 %v295
        %v355 = vunpack.c.h.b16 %v295
        %v356 = vpack.c.b16 %v324, %v320
        %v357 = vpack.c.b16 %v325, %v321
        %v358 = vpack.c.b16 %v326, %v322
        %v359 = vpack.c.b16 %v327, %v323
        %v360 = vpack.c.b16 %v332, %v328
        %v361 = vpack.c.b16 %v333, %v329
        %v362 = vpack.c.b16 %v334, %v330
        %v363 = vpack.c.b16 %v335, %v331
        %v364 = vpack.c.b16 %v340, %v336
        %v365 = vpack.c.b16 %v341, %v337
        %v366 = vpack.c.b16 %v342, %v338
        %v367 = vpack.c.b16 %v343, %v339
        %v368 = vpack.c.b16 %v348, %v344
        %v369 = vpack.c.b16 %v349, %v345
        %v370 = vpack.c.b16 %v350, %v346
        %v371 = vpack.c.b16 %v351, %v347
        %v372 = vpack.c.b16 %v352, %v352
        %v373 = vpack.c.b16 %v353, %v353
        %v374 = vpack.c.b16 %v354, %v354
        %v375 = vpack.c.b16 %v355, %v355
        %vm392 = vcmask 588800
        %v394 = vsel %vm392, %v277, 0
        %vm396 = vcmask 1043456
        %v398 = vsel %vm396, %v372, 0
        %v401 = vsel %vm396, %v373, 0
        %v404 = vsel %vm396, %v374, 0
        %v407 = vsel %vm396, %v375, 0
        %409 = vmatprep.subr.bf16.mxu0 %v357
        %410 = vmatpush1.bf16.msra.mxu0 %v356
        %411 = vmatprep.subr.bf16.mxu0 %v361
        %412 = vmatpush1.bf16.msra.mxu0 %v360
        %413 = vmatprep.subr.bf16.mxu0 %v365
        %414 = vmatpush1.bf16.msra.mxu0 %v364
        %415 = vmatprep.subr.bf16.mxu0 %v369
        %416 = vmatpush1.bf16.msra.mxu0 %v368
        %417 = vmatprep.subr.bf16.mxu0 %v401
        %418 = vmatpush1.bf16.msra.mxu0 %v398
        %419 = vmatprep.subr.bf16.mxu0 0
        %420 = vmatpush1.bf16.msra.mxu0 0
        %421 = vmatprep.subr.bf16.mxu0 0
        %422 = vmatpush1.bf16.msra.mxu0 0
        %423 = vmatprep.subr.bf16.mxu0 0
        %424 = vmatpush1.bf16.msra.mxu0 0
        %425 = vmatprep.subr.bf16.mxu0 0
        %426 = vmatpush1.bf16.msra.mxu0 0
        %427 = vmatprep.subr.bf16.mxu0 0
        %428 = vmatpush1.bf16.msra.mxu0 0
        %429 = vmatprep.subr.bf16.mxu0 0
        %430 = vmatpush1.bf16.msra.mxu0 0
        %431 = vmatprep.subr.bf16.mxu0 0
        %432 = vmatpush1.bf16.msra.mxu0 0
        %433 = vmatprep.subr.bf16.mxu0 0
        %434 = vmatpush1.bf16.msra.mxu0 0
        %435 = vmatprep.subr.bf16.mxu0 0
        %436 = vmatpush1.bf16.msra.mxu0 0
        %437 = vmatprep.subr.bf16.mxu0 0
        %438 = vmatpush1.bf16.msra.mxu0 0
        %439 = vmatprep.subr.bf16.mxu0 0
        %440 = vmatpush1.bf16.msra.mxu0 0
        %441 = vmatprep.mubr.bf16.mxu0 0
        %442 = vmatmul.mubr.bf16.gmra.mrb[0].mxu0 %v394
        %v443 = vpop.f32.mrb[0].mxu0
        %v444 = vadd.f32 %v300, %v443
        %v445 = vpop.f32.mrb[0].mxu0
        %v446 = vadd.f32 %v300, %v445
        %v447 = vpop.f32.mrb[0].mxu0
        %v448 = vpop.f32.mrb[0].mxu0
        %449 = vdwg.mxu0
        %450 = vmatprep.subr.bf16.mxu0 %v359
        %451 = vmatpush1.bf16.msra.mxu0 %v358
        %452 = vmatprep.subr.bf16.mxu0 %v363
        %453 = vmatpush1.bf16.msra.mxu0 %v362
        %454 = vmatprep.subr.bf16.mxu0 %v367
        %455 = vmatpush1.bf16.msra.mxu0 %v366
        %456 = vmatprep.subr.bf16.mxu0 %v371
        %457 = vmatpush1.bf16.msra.mxu0 %v370
        %458 = vmatprep.subr.bf16.mxu0 %v407
        %459 = vmatpush1.bf16.msra.mxu0 %v404
        %460 = vmatprep.subr.bf16.mxu0 0
        %461 = vmatpush1.bf16.msra.mxu0 0
        %462 = vmatprep.subr.bf16.mxu0 0
        %463 = vmatpush1.bf16.msra.mxu0 0
        %464 = vmatprep.subr.bf16.mxu0 0
        %465 = vmatpush1.bf16.msra.mxu0 0
        %466 = vmatprep.subr.bf16.mxu0 0
        %467 = vmatpush1.bf16.msra.mxu0 0
        %468 = vmatprep.subr.bf16.mxu0 0
        %469 = vmatpush1.bf16.msra.mxu0 0
        %470 = vmatprep.subr.bf16.mxu0 0
        %471 = vmatpush1.bf16.msra.mxu0 0
        %472 = vmatprep.subr.bf16.mxu0 0
        %473 = vmatpush1.bf16.msra.mxu0 0
        %474 = vmatprep.subr.bf16.mxu0 0
        %475 = vmatpush1.bf16.msra.mxu0 0
        %476 = vmatprep.subr.bf16.mxu0 0
        %477 = vmatpush1.bf16.msra.mxu0 0
        %478 = vmatprep.subr.bf16.mxu0 0
        %479 = vmatpush1.bf16.msra.mxu0 0
        %480 = vmatprep.subr.bf16.mxu0 0
        %481 = vmatpush1.bf16.msra.mxu0 0
        %482 = vmatprep.mubr.bf16.mxu0 0
        %483 = vmatmul.mubr.bf16.gmra.mrb[0].mxu0 %v394
        %v484 = vpop.f32.mrb[0].mxu0
        %v485 = vadd.f32 %v300, %v484
        %v486 = vpop.f32.mrb[0].mxu0
        %v487 = vadd.f32 %v300, %v486
        %v488 = vpop.f32.mrb[0].mxu0
        %v489 = vpop.f32.mrb[0].mxu0
        %490 = vdwg.mxu0
        %v491 = vld [vmem:[%s268] sm:$0xff]
        %v492 = vld [vmem:[%s268 + $0x8] sm:$0xff]
        %v493 = vunpack.c.l.bf16 %v491
        %v494 = vunpack.c.h.bf16 %v491
        %v495 = vunpack.c.l.bf16 %v492
        %v496 = vunpack.c.h.bf16 %v492
        %v497 = vadd.f32 %v444, %v493
        %v498 = vadd.f32 %v446, %v494
        %v499 = vadd.f32 %v485, %v495
        %v500 = vadd.f32 %v487, %v496
        %v501 = vmax.f32 %v497, 0.0
        %v502 = vmax.f32 %v498, 0.0
        %v503 = vmax.f32 %v499, 0.0
        %v504 = vmax.f32 %v500, 0.0
        %v505 = vpack.c.bf16 %v501, %v501
        %v506 = vpack.c.bf16 %v502, %v502
        %v507 = vpack.c.bf16 %v503, %v503
        %v508 = vpack.c.bf16 %v504, %v504
        %v513 = vunpack.c.l.b16 %v505
        %v514 = vunpack.c.l.b16 %v506
        %v515 = vunpack.c.l.b16 %v507
        %v516 = vunpack.c.l.b16 %v508
        %v517 = vpack.c.b16 %v514, %v513
        %v518 = vpack.c.b16 %v516, %v515
        %521 = vst [vmem:[%s274] sm:$0xff] %v517
        %522 = vst [vmem:[%s274 + $0x8] sm:$0xff] %v518
        %s523 = smul.u32 4, %s15
        %p524 = scmp.lt.s32.totalorder %s523, 15
        %s525 = scalar_select %p524, %s523, 15
        %s526 = smul.addr %s525, 4
        %s527 = scalar_lea.vmem %s4, %s526
        // Predicated region
        $region60: #{resnet_forward.12} parent=54 // pred_check
          %p528 = pneg %p127
        $region61: #{resnet_forward.12} parent=54 // pred_check_branch
          %530 = sbr.rel (%p528) target = $region63
        $region62: #{resnet_forward.12} parent=54 // pred_region
          %s531 = smul.u32 4, %s15
        $region63: #{resnet_forward.12} parent=54 // pred_fallthru
          _
      $region55: #{resnet_forward.12} parent=5 // pred_fallthru
        _
      %p532 = scmp.le.s32.totalorder 2, %s10
      // Predicated region
      $region64: #{resnet_forward.12} parent=5 // pred_check
        %p533 = pneg %p532
      $region65: #{resnet_forward.12} parent=5 // pred_check_branch
        %535 = sbr.rel (%p533) target = $region67
      $region66: #{resnet_forward.12} parent=5 // pred_region
        %s536 = ssub.s32 %s10, 2
        // Predicated region
        $region68: #{resnet_forward.12} parent=66 // pred_check
          %p537 = pneg %p133
        $region69: #{resnet_forward.12} parent=66 // pred_check_branch
          %539 = sbr.rel (%p537) target = $region71
        $region70: #{resnet_forward.12} parent=66 // pred_region
          %s540 = smul.u32 4, %s16
          %p541 = scmp.lt.s32.totalorder %s540, 15
          %s542 = scalar_select %p541, %s540, 15
          %s543 = smul.addr %s542, 4
          %s544 = scalar_lea.vmem %s4, %s543
        $region71: #{resnet_forward.12} parent=66 // pred_fallthru
          _
      $region67: #{resnet_forward.12} parent=5 // pred_fallthru
        _
    $region6: #{resnet_forward.12} parent=1 // loop_footer
      %s14 = sadd.s32 1, %s10
    $region7: #{resnet_forward.12} parent=1 // loop_footer_branch
      %9 = sbr.rel target = $region3
    $region8: #{resnet_forward.12} parent=1 // loop_exit
      _

// kernel: resnet_forward.13
$region0: #{resnet_forward.13}
  #allocation0 [shape = 'u32[]', space=smem, size = 0x4, offset = 0x4, fixed_abs, tag = 'smem constant byte address 0x4 - core index']
  #allocation1 [shape = 'u32[144,128]{1,0:T(1,128)}', space=vmem, size = 0x12000, scoped, tag = 'internal scratch']
  %s0 = inlined_call_operand.vmem [shape: bf16[16,72], index: 0, kind: input, shape index: {}]
  %s1 = inlined_call_operand.vmem [shape: bf16[72,512], index: 1, kind: input, shape index: {}]
  %s2 = inlined_call_operand.vmem [shape: f32[16,1], index: 2, kind: input, shape index: {}]
  %s3 = inlined_call_operand.vmem [shape: bf16[16,512], index: 3, kind: output, shape index: {}]
  %s4 = sld [smem:[#allocation0]]
  $region117: #{resnet_forward.13} parent=0
    _
  %s6 = ssub.s32 1, %s4
  %s7 = scalar_select 0, %s6, %s4
  $region1: #{resnet_forward.13} parent=0
    #allocation2 [shape = 'u8[73728]{0}', space=vmem, size = 0x12000, scoped, tag = 'input window, operand 1']
    #allocation3 [shape = 'u8[16384]{0}', space=vmem, size = 0x4000, scoped, tag = 'output window, operand 0']
    loop: start=0, step=1, limit=4
    $region2: #{resnet_forward.13} parent=1 // loop_pre_header
      _
    $region3: #{resnet_forward.13} parent=1 // loop_header
      %s9 = sphi 0, %s13
      %p10 = scmp.ge.s32.totalorder %s9, 4
      %s17 = sphi 0, %s17
      %s19 = sphi 0, %s17
      %s20 = sphi 0, %s19
      %s34 = sphi 0, %s20
      %s40 = sphi 0, %s42
      %s43 = sphi 0, %s40
      %s44 = sphi 0, %s43
      %s60 = sphi 0, %s44
      %s64 = sphi 0, %s64
      %s66 = sphi 0, %s64
      %s67 = sphi 0, %s66
      %s81 = sphi 0, %s67
      %s87 = sphi 0, %s89
      %s90 = sphi 0, %s87
      %s91 = sphi 0, %s90
      %s107 = sphi 0, %s91
    $region4: #{resnet_forward.13} parent=1 // loop_header_branch
      %12 = sbr.rel (%p10) target = $region8
    $region5: #{resnet_forward.13} parent=1 // loop_body
      %s14 = ssub.s32 %s9, 1
      %s15 = ssub.s32 %s9, 2
      %s16 = sadd.s32 %s9, 1
      %s18 = sadd.s32 %s17, 1
      %p21 = scmp.eq.s32.totalorder %s9, 1
      %p22 = scmp.ne.s32.totalorder %s17, %s19
      %p23 = scmp.eq.s32.totalorder %s9, 0
      %p24 = por %p22, %p23
      %p25 = scmp.ne.s32.totalorder %s17, %s19
      %p26 = scmp.eq.s32.totalorder %s14, 1
      %p27 = por %p25, %p26
      %p28 = scmp.ne.s32.totalorder %s19, %s20
      %p29 = scmp.eq.s32.totalorder %s14, 0
      %p30 = por %p28, %p29
      %p31 = scmp.ne.s32.totalorder %s19, %s20
      %p32 = scmp.eq.s32.totalorder %s15, 1
      %p33 = por %p31, %p32
      %p35 = scmp.ne.s32.totalorder %s20, %s34
      %p36 = scmp.eq.s32.totalorder %s15, 0
      %p37 = por %p35, %p36
      %s38 = ssub.s32 %s9, %s16
      %p39 = scmp.eq.s32.totalorder %s38, 0
      %s41 = sadd.s32 %s40, 1
      %s42 = scalar_select %p39, %s40, %s41
      %p45 = pneg %p39
      %p46 = scmp.eq.s32.totalorder %s9, 1
      %p47 = por %p45, %p46
      %p48 = scmp.ne.s32.totalorder %s40, %s43
      %p49 = scmp.eq.s32.totalorder %s9, 0
      %p50 = por %p48, %p49
      %p51 = scmp.ne.s32.totalorder %s40, %s43
      %p52 = scmp.eq.s32.totalorder %s14, 1
      %p53 = por %p51, %p52
      %p54 = scmp.ne.s32.totalorder %s43, %s44
      %p55 = scmp.eq.s32.totalorder %s14, 0
      %p56 = por %p54, %p55
      %p57 = scmp.ne.s32.totalorder %s43, %s44
      %p58 = scmp.eq.s32.totalorder %s15, 1
      %p59 = por %p57, %p58
      %p61 = scmp.ne.s32.totalorder %s44, %s60
      %p62 = scmp.eq.s32.totalorder %s15, 0
      %p63 = por %p61, %p62
      %s65 = sadd.s32 %s64, 1
      %p68 = scmp.eq.s32.totalorder %s9, 1
      %p69 = scmp.ne.s32.totalorder %s64, %s66
      %p70 = scmp.eq.s32.totalorder %s9, 0
      %p71 = por %p69, %p70
      %p72 = scmp.ne.s32.totalorder %s64, %s66
      %p73 = scmp.eq.s32.totalorder %s14, 1
      %p74 = por %p72, %p73
      %p75 = scmp.ne.s32.totalorder %s66, %s67
      %p76 = scmp.eq.s32.totalorder %s14, 0
      %p77 = por %p75, %p76
      %p78 = scmp.ne.s32.totalorder %s66, %s67
      %p79 = scmp.eq.s32.totalorder %s15, 1
      %p80 = por %p78, %p79
      %p82 = scmp.ne.s32.totalorder %s67, %s81
      %p83 = scmp.eq.s32.totalorder %s15, 0
      %p84 = por %p82, %p83
      %s85 = ssub.s32 %s9, %s16
      %p86 = scmp.eq.s32.totalorder %s85, 0
      %s88 = sadd.s32 %s87, 1
      %s89 = scalar_select %p86, %s87, %s88
      %p92 = pneg %p86
      %p93 = scmp.eq.s32.totalorder %s9, 1
      %p94 = por %p92, %p93
      %p95 = scmp.ne.s32.totalorder %s87, %s90
      %p96 = scmp.eq.s32.totalorder %s9, 0
      %p97 = por %p95, %p96
      %p98 = scmp.ne.s32.totalorder %s87, %s90
      %p99 = scmp.eq.s32.totalorder %s14, 1
      %p100 = por %p98, %p99
      %p101 = scmp.ne.s32.totalorder %s90, %s91
      %p102 = scmp.eq.s32.totalorder %s14, 0
      %p103 = por %p101, %p102
      %p104 = scmp.ne.s32.totalorder %s90, %s91
      %p105 = scmp.eq.s32.totalorder %s15, 1
      %p106 = por %p104, %p105
      %p108 = scmp.ne.s32.totalorder %s91, %s107
      %p109 = scmp.eq.s32.totalorder %s15, 0
      %p110 = por %p108, %p109
      %p111 = scmp.le.s32.totalorder 1, %s9
      %p112 = scmp.lt.s32.totalorder %s9, 3
      %p113 = pnand %p111, %p112
      %p114 = pneg %p113
      // Predicated region
      $region9: #{resnet_forward.13} parent=5 // pred_check
        _
      $region10: #{resnet_forward.13} parent=5 // pred_check_branch
        %116 = sbr.rel (%p113) target = $region12
      $region11: #{resnet_forward.13} parent=5 // pred_region
        %s117 = ssub.s32 %s9, 1
        // Predicated region
        $region13: #{resnet_forward.13} parent=11 // pred_check
          %p118 = pneg %p30
        $region14: #{resnet_forward.13} parent=11 // pred_check_branch
          %120 = sbr.rel (%p118) target = $region16
        $region15: #{resnet_forward.13} parent=11 // pred_region
          _
        $region16: #{resnet_forward.13} parent=11 // pred_fallthru
          _
        // Predicated region
        $region17: #{resnet_forward.13} parent=11 // pred_check
          %p121 = pneg %p77
        $region18: #{resnet_forward.13} parent=11 // pred_check_branch
          %123 = sbr.rel (%p121) target = $region20
        $region19: #{resnet_forward.13} parent=11 // pred_region
          _
        $region20: #{resnet_forward.13} parent=11 // pred_fallthru
          _
      $region12: #{resnet_forward.13} parent=5 // pred_fallthru
        _
      %p124 = scmp.lt.s32.totalorder %s9, 2
      // Predicated region
      $region21: #{resnet_forward.13} parent=5 // pred_check
        %p125 = pneg %p124
      $region22: #{resnet_forward.13} parent=5 // pred_check_branch
        %127 = sbr.rel (%p125) target = $region24
      $region23: #{resnet_forward.13} parent=5 // pred_region
        // Predicated region
        $region25: #{resnet_forward.13} parent=23 // pred_check
          %p128 = pneg %p50
        $region26: #{resnet_forward.13} parent=23 // pred_check_branch
          %130 = sbr.rel (%p128) target = $region28
        $region27: #{resnet_forward.13} parent=23 // pred_region
          %s131 = sand.u32 %s40, 1
          %s132 = sand.u32 %s40, 1
          %s133 = smul.addr %s132, 72
          %s134 = scalar_lea.vmem [#allocation2], %s133
          %s135 = smul.u32 2, %s9
          %s136 = smul.addr %s135, 4
          %s137 = scalar_lea.vmem %s1, %s136
          // Predicated region
          $region29: #{resnet_forward.13} parent=27 // pred_check
            _
          $region30: #{resnet_forward.13} parent=27 // pred_check_branch
            %139 = sbr.rel (0) target = $region32
          $region31: #{resnet_forward.13} parent=27 // pred_region
            // Predicated region
            $region33: #{resnet_forward.13} parent=31 // pred_check
              _
            $region34: #{resnet_forward.13} parent=31 // pred_check_branch
              %141 = sbr.rel (0) target = $region36
            $region35: #{resnet_forward.13} parent=31 // pred_region
              // Predicated region
              $region48: #{resnet_forward.13} parent=35 // pred_check
                _
              $region49: #{resnet_forward.13} parent=35 // pred_check_branch
                %172 = sbr.rel (0) target = $region51
              $region50: #{resnet_forward.13} parent=35 // pred_region
                loop: start=0, step=1, limit=1
                $region52: #{resnet_forward.13} parent=50 // loop_pre_header
                  _
                $region53: #{resnet_forward.13} parent=50 // loop_header
                  %s174 = sphi 0, %s178
                  %p175 = scmp.ge.s32.totalorder %s174, 1
                  %s179 = sphi %s137, %s137
                  %s180 = sphi %s134, %s134
                $region54: #{resnet_forward.13} parent=50 // loop_header_branch
                  %177 = sbr.rel (%p175) target = $region58
                $region55: #{resnet_forward.13} parent=50 // loop_body
                  %v181 = vld [vmem:[%s179] sm:$0xff]
                  %182 = vst [vmem:[%s180] sm:$0xff] %v181
                  %v183 = vld [vmem:[%s179 + $0x10] sm:$0xff]
                  %184 = vst [vmem:[%s180 + $0x8] sm:$0xff] %v183
                  %v185 = vld [vmem:[%s179 + $0x20] sm:$0xff]
                  %186 = vst [vmem:[%s180 + $0x10] sm:$0xff] %v185
                  %v187 = vld [vmem:[%s179 + $0x30] sm:$0xff]
                  %188 = vst [vmem:[%s180 + $0x18] sm:$0xff] %v187
                  %v189 = vld [vmem:[%s179 + $0x40] sm:$0xff]
                  %190 = vst [vmem:[%s180 + $0x20] sm:$0xff] %v189
                  %v191 = vld [vmem:[%s179 + $0x50] sm:$0xff]
                  %192 = vst [vmem:[%s180 + $0x28] sm:$0xff] %v191
                  %v193 = vld [vmem:[%s179 + $0x60] sm:$0xff]
                  %194 = vst [vmem:[%s180 + $0x30] sm:$0xff] %v193
                  %v195 = vld [vmem:[%s179 + $0x70] sm:$0xff]
                  %196 = vst [vmem:[%s180 + $0x38] sm:$0xff] %v195
                  %v197 = vld [vmem:[%s179 + $0x80] sm:$0xff]
                  %198 = vst [vmem:[%s180 + $0x40] sm:$0xff] %v197
                $region56: #{resnet_forward.13} parent=50 // loop_footer
                  %s178 = sadd.s32 1, %s174
                $region57: #{resnet_forward.13} parent=50 // loop_footer_branch
                  %173 = sbr.rel target = $region53
                $region58: #{resnet_forward.13} parent=50 // loop_exit
                  _
              $region51: #{resnet_forward.13} parent=35 // pred_fallthru
                _
              // Predicated region
              $region59: #{resnet_forward.13} parent=35 // pred_check
                _
              $region60: #{resnet_forward.13} parent=35 // pred_check_branch
                %200 = sbr.rel target = $region62
              $region61: #{resnet_forward.13} parent=35 // pred_region
                _
              $region62: #{resnet_forward.13} parent=35 // pred_fallthru
                _
            $region36: #{resnet_forward.13} parent=31 // pred_fallthru
              _
            // Predicated region
            $region37: #{resnet_forward.13} parent=31 // pred_check
              _
            $region38: #{resnet_forward.13} parent=31 // pred_check_branch
              %143 = sbr.rel target = $region40
            $region39: #{resnet_forward.13} parent=31 // pred_region
              loop: start=0, step=1, limit=1
              $region41: #{resnet_forward.13} parent=39 // loop_pre_header
                _
              $region42: #{resnet_forward.13} parent=39 // loop_header
                %s146 = sphi 0, %s150
                %p147 = scmp.ge.s32.totalorder %s146, 1
                %s151 = sphi %s137, %s137
                %s152 = sphi %s134, %s134
              $region43: #{resnet_forward.13} parent=39 // loop_header_branch
                %149 = sbr.rel (%p147) target = $region47
              $region44: #{resnet_forward.13} parent=39 // loop_body
                %v153 = vld [vmem:[%s151] sm:$0xff]
                %154 = vst [vmem:[%s152] sm:$0xff] %v153
                %v155 = vld [vmem:[%s151 + $0x10] sm:$0xff]
                %156 = vst [vmem:[%s152 + $0x8] sm:$0xff] %v155
                %v157 = vld [vmem:[%s151 + $0x20] sm:$0xff]
                %158 = vst [vmem:[%s152 + $0x10] sm:$0xff] %v157
                %v159 = vld [vmem:[%s151 + $0x30] sm:$0xff]
                %160 = vst [vmem:[%s152 + $0x18] sm:$0xff] %v159
                %v161 = vld [vmem:[%s151 + $0x40] sm:$0xff]
                %162 = vst [vmem:[%s152 + $0x20] sm:$0xff] %v161
                %v163 = vld [vmem:[%s151 + $0x50] sm:$0xff]
                %164 = vst [vmem:[%s152 + $0x28] sm:$0xff] %v163
                %v165 = vld [vmem:[%s151 + $0x60] sm:$0xff]
                %166 = vst [vmem:[%s152 + $0x30] sm:$0xff] %v165
                %v167 = vld [vmem:[%s151 + $0x70] sm:$0xff]
                %168 = vst [vmem:[%s152 + $0x38] sm:$0xff] %v167
                %v169 = vld [vmem:[%s151 + $0x80] sm:$0xff]
                %170 = vst [vmem:[%s152 + $0x40] sm:$0xff] %v169
              $region45: #{resnet_forward.13} parent=39 // loop_footer
                %s150 = sadd.s32 1, %s146
              $region46: #{resnet_forward.13} parent=39 // loop_footer_branch
                %145 = sbr.rel target = $region42
              $region47: #{resnet_forward.13} parent=39 // loop_exit
                _
            $region40: #{resnet_forward.13} parent=31 // pred_fallthru
              _
          $region32: #{resnet_forward.13} parent=27 // pred_fallthru
            _
          %201 = vnop
        $region28: #{resnet_forward.13} parent=23 // pred_fallthru
          _
      $region24: #{resnet_forward.13} parent=5 // pred_fallthru
        _
      %p202 = scmp.le.s32.totalorder 1, %s9
      %p203 = scmp.lt.s32.totalorder %s9, 3
      %p204 = pnand %p202, %p203
      %p205 = pneg %p204
      // Predicated region
      $region63: #{resnet_forward.13} parent=5 // pred_check
        _
      $region64: #{resnet_forward.13} parent=5 // pred_check_branch
        %207 = sbr.rel (%p204) target = $region66
      $region65: #{resnet_forward.13} parent=5 // pred_region
        %s208 = ssub.s32 %s9, 1
        %s209 = sand.u32 %s43, 1
        %s210 = sand.u32 %s43, 1
        %s211 = smul.addr %s210, 72
        %s212 = scalar_lea.vmem [#allocation2], %s211
        // Predicated region
        $region67: #{resnet_forward.13} parent=65 // pred_check
          %p213 = pneg %p56
        $region68: #{resnet_forward.13} parent=65 // pred_check_branch
          %215 = sbr.rel (%p213) target = $region70
        $region69: #{resnet_forward.13} parent=65 // pred_region
          _
        $region70: #{resnet_forward.13} parent=65 // pred_fallthru
          _
        %p216 = pneg %p30
        %p217 = pneg %p27
        %s218 = sand.u32 %s43, 1
        %s219 = sand.u32 %s43, 1
        %s220 = smul.addr %s219, 72
        %s221 = scalar_lea.vmem [#allocation2], %s220
        %p222 = pneg %p56
        %p223 = pneg %p53
        %p224 = pneg %p77
        %p225 = pneg %p74
        %p226 = pneg %p103
        %p227 = pneg %p100
        %s228 = sand.u32 %s90, 1
        %s229 = sand.u32 %s90, 1
        %s230 = smul.addr %s229, 16
        %s231 = scalar_lea.vmem [#allocation3], %s230
        %s232 = smul.u32 2, %s14
        %s233 = smul.u32 2, %s14
        %v235 = vld [vmem:[%s0] sm:$0xf]
        %v236 = vld [vmem:[%s0 + $0x4] sm:$0xf]
        %v237 = vld [vmem:[%s212] sm:$0xff]
        %v238 = vld [vmem:[%s212 + $0x8] sm:$0xff]
        %v239 = vld [vmem:[%s212 + $0x10] sm:$0xff]
        %v240 = vld [vmem:[%s212 + $0x18] sm:$0xff]
        %v241 = vld [vmem:[%s212 + $0x20] sm:$0xff]
        %v242 = vld [vmem:[%s212 + $0x28] sm:$0xff]
        %v243 = vld [vmem:[%s212 + $0x30] sm:$0xff]
        %v244 = vld [vmem:[%s212 + $0x38] sm:$0xff]
        %v245 = vld [vmem:[%s212 + $0x40] sm:$0xff]
        %v246 = vld [vmem:[%s2] sm:$0xff]
        %v247 = vld [vmem:[%s2 + $0x8] sm:$0xff]
        %249 = vset.pattern.permute.xlu0 0
        %250 = vperm.xlu0 %249, %v246
        %v251 = vpop.permute.xlu0 %250
        %254 = vset.pattern.permute.xlu0 0
        %255 = vperm.xlu0 %254, %v247
        %v256 = vpop.permute.xlu0 %255
        %v260 = vunpack.c.l.b16 %v235
        %v261 = vunpack.c.l.b16 %v236
        %v262 = vpack.c.b16 %v261, %v260
        %v272 = vunpack.c.l.b16 %v237
        %v273 = vunpack.c.h.b16 %v237
        %v274 = vunpack.c.l.b16 %v238
        %v275 = vunpack.c.h.b16 %v238
        %v276 = vunpack.c.l.b16 %v239
        %v277 = vunpack.c.h.b16 %v239
        %v278 = vunpack.c.l.b16 %v240
        %v279 = vunpack.c.h.b16 %v240
        %v280 = vunpack.c.l.b16 %v241
        %v281 = vunpack.c.h.b16 %v241
        %v282 = vunpack.c.l.b16 %v242
        %v283 = vunpack.c.h.b16 %v242
        %v284 = vunpack.c.l.b16 %v243
        %v285 = vunpack.c.h.b16 %v243
        %v286 = vunpack.c.l.b16 %v244
        %v287 = vunpack.c.h.b16 %v244
        %v288 = vunpack.c.l.b16 %v245
        %v289 = vunpack.c.h.b16 %v245
        %v290 = vpack.c.b16 %v274, %v272
        %v291 = vpack.c.b16 %v275, %v273
        %v292 = vpack.c.b16 %v278, %v276
        %v293 = vpack.c.b16 %v279, %v277
        %v294 = vpack.c.b16 %v282, %v280
        %v295 = vpack.c.b16 %v283, %v281
        %v296 = vpack.c.b16 %v286, %v284
        %v297 = vpack.c.b16 %v287, %v285
        %v298 = vpack.c.b16 %v288, %v288
        %v299 = vpack.c.b16 %v289, %v289
        %vm308 = vcmask 588800
        %v310 = vsel %vm308, %v262, 0
        %vm312 = vcmask 1043456
        %v314 = vsel %vm312, %v298, 0
        %v317 = vsel %vm312, %v299, 0
        %319 = vmatprep.subr.bf16.mxu0 %v291
        %320 = vmatpush1.bf16.msra.mxu0 %v290
        %321 = vmatprep.subr.bf16.mxu0 %v293
        %322 = vmatpush1.bf16.msra.mxu0 %v292
        %323 = vmatprep.subr.bf16.mxu0 %v295
        %324 = vmatpush1.bf16.msra.mxu0 %v294
        %325 = vmatprep.subr.bf16.mxu0 %v297
        %326 = vmatpush1.bf16.msra.mxu0 %v296
        %327 = vmatprep.subr.bf16.mxu0 %v317
        %328 = vmatpush1.bf16.msra.mxu0 %v314
        %329 = vmatprep.subr.bf16.mxu0 0
        %330 = vmatpush1.bf16.msra.mxu0 0
        %331 = vmatprep.subr.bf16.mxu0 0
        %332 = vmatpush1.bf16.msra.mxu0 0
        %333 = vmatprep.subr.bf16.mxu0 0
        %334 = vmatpush1.bf16.msra.mxu0 0
        %335 = vmatprep.subr.bf16.mxu0 0
        %336 = vmatpush1.bf16.msra.mxu0 0
        %337 = vmatprep.subr.bf16.mxu0 0
        %338 = vmatpush1.bf16.msra.mxu0 0
        %339 = vmatprep.subr.bf16.mxu0 0
        %340 = vmatpush1.bf16.msra.mxu0 0
        %341 = vmatprep.subr.bf16.mxu0 0
        %342 = vmatpush1.bf16.msra.mxu0 0
        %343 = vmatprep.subr.bf16.mxu0 0
        %344 = vmatpush1.bf16.msra.mxu0 0
        %345 = vmatprep.subr.bf16.mxu0 0
        %346 = vmatpush1.bf16.msra.mxu0 0
        %347 = vmatprep.subr.bf16.mxu0 0
        %348 = vmatpush1.bf16.msra.mxu0 0
        %349 = vmatprep.subr.bf16.mxu0 0
        %350 = vmatpush1.bf16.msra.mxu0 0
        %351 = vmatprep.mubr.bf16.mxu0 0
        %352 = vmatmul.mubr.bf16.gmra.mrb[0].mxu0 %v310
        %v353 = vpop.f32.mrb[0].mxu0
        %v354 = vadd.f32 %v251, %v353
        %v355 = vpop.f32.mrb[0].mxu0
        %v356 = vadd.f32 %v251, %v355
        %v357 = vpop.f32.mrb[0].mxu0
        %v358 = vadd.f32 %v256, %v357
        %v359 = vpop.f32.mrb[0].mxu0
        %v360 = vadd.f32 %v256, %v359
        %361 = vdwg.mxu0
        %v362 = vmax.f32 %v354, 0.0
        %v363 = vmax.f32 %v356, 0.0
        %v364 = vmax.f32 %v358, 0.0
        %v365 = vmax.f32 %v360, 0.0
        %v366 = vpack.c.bf16 %v364, %v362
        %v367 = vpack.c.bf16 %v365, %v363
        %v370 = vunpack.c.l.b16 %v366
        %v371 = vunpack.c.l.b16 %v367
        %v372 = vunpack.c.h.b16 %v366
        %v373 = vunpack.c.h.b16 %v367
        %v374 = vpack.c.b16 %v371, %v370
        %v375 = vpack.c.b16 %v373, %v372
        %378 = vst [vmem:[%s231] sm:$0xff] %v374
        %379 = vst [vmem:[%s231 + $0x8] sm:$0xff] %v375
        %s380 = sand.u32 %s90, 1
        %s381 = sand.u32 %s90, 1
        %s382 = smul.addr %s381, 16
        %s383 = scalar_lea.vmem [#allocation3], %s382
        // Predicated region
        $region71: #{resnet_forward.13} parent=65 // pred_check
          %p384 = pneg %p100
        $region72: #{resnet_forward.13} parent=65 // pred_check_branch
          %386 = sbr.rel (%p384) target = $region74
        $region73: #{resnet_forward.13} parent=65 // pred_region
          %s387 = smul.u32 2, %s14
          %s388 = smul.addr %s387, 4
          %s389 = scalar_lea.vmem %s3, %s388
          // Predicated region
          $region75: #{resnet_forward.13} parent=73 // pred_check
            _
          $region76: #{resnet_forward.13} parent=73 // pred_check_branch
            %391 = sbr.rel (0) target = $region78
          $region77: #{resnet_forward.13} parent=73 // pred_region
            // Predicated region
            $region79: #{resnet_forward.13} parent=77 // pred_check
              _
            $region80: #{resnet_forward.13} parent=77 // pred_check_branch
              %393 = sbr.rel (0) target = $region82
            $region81: #{resnet_forward.13} parent=77 // pred_region
              // Predicated region
              $region94: #{resnet_forward.13} parent=81 // pred_check
                _
              $region95: #{resnet_forward.13} parent=81 // pred_check_branch
                %410 = sbr.rel (0) target = $region97
              $region96: #{resnet_forward.13} parent=81 // pred_region
                loop: start=0, step=1, limit=1
                $region98: #{resnet_forward.13} parent=96 // loop_pre_header
                  _
                $region99: #{resnet_forward.13} parent=96 // loop_header
                  %s412 = sphi 0, %s416
                  %p413 = scmp.ge.s32.totalorder %s412, 1
                  %s417 = sphi %s383, %s383
                  %s418 = sphi %s389, %s389
                $region100: #{resnet_forward.13} parent=96 // loop_header_branch
                  %415 = sbr.rel (%p413) target = $region104
                $region101: #{resnet_forward.13} parent=96 // loop_body
                  %v419 = vld [vmem:[%s417] sm:$0xff]
                  %420 = vst [vmem:[%s418] sm:$0xff] %v419
                  %v421 = vld [vmem:[%s417 + $0x8] sm:$0xff]
                  %422 = vst [vmem:[%s418 + $0x10] sm:$0xff] %v421
                $region102: #{resnet_forward.13} parent=96 // loop_footer
                  %s416 = sadd.s32 1, %s412
                $region103: #{resnet_forward.13} parent=96 // loop_footer_branch
                  %411 = sbr.rel target = $region99
                $region104: #{resnet_forward.13} parent=96 // loop_exit
                  _
              $region97: #{resnet_forward.13} parent=81 // pred_fallthru
                _
              // Predicated region
              $region105: #{resnet_forward.13} parent=81 // pred_check
                _
              $region106: #{resnet_forward.13} parent=81 // pred_check_branch
                %424 = sbr.rel target = $region108
              $region107: #{resnet_forward.13} parent=81 // pred_region
                _
              $region108: #{resnet_forward.13} parent=81 // pred_fallthru
                _
            $region82: #{resnet_forward.13} parent=77 // pred_fallthru
              _
            // Predicated region
            $region83: #{resnet_forward.13} parent=77 // pred_check
              _
            $region84: #{resnet_forward.13} parent=77 // pred_check_branch
              %395 = sbr.rel target = $region86
            $region85: #{resnet_forward.13} parent=77 // pred_region
              loop: start=0, step=1, limit=1
              $region87: #{resnet_forward.13} parent=85 // loop_pre_header
                _
              $region88: #{resnet_forward.13} parent=85 // loop_header
                %s398 = sphi 0, %s402
                %p399 = scmp.ge.s32.totalorder %s398, 1
                %s403 = sphi %s383, %s383
                %s404 = sphi %s389, %s389
              $region89: #{resnet_forward.13} parent=85 // loop_header_branch
                %401 = sbr.rel (%p399) target = $region93
              $region90: #{resnet_forward.13} parent=85 // loop_body
                %v405 = vld [vmem:[%s403] sm:$0xff]
                %406 = vst [vmem:[%s404] sm:$0xff] %v405
                %v407 = vld [vmem:[%s403 + $0x8] sm:$0xff]
                %408 = vst [vmem:[%s404 + $0x10] sm:$0xff] %v407
              $region91: #{resnet_forward.13} parent=85 // loop_footer
                %s402 = sadd.s32 1, %s398
              $region92: #{resnet_forward.13} parent=85 // loop_footer_branch
                %397 = sbr.rel target = $region88
              $region93: #{resnet_forward.13} parent=85 // loop_exit
                _
            $region86: #{resnet_forward.13} parent=77 // pred_fallthru
              _
          $region78: #{resnet_forward.13} parent=73 // pred_fallthru
            _
          %425 = vnop
        $region74: #{resnet_forward.13} parent=65 // pred_fallthru
          _
      $region66: #{resnet_forward.13} parent=5 // pred_fallthru
        _
      %p426 = scmp.le.s32.totalorder 2, %s9
      // Predicated region
      $region109: #{resnet_forward.13} parent=5 // pred_check
        %p427 = pneg %p426
      $region110: #{resnet_forward.13} parent=5 // pred_check_branch
        %429 = sbr.rel (%p427) target = $region112
      $region111: #{resnet_forward.13} parent=5 // pred_region
        %s430 = ssub.s32 %s9, 2
        // Predicated region
        $region113: #{resnet_forward.13} parent=111 // pred_check
          %p431 = pneg %p106
        $region114: #{resnet_forward.13} parent=111 // pred_check_branch
          %433 = sbr.rel (%p431) target = $region116
        $region115: #{resnet_forward.13} parent=111 // pred_region
          %s434 = sand.u32 %s91, 1
          %s435 = sand.u32 %s91, 1
          %s436 = smul.addr %s435, 16
          %s437 = scalar_lea.vmem [#allocation3], %s436
        $region116: #{resnet_forward.13} parent=111 // pred_fallthru
          _
      $region112: #{resnet_forward.13} parent=5 // pred_fallthru
        _
    $region6: #{resnet_forward.13} parent=1 // loop_footer
      %s13 = sadd.s32 1, %s9
    $region7: #{resnet_forward.13} parent=1 // loop_footer_branch
      %8 = sbr.rel target = $region3
    $region8: #{resnet_forward.13} parent=1 // loop_exit
      _

// kernel: resnet_forward.14
$region0: #{resnet_forward.14}
  #allocation0 [shape = 'u32[]', space=smem, size = 0x4, offset = 0x4, fixed_abs, tag = 'smem constant byte address 0x4 - core index']
  #allocation1 [shape = 'u32[144,128]{1,0:T(1,128)}', space=vmem, size = 0x12000, scoped, tag = 'internal scratch']
  %s0 = inlined_call_operand.vmem [shape: bf16[16,144], index: 0, kind: input, shape index: {}]
  %s1 = inlined_call_operand.vmem [shape: bf16[144,512], index: 1, kind: input, shape index: {}]
  %s2 = inlined_call_operand.vmem [shape: f32[16,1], index: 2, kind: input, shape index: {}]
  %s3 = inlined_call_operand.vmem [shape: bf16[16,8], index: 3, kind: input, shape index: {}]
  %s4 = inlined_call_operand.vmem [shape: bf16[8,512], index: 4, kind: input, shape index: {}]
  %s5 = inlined_call_operand.vmem [shape: bf16[16,512], index: 5, kind: output, shape index: {}]
  %s6 = sld [smem:[#allocation0]]
  $region125: #{resnet_forward.14} parent=0
    _
  %s8 = ssub.s32 1, %s6
  %s9 = scalar_select 0, %s8, %s6
  $region1: #{resnet_forward.14} parent=0
    #allocation2 [shape = 'u8[147456]{0}', space=vmem, size = 0x24000, scoped, tag = 'input window, operand 1']
    #allocation3 [shape = 'u8[16384]{0}', space=vmem, size = 0x4000, scoped, tag = 'output window, operand 0']
    loop: start=0, step=1, limit=4
    $region2: #{resnet_forward.14} parent=1 // loop_pre_header
      _
    $region3: #{resnet_forward.14} parent=1 // loop_header
      %s11 = sphi 0, %s15
      %p12 = scmp.ge.s32.totalorder %s11, 4
      %s19 = sphi 0, %s19
      %s21 = sphi 0, %s19
      %s22 = sphi 0, %s21
      %s36 = sphi 0, %s22
      %s42 = sphi 0, %s44
      %s45 = sphi 0, %s42
      %s46 = sphi 0, %s45
      %s62 = sphi 0, %s46
      %s66 = sphi 0, %s66
      %s68 = sphi 0, %s66
      %s69 = sphi 0, %s68
      %s83 = sphi 0, %s69
      %s87 = sphi 0, %s87
      %s89 = sphi 0, %s87
      %s90 = sphi 0, %s89
      %s104 = sphi 0, %s90
      %s110 = sphi 0, %s112
      %s113 = sphi 0, %s110
      %s114 = sphi 0, %s113
      %s130 = sphi 0, %s114
      %s136 = sphi 0, %s138
      %s139 = sphi 0, %s136
      %s140 = sphi 0, %s139
      %s156 = sphi 0, %s140
    $region4: #{resnet_forward.14} parent=1 // loop_header_branch
      %14 = sbr.rel (%p12) target = $region8
    $region5: #{resnet_forward.14} parent=1 // loop_body
      %s16 = ssub.s32 %s11, 1
      %s17 = ssub.s32 %s11, 2
      %s18 = sadd.s32 %s11, 1
      %s20 = sadd.s32 %s19, 1
      %p23 = scmp.eq.s32.totalorder %s11, 1
      %p24 = scmp.ne.s32.totalorder %s19, %s21
      %p25 = scmp.eq.s32.totalorder %s11, 0
      %p26 = por %p24, %p25
      %p27 = scmp.ne.s32.totalorder %s19, %s21
      %p28 = scmp.eq.s32.totalorder %s16, 1
      %p29 = por %p27, %p28
      %p30 = scmp.ne.s32.totalorder %s21, %s22
      %p31 = scmp.eq.s32.totalorder %s16, 0
      %p32 = por %p30, %p31
      %p33 = scmp.ne.s32.totalorder %s21, %s22
      %p34 = scmp.eq.s32.totalorder %s17, 1
      %p35 = por %p33, %p34
      %p37 = scmp.ne.s32.totalorder %s22, %s36
      %p38 = scmp.eq.s32.totalorder %s17, 0
      %p39 = por %p37, %p38
      %s40 = ssub.s32 %s11, %s18
      %p41 = scmp.eq.s32.totalorder %s40, 0
      %s43 = sadd.s32 %s42, 1
      %s44 = scalar_select %p41, %s42, %s43
      %p47 = pneg %p41
      %p48 = scmp.eq.s32.totalorder %s11, 1
      %p49 = por %p47, %p48
      %p50 = scmp.ne.s32.totalorder %s42, %s45
      %p51 = scmp.eq.s32.totalorder %s11, 0
      %p52 = por %p50, %p51
      %p53 = scmp.ne.s32.totalorder %s42, %s45
      %p54 = scmp.eq.s32.totalorder %s16, 1
      %p55 = por %p53, %p54
      %p56 = scmp.ne.s32.totalorder %s45, %s46
      %p57 = scmp.eq.s32.totalorder %s16, 0
      %p58 = por %p56, %p57
      %p59 = scmp.ne.s32.totalorder %s45, %s46
      %p60 = scmp.eq.s32.totalorder %s17, 1
      %p61 = por %p59, %p60
      %p63 = scmp.ne.s32.totalorder %s46, %s62
      %p64 = scmp.eq.s32.totalorder %s17, 0
      %p65 = por %p63, %p64
      %s67 = sadd.s32 %s66, 1
      %p70 = scmp.eq.s32.totalorder %s11, 1
      %p71 = scmp.ne.s32.totalorder %s66, %s68
      %p72 = scmp.eq.s32.totalorder %s11, 0
      %p73 = por %p71, %p72
      %p74 = scmp.ne.s32.totalorder %s66, %s68
      %p75 = scmp.eq.s32.totalorder %s16, 1
      %p76 = por %p74, %p75
      %p77 = scmp.ne.s32.totalorder %s68, %s69
      %p78 = scmp.eq.s32.totalorder %s16, 0
      %p79 = por %p77, %p78
      %p80 = scmp.ne.s32.totalorder %s68, %s69
      %p81 = scmp.eq.s32.totalorder %s17, 1
      %p82 = por %p80, %p81
      %p84 = scmp.ne.s32.totalorder %s69, %s83
      %p85 = scmp.eq.s32.totalorder %s17, 0
      %p86 = por %p84, %p85
      %s88 = sadd.s32 %s87, 1
      %p91 = scmp.eq.s32.totalorder %s11, 1
      %p92 = scmp.ne.s32.totalorder %s87, %s89
      %p93 = scmp.eq.s32.totalorder %s11, 0
      %p94 = por %p92, %p93
      %p95 = scmp.ne.s32.totalorder %s87, %s89
      %p96 = scmp.eq.s32.totalorder %s16, 1
      %p97 = por %p95, %p96
      %p98 = scmp.ne.s32.totalorder %s89, %s90
      %p99 = scmp.eq.s32.totalorder %s16, 0
      %p100 = por %p98, %p99
      %p101 = scmp.ne.s32.totalorder %s89, %s90
      %p102 = scmp.eq.s32.totalorder %s17, 1
      %p103 = por %p101, %p102
      %p105 = scmp.ne.s32.totalorder %s90, %s104
      %p106 = scmp.eq.s32.totalorder %s17, 0
      %p107 = por %p105, %p106
      %s108 = ssub.s32 %s11, %s18
      %p109 = scmp.eq.s32.totalorder %s108, 0
      %s111 = sadd.s32 %s110, 1
      %s112 = scalar_select %p109, %s110, %s111
      %p115 = pneg %p109
      %p116 = scmp.eq.s32.totalorder %s11, 1
      %p117 = por %p115, %p116
      %p118 = scmp.ne.s32.totalorder %s110, %s113
      %p119 = scmp.eq.s32.totalorder %s11, 0
      %p120 = por %p118, %p119
      %p121 = scmp.ne.s32.totalorder %s110, %s113
      %p122 = scmp.eq.s32.totalorder %s16, 1
      %p123 = por %p121, %p122
      %p124 = scmp.ne.s32.totalorder %s113, %s114
      %p125 = scmp.eq.s32.totalorder %s16, 0
      %p126 = por %p124, %p125
      %p127 = scmp.ne.s32.totalorder %s113, %s114
      %p128 = scmp.eq.s32.totalorder %s17, 1
      %p129 = por %p127, %p128
      %p131 = scmp.ne.s32.totalorder %s114, %s130
      %p132 = scmp.eq.s32.totalorder %s17, 0
      %p133 = por %p131, %p132
      %s134 = ssub.s32 %s11, %s18
      %p135 = scmp.eq.s32.totalorder %s134, 0
      %s137 = sadd.s32 %s136, 1
      %s138 = scalar_select %p135, %s136, %s137
      %p141 = pneg %p135
      %p142 = scmp.eq.s32.totalorder %s11, 1
      %p143 = por %p141, %p142
      %p144 = scmp.ne.s32.totalorder %s136, %s139
      %p145 = scmp.eq.s32.totalorder %s11, 0
      %p146 = por %p144, %p145
      %p147 = scmp.ne.s32.totalorder %s136, %s139
      %p148 = scmp.eq.s32.totalorder %s16, 1
      %p149 = por %p147, %p148
      %p150 = scmp.ne.s32.totalorder %s139, %s140
      %p151 = scmp.eq.s32.totalorder %s16, 0
      %p152 = por %p150, %p151
      %p153 = scmp.ne.s32.totalorder %s139, %s140
      %p154 = scmp.eq.s32.totalorder %s17, 1
      %p155 = por %p153, %p154
      %p157 = scmp.ne.s32.totalorder %s140, %s156
      %p158 = scmp.eq.s32.totalorder %s17, 0
      %p159 = por %p157, %p158
      %p160 = scmp.le.s32.totalorder 1, %s11
      %p161 = scmp.lt.s32.totalorder %s11, 3
      %p162 = pnand %p160, %p161
      %p163 = pneg %p162
      // Predicated region
      $region9: #{resnet_forward.14} parent=5 // pred_check
        _
      $region10: #{resnet_forward.14} parent=5 // pred_check_branch
        %165 = sbr.rel (%p162) target = $region12
      $region11: #{resnet_forward.14} parent=5 // pred_region
        %s166 = ssub.s32 %s11, 1
        // Predicated region
        $region13: #{resnet_forward.14} parent=11 // pred_check
          %p167 = pneg %p32
        $region14: #{resnet_forward.14} parent=11 // pred_check_branch
          %169 = sbr.rel (%p167) target = $region16
        $region15: #{resnet_forward.14} parent=11 // pred_region
          _
        $region16: #{resnet_forward.14} parent=11 // pred_fallthru
          _
        // Predicated region
        $region17: #{resnet_forward.14} parent=11 // pred_check
          %p170 = pneg %p79
        $region18: #{resnet_forward.14} parent=11 // pred_check_branch
          %172 = sbr.rel (%p170) target = $region20
        $region19: #{resnet_forward.14} parent=11 // pred_region
          _
        $region20: #{resnet_forward.14} parent=11 // pred_fallthru
          _
        // Predicated region
        $region21: #{resnet_forward.14} parent=11 // pred_check
          %p173 = pneg %p100
        $region22: #{resnet_forward.14} parent=11 // pred_check_branch
          %175 = sbr.rel (%p173) target = $region24
        $region23: #{resnet_forward.14} parent=11 // pred_region
          _
        $region24: #{resnet_forward.14} parent=11 // pred_fallthru
          _
      $region12: #{resnet_forward.14} parent=5 // pred_fallthru
        _
      %p176 = scmp.lt.s32.totalorder %s11, 2
      // Predicated region
      $region25: #{resnet_forward.14} parent=5 // pred_check
        %p177 = pneg %p176
      $region26: #{resnet_forward.14} parent=5 // pred_check_branch
        %179 = sbr.rel (%p177) target = $region28
      $region27: #{resnet_forward.14} parent=5 // pred_region
        // Predicated region
        $region29: #{resnet_forward.14} parent=27 // pred_check
          %p180 = pneg %p52
        $region30: #{resnet_forward.14} parent=27 // pred_check_branch
          %182 = sbr.rel (%p180) target = $region32
        $region31: #{resnet_forward.14} parent=27 // pred_region
          %s183 = sand.u32 %s42, 1
          %s184 = sand.u32 %s42, 1
          %s185 = smul.addr %s184, 144
          %s186 = scalar_lea.vmem [#allocation2], %s185
          %s187 = smul.u32 2, %s11
          %s188 = smul.addr %s187, 4
          %s189 = scalar_lea.vmem %s1, %s188
          // Predicated region
          $region33: #{resnet_forward.14} parent=31 // pred_check
            _
          $region34: #{resnet_forward.14} parent=31 // pred_check_branch
            %191 = sbr.rel (0) target = $region36
          $region35: #{resnet_forward.14} parent=31 // pred_region
            // Predicated region
            $region37: #{resnet_forward.14} parent=35 // pred_check
              _
            $region38: #{resnet_forward.14} parent=35 // pred_check_branch
              %193 = sbr.rel (0) target = $region40
            $region39: #{resnet_forward.14} parent=35 // pred_region
              // Predicated region
              $region52: #{resnet_forward.14} parent=39 // pred_check
                _
              $region53: #{resnet_forward.14} parent=39 // pred_check_branch
                %242 = sbr.rel (0) target = $region55
              $region54: #{resnet_forward.14} parent=39 // pred_region
                loop: start=0, step=1, limit=1
                $region56: #{resnet_forward.14} parent=54 // loop_pre_header
                  _
                $region57: #{resnet_forward.14} parent=54 // loop_header
                  %s244 = sphi 0, %s248
                  %p245 = scmp.ge.s32.totalorder %s244, 1
                  %s249 = sphi %s189, %s189
                  %s250 = sphi %s186, %s186
                $region58: #{resnet_forward.14} parent=54 // loop_header_branch
                  %247 = sbr.rel (%p245) target = $region62
                $region59: #{resnet_forward.14} parent=54 // loop_body
                  %v251 = vld [vmem:[%s249] sm:$0xff]
                  %252 = vst [vmem:[%s250] sm:$0xff] %v251
                  %v253 = vld [vmem:[%s249 + $0x10] sm:$0xff]
                  %254 = vst [vmem:[%s250 + $0x8] sm:$0xff] %v253
                  %v255 = vld [vmem:[%s249 + $0x20] sm:$0xff]
                  %256 = vst [vmem:[%s250 + $0x10] sm:$0xff] %v255
                  %v257 = vld [vmem:[%s249 + $0x30] sm:$0xff]
                  %258 = vst [vmem:[%s250 + $0x18] sm:$0xff] %v257
                  %v259 = vld [vmem:[%s249 + $0x40] sm:$0xff]
                  %260 = vst [vmem:[%s250 + $0x20] sm:$0xff] %v259
                  %v261 = vld [vmem:[%s249 + $0x50] sm:$0xff]
                  %262 = vst [vmem:[%s250 + $0x28] sm:$0xff] %v261
                  %v263 = vld [vmem:[%s249 + $0x60] sm:$0xff]
                  %264 = vst [vmem:[%s250 + $0x30] sm:$0xff] %v263
                  %v265 = vld [vmem:[%s249 + $0x70] sm:$0xff]
                  %266 = vst [vmem:[%s250 + $0x38] sm:$0xff] %v265
                  %v267 = vld [vmem:[%s249 + $0x80] sm:$0xff]
                  %268 = vst [vmem:[%s250 + $0x40] sm:$0xff] %v267
                  %v269 = vld [vmem:[%s249 + $0x90] sm:$0xff]
                  %270 = vst [vmem:[%s250 + $0x48] sm:$0xff] %v269
                  %v271 = vld [vmem:[%s249 + $0xa0] sm:$0xff]
                  %272 = vst [vmem:[%s250 + $0x50] sm:$0xff] %v271
                  %v273 = vld [vmem:[%s249 + $0xb0] sm:$0xff]
                  %274 = vst [vmem:[%s250 + $0x58] sm:$0xff] %v273
                  %v275 = vld [vmem:[%s249 + $0xc0] sm:$0xff]
                  %276 = vst [vmem:[%s250 + $0x60] sm:$0xff] %v275
                  %v277 = vld [vmem:[%s249 + $0xd0] sm:$0xff]
                  %278 = vst [vmem:[%s250 + $0x68] sm:$0xff] %v277
                  %v279 = vld [vmem:[%s249 + $0xe0] sm:$0xff]
                  %280 = vst [vmem:[%s250 + $0x70] sm:$0xff] %v279
                  %v281 = vld [vmem:[%s249 + $0xf0] sm:$0xff]
                  %282 = vst [vmem:[%s250 + $0x78] sm:$0xff] %v281
                  %v283 = vld [vmem:[%s249 + $0x100] sm:$0xff]
                  %284 = vst [vmem:[%s250 + $0x80] sm:$0xff] %v283
                  %v285 = vld [vmem:[%s249 + $0x110] sm:$0xff]
                  %286 = vst [vmem:[%s250 + $0x88] sm:$0xff] %v285
                $region60: #{resnet_forward.14} parent=54 // loop_footer
                  %s248 = sadd.s32 1, %s244
                $region61: #{resnet_forward.14} parent=54 // loop_footer_branch
                  %243 = sbr.rel target = $region57
                $region62: #{resnet_forward.14} parent=54 // loop_exit
                  _
              $region55: #{resnet_forward.14} parent=39 // pred_fallthru
                _
              // Predicated region
              $region63: #{resnet_forward.14} parent=39 // pred_check
                _
              $region64: #{resnet_forward.14} parent=39 // pred_check_branch
                %288 = sbr.rel target = $region66
              $region65: #{resnet_forward.14} parent=39 // pred_region
                _
              $region66: #{resnet_forward.14} parent=39 // pred_fallthru
                _
            $region40: #{resnet_forward.14} parent=35 // pred_fallthru
              _
            // Predicated region
            $region41: #{resnet_forward.14} parent=35 // pred_check
              _
            $region42: #{resnet_forward.14} parent=35 // pred_check_branch
              %195 = sbr.rel target = $region44
            $region43: #{resnet_forward.14} parent=35 // pred_region
              loop: start=0, step=1, limit=1
              $region45: #{resnet_forward.14} parent=43 // loop_pre_header
                _
              $region46: #{resnet_forward.14} parent=43 // loop_header
                %s198 = sphi 0, %s202
                %p199 = scmp.ge.s32.totalorder %s198, 1
                %s203 = sphi %s189, %s189
                %s204 = sphi %s186, %s186
              $region47: #{resnet_forward.14} parent=43 // loop_header_branch
                %201 = sbr.rel (%p199) target = $region51
              $region48: #{resnet_forward.14} parent=43 // loop_body
                %v205 = vld [vmem:[%s203] sm:$0xff]
                %206 = vst [vmem:[%s204] sm:$0xff] %v205
                %v207 = vld [vmem:[%s203 + $0x10] sm:$0xff]
                %208 = vst [vmem:[%s204 + $0x8] sm:$0xff] %v207
                %v209 = vld [vmem:[%s203 + $0x20] sm:$0xff]
                %210 = vst [vmem:[%s204 + $0x10] sm:$0xff] %v209
                %v211 = vld [vmem:[%s203 + $0x30] sm:$0xff]
                %212 = vst [vmem:[%s204 + $0x18] sm:$0xff] %v211
                %v213 = vld [vmem:[%s203 + $0x40] sm:$0xff]
                %214 = vst [vmem:[%s204 + $0x20] sm:$0xff] %v213
                %v215 = vld [vmem:[%s203 + $0x50] sm:$0xff]
                %216 = vst [vmem:[%s204 + $0x28] sm:$0xff] %v215
                %v217 = vld [vmem:[%s203 + $0x60] sm:$0xff]
                %218 = vst [vmem:[%s204 + $0x30] sm:$0xff] %v217
                %v219 = vld [vmem:[%s203 + $0x70] sm:$0xff]
                %220 = vst [vmem:[%s204 + $0x38] sm:$0xff] %v219
                %v221 = vld [vmem:[%s203 + $0x80] sm:$0xff]
                %222 = vst [vmem:[%s204 + $0x40] sm:$0xff] %v221
                %v223 = vld [vmem:[%s203 + $0x90] sm:$0xff]
                %224 = vst [vmem:[%s204 + $0x48] sm:$0xff] %v223
                %v225 = vld [vmem:[%s203 + $0xa0] sm:$0xff]
                %226 = vst [vmem:[%s204 + $0x50] sm:$0xff] %v225
                %v227 = vld [vmem:[%s203 + $0xb0] sm:$0xff]
                %228 = vst [vmem:[%s204 + $0x58] sm:$0xff] %v227
                %v229 = vld [vmem:[%s203 + $0xc0] sm:$0xff]
                %230 = vst [vmem:[%s204 + $0x60] sm:$0xff] %v229
                %v231 = vld [vmem:[%s203 + $0xd0] sm:$0xff]
                %232 = vst [vmem:[%s204 + $0x68] sm:$0xff] %v231
                %v233 = vld [vmem:[%s203 + $0xe0] sm:$0xff]
                %234 = vst [vmem:[%s204 + $0x70] sm:$0xff] %v233
                %v235 = vld [vmem:[%s203 + $0xf0] sm:$0xff]
                %236 = vst [vmem:[%s204 + $0x78] sm:$0xff] %v235
                %v237 = vld [vmem:[%s203 + $0x100] sm:$0xff]
                %238 = vst [vmem:[%s204 + $0x80] sm:$0xff] %v237
                %v239 = vld [vmem:[%s203 + $0x110] sm:$0xff]
                %240 = vst [vmem:[%s204 + $0x88] sm:$0xff] %v239
              $region49: #{resnet_forward.14} parent=43 // loop_footer
                %s202 = sadd.s32 1, %s198
              $region50: #{resnet_forward.14} parent=43 // loop_footer_branch
                %197 = sbr.rel target = $region46
              $region51: #{resnet_forward.14} parent=43 // loop_exit
                _
            $region44: #{resnet_forward.14} parent=35 // pred_fallthru
              _
          $region36: #{resnet_forward.14} parent=31 // pred_fallthru
            _
          %289 = vnop
        $region32: #{resnet_forward.14} parent=27 // pred_fallthru
          _
        // Predicated region
        $region67: #{resnet_forward.14} parent=27 // pred_check
          %p290 = pneg %p120
        $region68: #{resnet_forward.14} parent=27 // pred_check_branch
          %292 = sbr.rel (%p290) target = $region70
        $region69: #{resnet_forward.14} parent=27 // pred_region
          %s293 = smul.u32 2, %s11
          %p294 = scmp.lt.s32.totalorder %s293, 3
          %s295 = scalar_select %p294, %s293, 3
          %s296 = smul.addr %s295, 4
          %s297 = scalar_lea.vmem %s4, %s296
          %s298 = smul.u32 2, %s11
        $region70: #{resnet_forward.14} parent=27 // pred_fallthru
          _
      $region28: #{resnet_forward.14} parent=5 // pred_fallthru
        _
      %p299 = scmp.le.s32.totalorder 1, %s11
      %p300 = scmp.lt.s32.totalorder %s11, 3
      %p301 = pnand %p299, %p300
      %p302 = pneg %p301
      // Predicated region
      $region71: #{resnet_forward.14} parent=5 // pred_check
        _
      $region72: #{resnet_forward.14} parent=5 // pred_check_branch
        %304 = sbr.rel (%p301) target = $region74
      $region73: #{resnet_forward.14} parent=5 // pred_region
        %s305 = ssub.s32 %s11, 1
        %s306 = sand.u32 %s45, 1
        %s307 = sand.u32 %s45, 1
        %s308 = smul.addr %s307, 144
        %s309 = scalar_lea.vmem [#allocation2], %s308
        // Predicated region
        $region75: #{resnet_forward.14} parent=73 // pred_check
          %p310 = pneg %p58
        $region76: #{resnet_forward.14} parent=73 // pred_check_branch
          %312 = sbr.rel (%p310) target = $region78
        $region77: #{resnet_forward.14} parent=73 // pred_region
          _
        $region78: #{resnet_forward.14} parent=73 // pred_fallthru
          _
        %p313 = pneg %p32
        %p314 = pneg %p29
        %s315 = sand.u32 %s45, 1
        %s316 = sand.u32 %s45, 1
        %s317 = smul.addr %s316, 144
        %s318 = scalar_lea.vmem [#allocation2], %s317
        %p319 = pneg %p58
        %p320 = pneg %p55
        %p321 = pneg %p79
        %p322 = pneg %p76
        %p323 = pneg %p100
        %p324 = pneg %p97
        %s325 = smul.u32 2, %s16
        %p326 = scmp.lt.s32.totalorder %s325, 3
        %s327 = scalar_select %p326, %s325, 3
        %s328 = smul.addr %s327, 4
        %s329 = scalar_lea.vmem %s4, %s328
        %p330 = pneg %p126
        %p331 = pneg %p123
        %p332 = pneg %p152
        %p333 = pneg %p149
        %s334 = sand.u32 %s139, 1
        %s335 = sand.u32 %s139, 1
        %s336 = smul.addr %s335, 16
        %s337 = scalar_lea.vmem [#allocation3], %s336
        %s338 = smul.u32 2, %s16
        %s339 = smul.u32 2, %s16
        %p340 = scmp.lt.s32.totalorder %s339, 3
        %s341 = scalar_select %p340, %s339, 3
        %s342 = smul.addr %s341, 4
        %s343 = scalar_lea.vmem %s4, %s342
        %s344 = smul.u32 2, %s16
        %s345 = smul.u32 2, %s16
        %v347 = vld [vmem:[%s0] sm:$0xff]
        %v348 = vld [vmem:[%s0 + $0x8] sm:$0xff]
        %v349 = vld [vmem:[%s309] sm:$0xff]
        %v350 = vld [vmem:[%s309 + $0x8] sm:$0xff]
        %v351 = vld [vmem:[%s309 + $0x10] sm:$0xff]
        %v352 = vld [vmem:[%s309 + $0x18] sm:$0xff]
        %v353 = vld [vmem:[%s309 + $0x20] sm:$0xff]
        %v354 = vld [vmem:[%s309 + $0x28] sm:$0xff]
        %v355 = vld [vmem:[%s309 + $0x30] sm:$0xff]
        %v356 = vld [vmem:[%s309 + $0x38] sm:$0xff]
        %v357 = vld [vmem:[%s309 + $0x40] sm:$0xff]
        %v358 = vld [vmem:[%s309 + $0x48] sm:$0xff]
        %v359 = vld [vmem:[%s309 + $0x50] sm:$0xff]
        %v360 = vld [vmem:[%s309 + $0x58] sm:$0xff]
        %v361 = vld [vmem:[%s309 + $0x60] sm:$0xff]
        %v362 = vld [vmem:[%s309 + $0x68] sm:$0xff]
        %v363 = vld [vmem:[%s309 + $0x70] sm:$0xff]
        %v364 = vld [vmem:[%s309 + $0x78] sm:$0xff]
        %v365 = vld [vmem:[%s309 + $0x80] sm:$0xff]
        %v366 = vld [vmem:[%s309 + $0x88] sm:$0xff]
        %v367 = vld [vmem:[%s3] sm:$0xf]
        %v368 = vld [vmem:[%s3 + $0x4] sm:$0xf]
        %v369 = vld [vmem:[%s343] sm:$0xff]
        %v372 = vunpack.c.l.b16 %v367
        %v373 = vunpack.c.l.b16 %v368
        %v374 = vpack.c.b16 %v373, %v372
        %v376 = vunpack.c.l.b16 %v369
        %v377 = vunpack.c.h.b16 %v369
        %v378 = vpack.c.b16 %v376, %v376
        %v379 = vpack.c.b16 %v377, %v377
        %vm380 = vcmask 64512
        %v382 = vsel %vm380, %v374, 0
        %vm384 = vcmask 1043456
        %v386 = vsel %vm384, %v378, 0
        %v389 = vsel %vm384, %v379, 0
        %391 = vmatprep.subr.bf16.mxu0 %v389
        %392 = vmatpush1.bf16.msra.mxu0 %v386
        %393 = vmatprep.subr.bf16.mxu0 0
        %394 = vmatpush1.bf16.msra.mxu0 0
        %395 = vmatprep.subr.bf16.mxu0 0
        %396 = vmatpush1.bf16.msra.mxu0 0
        %397 = vmatprep.subr.bf16.mxu0 0
        %398 = vmatpush1.bf16.msra.mxu0 0
        %399 = vmatprep.subr.bf16.mxu0 0
        %400 = vmatpush1.bf16.msra.mxu0 0
        %401 = vmatprep.subr.bf16.mxu0 0
        %402 = vmatpush1.bf16.msra.mxu0 0
        %403 = vmatprep.subr.bf16.mxu0 0
        %404 = vmatpush1.bf16.msra.mxu0 0
        %405 = vmatprep.subr.bf16.mxu0 0
        %406 = vmatpush1.bf16.msra.mxu0 0
        %407 = vmatprep.subr.bf16.mxu0 0
        %408 = vmatpush1.bf16.msra.mxu0 0
        %409 = vmatprep.subr.bf16.mxu0 0
        %410 = vmatpush1.bf16.msra.mxu0 0
        %411 = vmatprep.subr.bf16.mxu0 0
        %412 = vmatpush1.bf16.msra.mxu0 0
        %413 = vmatprep.subr.bf16.mxu0 0
        %414 = vmatpush1.bf16.msra.mxu0 0
        %415 = vmatprep.subr.bf16.mxu0 0
        %416 = vmatpush1.bf16.msra.mxu0 0
        %417 = vmatprep.subr.bf16.mxu0 0
        %418 = vmatpush1.bf16.msra.mxu0 0
        %419 = vmatprep.subr.bf16.mxu0 0
        %420 = vmatpush1.bf16.msra.mxu0 0
        %421 = vmatprep.subr.bf16.mxu0 0
        %422 = vmatpush1.bf16.msra.mxu0 0
        %423 = vmatprep.mubr.bf16.mxu0 0
        %424 = vmatmul.mubr.bf16.gmra.mrb[0].mxu0 %v382
        %v425 = vpop.f32.mrb[0].mxu0
        %v426 = vadd.f32 0.0, %v425
        %v427 = vpop.f32.mrb[0].mxu0
        %v428 = vadd.f32 0.0, %v427
        %v429 = vpop.f32.mrb[0].mxu0
        %v430 = vadd.f32 0.0, %v429
        %v431 = vpop.f32.mrb[0].mxu0
        %v432 = vadd.f32 0.0, %v431
        %433 = vdwg.mxu0
        %v436 = vunpack.c.l.b16 %v347
        %v437 = vunpack.c.h.b16 %v347
        %v438 = vunpack.c.l.b16 %v348
        %v439 = vunpack.c.h.b16 %v348
        %v440 = vpack.c.b16 %v438, %v436
        %v441 = vpack.c.b16 %v439, %v437
        %v461 = vunpack.c.l.b16 %v349
        %v462 = vunpack.c.h.b16 %v349
        %v463 = vunpack.c.l.b16 %v350
        %v464 = vunpack.c.h.b16 %v350
        %v465 = vunpack.c.l.b16 %v351
        %v466 = vunpack.c.h.b16 %v351
        %v467 = vunpack.c.l.b16 %v352
        %v468 = vunpack.c.h.b16 %v352
        %v469 = vunpack.c.l.b16 %v353
        %v470 = vunpack.c.h.b16 %v353
        %v471 = vunpack.c.l.b16 %v354
        %v472 = vunpack.c.h.b16 %v354
        %v473 = vunpack.c.l.b16 %v355
        %v474 = vunpack.c.h.b16 %v355
        %v475 = vunpack.c.l.b16 %v356
        %v476 = vunpack.c.h.b16 %v356
        %v477 = vunpack.c.l.b16 %v357
        %v478 = vunpack.c.h.b16 %v357
        %v479 = vunpack.c.l.b16 %v358
        %v480 = vunpack.c.h.b16 %v358
        %v481 = vunpack.c.l.b16 %v359
        %v482 = vunpack.c.h.b16 %v359
        %v483 = vunpack.c.l.b16 %v360
        %v484 = vunpack.c.h.b16 %v360
        %v485 = vunpack.c.l.b16 %v361
        %v486 = vunpack.c.h.b16 %v361
        %v487 = vunpack.c.l.b16 %v362
        %v488 = vunpack.c.h.b16 %v362
        %v489 = vunpack.c.l.b16 %v363
        %v490 = vunpack.c.h.b16 %v363
        %v491 = vunpack.c.l.b16 %v364
        %v492 = vunpack.c.h.b16 %v364
        %v493 = vunpack.c.l.b16 %v365
        %v494 = vunpack.c.h.b16 %v365
        %v495 = vunpack.c.l.b16 %v366
        %v496 = vunpack.c.h.b16 %v366
        %v497 = vpack.c.b16 %v463, %v461
        %v498 = vpack.c.b16 %v464, %v462
        %v499 = vpack.c.b16 %v467, %v465
        %v500 = vpack.c.b16 %v468, %v466
        %v501 = vpack.c.b16 %v471, %v469
        %v502 = vpack.c.b16 %v472, %v470
        %v503 = vpack.c.b16 %v475, %v473
        %v504 = vpack.c.b16 %v476, %v474
        %v505 = vpack.c.b16 %v479, %v477
        %v506 = vpack.c.b16 %v480, %v478
        %v507 = vpack.c.b16 %v483, %v481
        %v508 = vpack.c.b16 %v484, %v482
        %v509 = vpack.c.b16 %v487, %v485
        %v510 = vpack.c.b16 %v488, %v486
        %v511 = vpack.c.b16 %v491, %v489
        %v512 = vpack.c.b16 %v492, %v490
        %v513 = vpack.c.b16 %v495, %v493
        %v514 = vpack.c.b16 %v496, %v494
        %vm533 = vcmask 130048
        %v535 = vsel %vm533, %v441, 0
        %537 = vmatprep.subr.bf16.mxu0 %v498
        %538 = vmatpush1.bf16.msra.mxu0 %v497
        %539 = vmatprep.subr.bf16.mxu0 %v500
        %540 = vmatpush1.bf16.msra.mxu0 %v499
        %541 = vmatprep.subr.bf16.mxu0 %v502
        %542 = vmatpush1.bf16.msra.mxu0 %v501
        %543 = vmatprep.subr.bf16.mxu0 %v504
        %544 = vmatpush1.bf16.msra.mxu0 %v503
        %545 = vmatprep.subr.bf16.mxu0 %v506
        %546 = vmatpush1.bf16.msra.mxu0 %v505
        %547 = vmatprep.subr.bf16.mxu0 %v508
        %548 = vmatpush1.bf16.msra.mxu0 %v507
        %549 = vmatprep.subr.bf16.mxu0 %v510
        %550 = vmatpush1.bf16.msra.mxu0 %v509
        %551 = vmatprep.subr.bf16.mxu0 %v512
        %552 = vmatpush1.bf16.msra.mxu0 %v511
        %553 = vmatprep.subr.bf16.mxu0 %v514
        %554 = vmatpush1.bf16.msra.mxu0 %v513
        %555 = vmatprep.subr.bf16.mxu0 0
        %556 = vmatpush1.bf16.msra.mxu0 0
        %557 = vmatprep.subr.bf16.mxu0 0
        %558 = vmatpush1.bf16.msra.mxu0 0
        %559 = vmatprep.subr.bf16.mxu0 0
        %560 = vmatpush1.bf16.msra.mxu0 0
        %561 = vmatprep.subr.bf16.mxu0 0
        %562 = vmatpush1.bf16.msra.mxu0 0
        %563 = vmatprep.subr.bf16.mxu0 0
        %564 = vmatpush1.bf16.msra.mxu0 0
        %565 = vmatprep.subr.bf16.mxu0 0
        %566 = vmatpush1.bf16.msra.mxu0 0
        %567 = vmatprep.subr.bf16.mxu0 0
        %568 = vmatpush1.bf16.msra.mxu0 0
        %569 = vmatprep.mubr.bf16.mxu0 %v535
        %570 = vmatmul.mubr.bf16.gmra.mrb[0].mxu0 %v440
        %v571 = vpop.f32.mrb[0].mxu0
        %v572 = vadd.f32 %v426, %v571
        %v573 = vpop.f32.mrb[0].mxu0
        %v574 = vadd.f32 %v428, %v573
        %v575 = vpop.f32.mrb[0].mxu0
        %v576 = vadd.f32 %v430, %v575
        %v577 = vpop.f32.mrb[0].mxu0
        %v578 = vadd.f32 %v432, %v577
        %579 = vdwg.mxu0
        %v580 = vld [vmem:[%s2] sm:$0xff]
        %v581 = vld [vmem:[%s2 + $0x8] sm:$0xff]
        %583 = vset.pattern.permute.xlu0 0
        %584 = vperm.xlu0 %583, %v580
        %v585 = vpop.permute.xlu0 %584
        %588 = vset.pattern.permute.xlu0 0
        %589 = vperm.xlu0 %588, %v581
        %v590 = vpop.permute.xlu0 %589
        %v592 = vadd.f32 %v572, %v585
        %v593 = vadd.f32 %v574, %v585
        %v594 = vadd.f32 %v576, %v590
        %v595 = vadd.f32 %v578, %v590
        %v596 = vmax.f32 %v592, 0.0
        %v597 = vmax.f32 %v593, 0.0
        %v598 = vmax.f32 %v594, 0.0
        %v599 = vmax.f32 %v595, 0.0
        %v600 = vpack.c.bf16 %v598, %v596
        %v601 = vpack.c.bf16 %v599, %v597
        %v604 = vunpack.c.l.b16 %v600
        %v605 = vunpack.c.l.b16 %v601
        %v606 = vunpack.c.h.b16 %v600
        %v607 = vunpack.c.h.b16 %v601
        %v608 = vpack.c.b16 %v605, %v604
        %v609 = vpack.c.b16 %v607, %v606
        %612 = vst [vmem:[%s337] sm:$0xff] %v608
        %613 = vst [vmem:[%s337 + $0x8] sm:$0xff] %v609
        %s614 = sand.u32 %s139, 1
        %s615 = sand.u32 %s139, 1
        %s616 = smul.addr %s615, 16
        %s617 = scalar_lea.vmem [#allocation3], %s616
        // Predicated region
        $region79: #{resnet_forward.14} parent=73 // pred_check
          %p618 = pneg %p149
        $region80: #{resnet_forward.14} parent=73 // pred_check_branch
          %620 = sbr.rel (%p618) target = $region82
        $region81: #{resnet_forward.14} parent=73 // pred_region
          %s621 = smul.u32 2, %s16
          %s622 = smul.addr %s621, 4
          %s623 = scalar_lea.vmem %s5, %s622
          // Predicated region
          $region83: #{resnet_forward.14} parent=81 // pred_check
            _
          $region84: #{resnet_forward.14} parent=81 // pred_check_branch
            %625 = sbr.rel (0) target = $region86
          $region85: #{resnet_forward.14} parent=81 // pred_region
            // Predicated region
            $region87: #{resnet_forward.14} parent=85 // pred_check
              _
            $region88: #{resnet_forward.14} parent=85 // pred_check_branch
              %627 = sbr.rel (0) target = $region90
            $region89: #{resnet_forward.14} parent=85 // pred_region
              // Predicated region
              $region102: #{resnet_forward.14} parent=89 // pred_check
                _
              $region103: #{resnet_forward.14} parent=89 // pred_check_branch
                %644 = sbr.rel (0) target = $region105
              $region104: #{resnet_forward.14} parent=89 // pred_region
                loop: start=0, step=1, limit=1
                $region106: #{resnet_forward.14} parent=104 // loop_pre_header
                  _
                $region107: #{resnet_forward.14} parent=104 // loop_header
                  %s646 = sphi 0, %s650
                  %p647 = scmp.ge.s32.totalorder %s646, 1
                  %s651 = sphi %s617, %s617
                  %s652 = sphi %s623, %s623
                $region108: #{resnet_forward.14} parent=104 // loop_header_branch
                  %649 = sbr.rel (%p647) target = $region112
                $region109: #{resnet_forward.14} parent=104 // loop_body
                  %v653 = vld [vmem:[%s651] sm:$0xff]
                  %654 = vst [vmem:[%s652] sm:$0xff] %v653
                  %v655 = vld [vmem:[%s651 + $0x8] sm:$0xff]
                  %656 = vst [vmem:[%s652 + $0x10] sm:$0xff] %v655
                $region110: #{resnet_forward.14} parent=104 // loop_footer
                  %s650 = sadd.s32 1, %s646
                $region111: #{resnet_forward.14} parent=104 // loop_footer_branch
                  %645 = sbr.rel target = $region107
                $region112: #{resnet_forward.14} parent=104 // loop_exit
                  _
              $region105: #{resnet_forward.14} parent=89 // pred_fallthru
                _
              // Predicated region
              $region113: #{resnet_forward.14} parent=89 // pred_check
                _
              $region114: #{resnet_forward.14} parent=89 // pred_check_branch
                %658 = sbr.rel target = $region116
              $region115: #{resnet_forward.14} parent=89 // pred_region
                _
              $region116: #{resnet_forward.14} parent=89 // pred_fallthru
                _
            $region90: #{resnet_forward.14} parent=85 // pred_fallthru
              _
            // Predicated region
            $region91: #{resnet_forward.14} parent=85 // pred_check
              _
            $region92: #{resnet_forward.14} parent=85 // pred_check_branch
              %629 = sbr.rel target = $region94
            $region93: #{resnet_forward.14} parent=85 // pred_region
              loop: start=0, step=1, limit=1
              $region95: #{resnet_forward.14} parent=93 // loop_pre_header
                _
              $region96: #{resnet_forward.14} parent=93 // loop_header
                %s632 = sphi 0, %s636
                %p633 = scmp.ge.s32.totalorder %s632, 1
                %s637 = sphi %s617, %s617
                %s638 = sphi %s623, %s623
              $region97: #{resnet_forward.14} parent=93 // loop_header_branch
                %635 = sbr.rel (%p633) target = $region101
              $region98: #{resnet_forward.14} parent=93 // loop_body
                %v639 = vld [vmem:[%s637] sm:$0xff]
                %640 = vst [vmem:[%s638] sm:$0xff] %v639
                %v641 = vld [vmem:[%s637 + $0x8] sm:$0xff]
                %642 = vst [vmem:[%s638 + $0x10] sm:$0xff] %v641
              $region99: #{resnet_forward.14} parent=93 // loop_footer
                %s636 = sadd.s32 1, %s632
              $region100: #{resnet_forward.14} parent=93 // loop_footer_branch
                %631 = sbr.rel target = $region96
              $region101: #{resnet_forward.14} parent=93 // loop_exit
                _
            $region94: #{resnet_forward.14} parent=85 // pred_fallthru
              _
          $region86: #{resnet_forward.14} parent=81 // pred_fallthru
            _
          %659 = vnop
        $region82: #{resnet_forward.14} parent=73 // pred_fallthru
          _
      $region74: #{resnet_forward.14} parent=5 // pred_fallthru
        _
      %p660 = scmp.le.s32.totalorder 2, %s11
      // Predicated region
      $region117: #{resnet_forward.14} parent=5 // pred_check
        %p661 = pneg %p660
      $region118: #{resnet_forward.14} parent=5 // pred_check_branch
        %663 = sbr.rel (%p661) target = $region120
      $region119: #{resnet_forward.14} parent=5 // pred_region
        %s664 = ssub.s32 %s11, 2
        // Predicated region
        $region121: #{resnet_forward.14} parent=119 // pred_check
          %p665 = pneg %p155
        $region122: #{resnet_forward.14} parent=119 // pred_check_branch
          %667 = sbr.rel (%p665) target = $region124
        $region123: #{resnet_forward.14} parent=119 // pred_region
          %s668 = sand.u32 %s140, 1
          %s669 = sand.u32 %s140, 1
          %s670 = smul.addr %s669, 16
          %s671 = scalar_lea.vmem [#allocation3], %s670
        $region124: #{resnet_forward.14} parent=119 // pred_fallthru
          _
      $region120: #{resnet_forward.14} parent=5 // pred_fallthru
        _
    $region6: #{resnet_forward.14} parent=1 // loop_footer
      %s15 = sadd.s32 1, %s11
    $region7: #{resnet_forward.14} parent=1 // loop_footer_branch
      %10 = sbr.rel target = $region3
    $region8: #{resnet_forward.14} parent=1 // loop_exit
      _

// kernel: resnet_forward.15
$region0: #{resnet_forward.15}
  #allocation0 [shape = 'u32[]', space=smem, size = 0x4, offset = 0x4, fixed_abs, tag = 'smem constant byte address 0x4 - core index']
  #allocation1 [shape = 'u32[144,128]{1,0:T(1,128)}', space=vmem, size = 0x12000, scoped, tag = 'internal scratch']
  %s0 = inlined_call_operand.vmem [shape: bf16[32,144], index: 0, kind: input, shape index: {}]
  %s1 = inlined_call_operand.vmem [shape: bf16[144,128], index: 1, kind: input, shape index: {}]
  %s2 = inlined_call_operand.vmem [shape: f32[32,1], index: 2, kind: input, shape index: {}]
  %s3 = inlined_call_operand.vmem [shape: bf16[32,128], index: 3, kind: output, shape index: {}]
  %s4 = sld [smem:[#allocation0]]
  $region22: #{resnet_forward.15} parent=0
    _
  %s6 = ssub.s32 1, %s4
  %s7 = scalar_select 0, %s6, %s4
  // Predicated region
  $region2: #{resnet_forward.15} parent=0 // pred_check
    _
  $region3: #{resnet_forward.15} parent=0 // pred_check_branch
    %9 = sbr.rel (0) target = $region5
  $region4: #{resnet_forward.15} parent=0 // pred_region
    _
  $region5: #{resnet_forward.15} parent=0 // pred_fallthru
    _
  // Predicated region
  $region6: #{resnet_forward.15} parent=0 // pred_check
    _
  $region7: #{resnet_forward.15} parent=0 // pred_check_branch
    %11 = sbr.rel (0) target = $region9
  $region8: #{resnet_forward.15} parent=0 // pred_region
    _
  $region9: #{resnet_forward.15} parent=0 // pred_fallthru
    _
  // Predicated region
  $region10: #{resnet_forward.15} parent=0 // pred_check
    _
  $region11: #{resnet_forward.15} parent=0 // pred_check_branch
    %13 = sbr.rel (0) target = $region13
  $region12: #{resnet_forward.15} parent=0 // pred_region
    _
  $region13: #{resnet_forward.15} parent=0 // pred_fallthru
    _
  %v15 = vld [vmem:[%s0] sm:$0xff]
  %v16 = vld [vmem:[%s0 + $0x8] sm:$0xff]
  %v17 = vld [vmem:[%s0 + $0x10] sm:$0xff]
  %v18 = vld [vmem:[%s0 + $0x18] sm:$0xff]
  %v19 = vld [vmem:[%s1] sm:$0xf]
  %v20 = vld [vmem:[%s1 + $0x4] sm:$0xf]
  %v21 = vld [vmem:[%s1 + $0x8] sm:$0xf]
  %v22 = vld [vmem:[%s1 + $0xc] sm:$0xf]
  %v23 = vld [vmem:[%s1 + $0x10] sm:$0xf]
  %v24 = vld [vmem:[%s1 + $0x14] sm:$0xf]
  %v25 = vld [vmem:[%s1 + $0x18] sm:$0xf]
  %v26 = vld [vmem:[%s1 + $0x1c] sm:$0xf]
  %v27 = vld [vmem:[%s1 + $0x20] sm:$0xf]
  %v28 = vld [vmem:[%s1 + $0x24] sm:$0xf]
  %v29 = vld [vmem:[%s1 + $0x28] sm:$0xf]
  %v30 = vld [vmem:[%s1 + $0x2c] sm:$0xf]
  %v31 = vld [vmem:[%s1 + $0x30] sm:$0xf]
  %v32 = vld [vmem:[%s1 + $0x34] sm:$0xf]
  %v33 = vld [vmem:[%s1 + $0x38] sm:$0xf]
  %v34 = vld [vmem:[%s1 + $0x3c] sm:$0xf]
  %v35 = vld [vmem:[%s1 + $0x40] sm:$0xf]
  %v36 = vld [vmem:[%s1 + $0x44] sm:$0xf]
  %v37 = vld [vmem:[%s2] sm:$0xff]
  %v38 = vld [vmem:[%s2 + $0x8] sm:$0xff]
  %v39 = vld [vmem:[%s2 + $0x10] sm:$0xff]
  %v40 = vld [vmem:[%s2 + $0x18] sm:$0xff]
  %42 = vset.pattern.permute.xlu0 0
  %43 = vperm.xlu0 %42, %v37
  %v44 = vpop.permute.xlu0 %43
  %47 = vset.pattern.permute.xlu0 0
  %48 = vperm.xlu0 %47, %v38
  %v49 = vpop.permute.xlu0 %48
  %52 = vset.pattern.permute.xlu0 0
  %53 = vperm.xlu0 %52, %v39
  %v54 = vpop.permute.xlu0 %53
  %57 = vset.pattern.permute.xlu0 0
  %58 = vperm.xlu0 %57, %v40
  %v59 = vpop.permute.xlu0 %58
  %v65 = vunpack.c.l.b16 %v15
  %v66 = vunpack.c.h.b16 %v15
  %v67 = vunpack.c.l.b16 %v16
  %v68 = vunpack.c.h.b16 %v16
  %v69 = vunpack.c.l.b16 %v17
  %v70 = vunpack.c.h.b16 %v17
  %v71 = vunpack.c.l.b16 %v18
  %v72 = vunpack.c.h.b16 %v18
  %v73 = vpack.c.b16 %v67, %v65
  %v74 = vpack.c.b16 %v68, %v66
  %v75 = vpack.c.b16 %v71, %v69
  %v76 = vpack.c.b16 %v72, %v70
  %v97 = vunpack.c.l.b16 %v19
  %v98 = vunpack.c.l.b16 %v20
  %v99 = vunpack.c.l.b16 %v21
  %v100 = vunpack.c.l.b16 %v22
  %v101 = vunpack.c.l.b16 %v23
  %v102 = vunpack.c.l.b16 %v24
  %v103 = vunpack.c.l.b16 %v25
  %v104 = vunpack.c.l.b16 %v26
  %v105 = vunpack.c.l.b16 %v27
  %v106 = vunpack.c.l.b16 %v28
  %v107 = vunpack.c.l.b16 %v29
  %v108 = vunpack.c.l.b16 %v30
  %v109 = vunpack.c.l.b16 %v31
  %v110 = vunpack.c.l.b16 %v32
  %v111 = vunpack.c.l.b16 %v33
  %v112 = vunpack.c.l.b16 %v34
  %v113 = vunpack.c.l.b16 %v35
  %v114 = vunpack.c.l.b16 %v36
  %v115 = vpack.c.b16 %v98, %v97
  %v116 = vpack.c.b16 %v100, %v99
  %v117 = vpack.c.b16 %v102, %v101
  %v118 = vpack.c.b16 %v104, %v103
  %v119 = vpack.c.b16 %v106, %v105
  %v120 = vpack.c.b16 %v108, %v107
  %v121 = vpack.c.b16 %v110, %v109
  %v122 = vpack.c.b16 %v112, %v111
  %v123 = vpack.c.b16 %v114, %v113
  %vm133 = vcmask 130048
  %v135 = vsel %vm133, %v74, 0
  %v138 = vsel %vm133, %v76, 0
  %140 = vmatprep.subr.bf16.mxu0 0
  %141 = vmatpush1.bf16.msra.mxu0 %v115
  %142 = vmatprep.subr.bf16.mxu0 0
  %143 = vmatpush1.bf16.msra.mxu0 %v116
  %144 = vmatprep.subr.bf16.mxu0 0
  %145 = vmatpush1.bf16.msra.mxu0 %v117
  %146 = vmatprep.subr.bf16.mxu0 0
  %147 = vmatpush1.bf16.msra.mxu0 %v118
  %148 = vmatprep.subr.bf16.mxu0 0
  %149 = vmatpush1.bf16.msra.mxu0 %v119
  %150 = vmatprep.subr.bf16.mxu0 0
  %151 = vmatpush1.bf16.msra.mxu0 %v120
  %152 = vmatprep.subr.bf16.mxu0 0
  %153 = vmatpush1.bf16.msra.mxu0 %v121
  %154 = vmatprep.subr.bf16.mxu0 0
  %155 = vmatpush1.bf16.msra.mxu0 %v122
  %156 = vmatprep.subr.bf16.mxu0 0
  %157 = vmatpush1.bf16.msra.mxu0 %v123
  %158 = vmatprep.subr.bf16.mxu0 0
  %159 = vmatpush1.bf16.msra.mxu0 0
  %160 = vmatprep.subr.bf16.mxu0 0
  %161 = vmatpush1.bf16.msra.mxu0 0
  %162 = vmatprep.subr.bf16.mxu0 0
  %163 = vmatpush1.bf16.msra.mxu0 0
  %164 = vmatprep.subr.bf16.mxu0 0
  %165 = vmatpush1.bf16.msra.mxu0 0
  %166 = vmatprep.subr.bf16.mxu0 0
  %167 = vmatpush1.bf16.msra.mxu0 0
  %168 = vmatprep.subr.bf16.mxu0 0
  %169 = vmatpush1.bf16.msra.mxu0 0
  %170 = vmatprep.subr.bf16.mxu0 0
  %171 = vmatpush1.bf16.msra.mxu0 0
  %172 = vmatprep.mubr.bf16.mxu0 %v135
  %173 = vmatmul.mubr.bf16.gmra.mrb[0].mxu0 %v73
  %v174 = vpop.f32.mrb[0].mxu0
  %v175 = vadd.f32 %v44, %v174
  %v176 = vpop.f32.mrb[0].mxu0
  %v177 = vpop.f32.mrb[0].mxu0
  %v178 = vadd.f32 %v49, %v177
  %v179 = vpop.f32.mrb[0].mxu0
  %180 = vmatprep.mubr.bf16.mxu0 %v138
  %181 = vmatmul.mubr.bf16.gmra.mrb[0].mxu0 %v75
  %v182 = vpop.f32.mrb[0].mxu0
  %v183 = vadd.f32 %v54, %v182
  %v184 = vpop.f32.mrb[0].mxu0
  %v185 = vpop.f32.mrb[0].mxu0
  %v186 = vadd.f32 %v59, %v185
  %v187 = vpop.f32.mrb[0].mxu0
  %188 = vdwg.mxu0
  %v189 = vmax.f32 %v175, 0.0
  %v190 = vmax.f32 %v178, 0.0
  %v191 = vmax.f32 %v183, 0.0
  %v192 = vmax.f32 %v186, 0.0
  %v193 = vpack.c.bf16 %v190, %v189
  %v194 = vpack.c.bf16 %v192, %v191
  %v197 = vunpack.c.l.b16 %v193
  %v198 = vunpack.c.h.b16 %v193
  %v199 = vunpack.c.l.b16 %v194
  %v200 = vunpack.c.h.b16 %v194
  %v201 = vpack.c.b16 %v197, %v197
  %v202 = vpack.c.b16 %v198, %v198
  %v203 = vpack.c.b16 %v199, %v199
  %v204 = vpack.c.b16 %v200, %v200
  %209 = vst [vmem:[%s3] sm:$0xf] %v201
  %210 = vst [vmem:[%s3 + $0x4] sm:$0xf] %v202
  %211 = vst [vmem:[%s3 + $0x8] sm:$0xf] %v203
  %212 = vst [vmem:[%s3 + $0xc] sm:$0xf] %v204
  // Predicated region
  $region14: #{resnet_forward.15} parent=0 // pred_check
    _
  $region15: #{resnet_forward.15} parent=0 // pred_check_branch
    %214 = sbr.rel (0) target = $region17
  $region16: #{resnet_forward.15} parent=0 // pred_region
    _
  $region17: #{resnet_forward.15} parent=0 // pred_fallthru
    _
  // Predicated region
  $region18: #{resnet_forward.15} parent=0 // pred_check
    _
  $region19: #{resnet_forward.15} parent=0 // pred_check_branch
    %216 = sbr.rel (0) target = $region21
  $region20: #{resnet_forward.15} parent=0 // pred_region
    _
  $region21: #{resnet_forward.15} parent=0 // pred_fallthru
    _

// kernel: resnet_forward.16
$region0: #{resnet_forward.16}
  #allocation0 [shape = 'u32[]', space=smem, size = 0x4, offset = 0x4, fixed_abs, tag = 'smem constant byte address 0x4 - core index']
  #allocation1 [shape = 'u32[144,128]{1,0:T(1,128)}', space=vmem, size = 0x12000, scoped, tag = 'internal scratch']
  %s0 = inlined_call_operand.vmem [shape: bf16[32,288], index: 0, kind: input, shape index: {}]
  %s1 = inlined_call_operand.vmem [shape: bf16[288,128], index: 1, kind: input, shape index: {}]
  %s2 = inlined_call_operand.vmem [shape: f32[32,1], index: 2, kind: input, shape index: {}]
  %s3 = inlined_call_operand.vmem [shape: bf16[32,16], index: 3, kind: input, shape index: {}]
  %s4 = inlined_call_operand.vmem [shape: bf16[16,128], index: 4, kind: input, shape index: {}]
  %s5 = inlined_call_operand.vmem [shape: bf16[32,128], index: 5, kind: output, shape index: {}]
  %s6 = sld [smem:[#allocation0]]
  $region30: #{resnet_forward.16} parent=0
    _
  %s8 = ssub.s32 1, %s6
  %s9 = scalar_select 0, %s8, %s6
  // Predicated region
  $region2: #{resnet_forward.16} parent=0 // pred_check
    _
  $region3: #{resnet_forward.16} parent=0 // pred_check_branch
    %11 = sbr.rel (0) target = $region5
  $region4: #{resnet_forward.16} parent=0 // pred_region
    _
  $region5: #{resnet_forward.16} parent=0 // pred_fallthru
    _
  // Predicated region
  $region6: #{resnet_forward.16} parent=0 // pred_check
    _
  $region7: #{resnet_forward.16} parent=0 // pred_check_branch
    %13 = sbr.rel (0) target = $region9
  $region8: #{resnet_forward.16} parent=0 // pred_region
    _
  $region9: #{resnet_forward.16} parent=0 // pred_fallthru
    _
  // Predicated region
  $region10: #{resnet_forward.16} parent=0 // pred_check
    _
  $region11: #{resnet_forward.16} parent=0 // pred_check_branch
    %15 = sbr.rel (0) target = $region13
  $region12: #{resnet_forward.16} parent=0 // pred_region
    _
  $region13: #{resnet_forward.16} parent=0 // pred_fallthru
    _
  // Predicated region
  $region14: #{resnet_forward.16} parent=0 // pred_check
    _
  $region15: #{resnet_forward.16} parent=0 // pred_check_branch
    %17 = sbr.rel (0) target = $region17
  $region16: #{resnet_forward.16} parent=0 // pred_region
    _
  $region17: #{resnet_forward.16} parent=0 // pred_fallthru
    _
  // Predicated region
  $region18: #{resnet_forward.16} parent=0 // pred_check
    _
  $region19: #{resnet_forward.16} parent=0 // pred_check_branch
    %19 = sbr.rel (0) target = $region21
  $region20: #{resnet_forward.16} parent=0 // pred_region
    _
  $region21: #{resnet_forward.16} parent=0 // pred_fallthru
    _
  %v21 = vld [vmem:[%s0] sm:$0xff]
  %v22 = vld [vmem:[%s0 + $0x8] sm:$0xf]
  %v23 = vld [vmem:[%s0 + $0xc] sm:$0xff]
  %v24 = vld [vmem:[%s0 + $0x14] sm:$0xf]
  %v25 = vld [vmem:[%s0 + $0x18] sm:$0xff]
  %v26 = vld [vmem:[%s0 + $0x20] sm:$0xf]
  %v27 = vld [vmem:[%s0 + $0x24] sm:$0xff]
  %v28 = vld [vmem:[%s0 + $0x2c] sm:$0xf]
  %v29 = vld [vmem:[%s1] sm:$0xf]
  %v30 = vld [vmem:[%s1 + $0x4] sm:$0xf]
  %v31 = vld [vmem:[%s1 + $0x8] sm:$0xf]
  %v32 = vld [vmem:[%s1 + $0xc] sm:$0xf]
  %v33 = vld [vmem:[%s1 + $0x10] sm:$0xf]
  %v34 = vld [vmem:[%s1 + $0x14] sm:$0xf]
  %v35 = vld [vmem:[%s1 + $0x18] sm:$0xf]
  %v36 = vld [vmem:[%s1 + $0x1c] sm:$0xf]
  %v37 = vld [vmem:[%s1 + $0x20] sm:$0xf]
  %v38 = vld [vmem:[%s1 + $0x24] sm:$0xf]
  %v39 = vld [vmem:[%s1 + $0x28] sm:$0xf]
  %v40 = vld [vmem:[%s1 + $0x2c] sm:$0xf]
  %v41 = vld [vmem:[%s1 + $0x30] sm:$0xf]
  %v42 = vld [vmem:[%s1 + $0x34] sm:$0xf]
  %v43 = vld [vmem:[%s1 + $0x38] sm:$0xf]
  %v44 = vld [vmem:[%s1 + $0x3c] sm:$0xf]
  %v45 = vld [vmem:[%s1 + $0x40] sm:$0xf]
  %v46 = vld [vmem:[%s1 + $0x44] sm:$0xf]
  %v47 = vld [vmem:[%s1 + $0x48] sm:$0xf]
  %v48 = vld [vmem:[%s1 + $0x4c] sm:$0xf]
  %v49 = vld [vmem:[%s1 + $0x50] sm:$0xf]
  %v50 = vld [vmem:[%s1 + $0x54] sm:$0xf]
  %v51 = vld [vmem:[%s1 + $0x58] sm:$0xf]
  %v52 = vld [vmem:[%s1 + $0x5c] sm:$0xf]
  %v53 = vld [vmem:[%s1 + $0x60] sm:$0xf]
  %v54 = vld [vmem:[%s1 + $0x64] sm:$0xf]
  %v55 = vld [vmem:[%s1 + $0x68] sm:$0xf]
  %v56 = vld [vmem:[%s1 + $0x6c] sm:$0xf]
  %v57 = vld [vmem:[%s1 + $0x70] sm:$0xf]
  %v58 = vld [vmem:[%s1 + $0x74] sm:$0xf]
  %v59 = vld [vmem:[%s1 + $0x78] sm:$0xf]
  %v60 = vld [vmem:[%s1 + $0x7c] sm:$0xf]
  %v61 = vld [vmem:[%s1 + $0x80] sm:$0xf]
  %v62 = vld [vmem:[%s1 + $0x84] sm:$0xf]
  %v63 = vld [vmem:[%s1 + $0x88] sm:$0xf]
  %v64 = vld [vmem:[%s1 + $0x8c] sm:$0xf]
  %v65 = vld [vmem:[%s3] sm:$0xf]
  %v66 = vld [vmem:[%s3 + $0x4] sm:$0xf]
  %v67 = vld [vmem:[%s3 + $0x8] sm:$0xf]
  %v68 = vld [vmem:[%s3 + $0xc] sm:$0xf]
  %v69 = vld [vmem:[%s4] sm:$0xf]
  %v70 = vld [vmem:[%s4 + $0x4] sm:$0xf]
  %v75 = vunpack.c.l.b16 %v65
  %v76 = vunpack.c.l.b16 %v66
  %v77 = vunpack.c.l.b16 %v67
  %v78 = vunpack.c.l.b16 %v68
  %v79 = vpack.c.b16 %v76, %v75
  %v80 = vpack.c.b16 %v78, %v77
  %v83 = vunpack.c.l.b16 %v69
  %v84 = vunpack.c.l.b16 %v70
  %v85 = vpack.c.b16 %v84, %v83
  %vm87 = vcmask 130048
  %v89 = vsel %vm87, %v79, 0
  %v92 = vsel %vm87, %v80, 0
  %94 = vmatprep.subr.bf16.mxu0 0
  %95 = vmatpush1.bf16.msra.mxu0 %v85
  %96 = vmatprep.subr.bf16.mxu0 0
  %97 = vmatpush1.bf16.msra.mxu0 0
  %98 = vmatprep.subr.bf16.mxu0 0
  %99 = vmatpush1.bf16.msra.mxu0 0
  %100 = vmatprep.subr.bf16.mxu0 0
  %101 = vmatpush1.bf16.msra.mxu0 0
  %102 = vmatprep.subr.bf16.mxu0 0
  %103 = vmatpush1.bf16.msra.mxu0 0
  %104 = vmatprep.subr.bf16.mxu0 0
  %105 = vmatpush1.bf16.msra.mxu0 0
  %106 = vmatprep.subr.bf16.mxu0 0
  %107 = vmatpush1.bf16.msra.mxu0 0
  %108 = vmatprep.subr.bf16.mxu0 0
  %109 = vmatpush1.bf16.msra.mxu0 0
  %110 = vmatprep.subr.bf16.mxu0 0
  %111 = vmatpush1.bf16.msra.mxu0 0
  %112 = vmatprep.subr.bf16.mxu0 0
  %113 = vmatpush1.bf16.msra.mxu0 0
  %114 = vmatprep.subr.bf16.mxu0 0
  %115 = vmatpush1.bf16.msra.mxu0 0
  %116 = vmatprep.subr.bf16.mxu0 0
  %117 = vmatpush1.bf16.msra.mxu0 0
  %118 = vmatprep.subr.bf16.mxu0 0
  %119 = vmatpush1.bf16.msra.mxu0 0
  %120 = vmatprep.subr.bf16.mxu0 0
  %121 = vmatpush1.bf16.msra.mxu0 0
  %122 = vmatprep.subr.bf16.mxu0 0
  %123 = vmatpush1.bf16.msra.mxu0 0
  %124 = vmatprep.subr.bf16.mxu0 0
  %125 = vmatpush1.bf16.msra.mxu0 0
  %126 = vmatprep.mubr.bf16.mxu0 0
  %127 = vmatmul.mubr.bf16.gmra.mrb[0].mxu0 %v89
  %v128 = vpop.f32.mrb[0].mxu0
  %v129 = vadd.f32 0.0, %v128
  %v130 = vpop.f32.mrb[0].mxu0
  %v131 = vpop.f32.mrb[0].mxu0
  %v132 = vadd.f32 0.0, %v131
  %v133 = vpop.f32.mrb[0].mxu0
  %134 = vmatprep.mubr.bf16.mxu0 0
  %135 = vmatmul.mubr.bf16.gmra.mrb[0].mxu0 %v92
  %v136 = vpop.f32.mrb[0].mxu0
  %v137 = vadd.f32 0.0, %v136
  %v138 = vpop.f32.mrb[0].mxu0
  %v139 = vpop.f32.mrb[0].mxu0
  %v140 = vadd.f32 0.0, %v139
  %v141 = vpop.f32.mrb[0].mxu0
  %142 = vdwg.mxu0
  %v151 = vunpack.c.l.b16 %v21
  %v152 = vunpack.c.h.b16 %v21
  %v153 = vunpack.c.l.b16 %v22
  %v154 = vunpack.c.l.b16 %v23
  %v155 = vunpack.c.h.b16 %v23
  %v156 = vunpack.c.l.b16 %v24
  %v157 = vunpack.c.l.b16 %v25
  %v158 = vunpack.c.h.b16 %v25
  %v159 = vunpack.c.l.b16 %v26
  %v160 = vunpack.c.l.b16 %v27
  %v161 = vunpack.c.h.b16 %v27
  %v162 = vunpack.c.l.b16 %v28
  %v163 = vpack.c.b16 %v154, %v151
  %v164 = vpack.c.b16 %v155, %v152
  %v165 = vpack.c.b16 %v156, %v153
  %v166 = vpack.c.b16 %v160, %v157
  %v167 = vpack.c.b16 %v161, %v158
  %v168 = vpack.c.b16 %v162, %v159
  %v209 = vunpack.c.l.b16 %v29
  %v210 = vunpack.c.l.b16 %v30
  %v211 = vunpack.c.l.b16 %v31
  %v212 = vunpack.c.l.b16 %v32
  %v213 = vunpack.c.l.b16 %v33
  %v214 = vunpack.c.l.b16 %v34
  %v215 = vunpack.c.l.b16 %v35
  %v216 = vunpack.c.l.b16 %v36
  %v217 = vunpack.c.l.b16 %v37
  %v218 = vunpack.c.l.b16 %v38
  %v219 = vunpack.c.l.b16 %v39
  %v220 = vunpack.c.l.b16 %v40
  %v221 = vunpack.c.l.b16 %v41
  %v222 = vunpack.c.l.b16 %v42
  %v223 = vunpack.c.l.b16 %v43
  %v224 = vunpack.c.l.b16 %v44
  %v225 = vunpack.c.l.b16 %v45
  %v226 = vunpack.c.l.b16 %v46
  %v227 = vunpack.c.l.b16 %v47
  %v228 = vunpack.c.l.b16 %v48
  %v229 = vunpack.c.l.b16 %v49
  %v230 = vunpack.c.l.b16 %v50
  %v231 = vunpack.c.l.b16 %v51
  %v232 = vunpack.c.l.b16 %v52
  %v233 = vunpack.c.l.b16 %v53
  %v234 = vunpack.c.l.b16 %v54
  %v235 = vunpack.c.l.b16 %v55
  %v236 = vunpack.c.l.b16 %v56
  %v237 = vunpack.c.l.b16 %v57
  %v238 = vunpack.c.l.b16 %v58
  %v239 = vunpack.c.l.b16 %v59
  %v240 = vunpack.c.l.b16 %v60
  %v241 = vunpack.c.l.b16 %v61
  %v242 = vunpack.c.l.b16 %v62
  %v243 = vunpack.c.l.b16 %v63
  %v244 = vunpack.c.l.b16 %v64
  %v245 = vpack.c.b16 %v210, %v209
  %v246 = vpack.c.b16 %v212, %v211
  %v247 = vpack.c.b16 %v214, %v213
  %v248 = vpack.c.b16 %v216, %v215
  %v249 = vpack.c.b16 %v218, %v217
  %v250 = vpack.c.b16 %v220, %v219
  %v251 = vpack.c.b16 %v222, %v221
  %v252 = vpack.c.b16 %v224, %v223
  %v253 = vpack.c.b16 %v226, %v225
  %v254 = vpack.c.b16 %v228, %v227
  %v255 = vpack.c.b16 %v230, %v229
  %v256 = vpack.c.b16 %v232, %v231
  %v257 = vpack.c.b16 %v234, %v233
  %v258 = vpack.c.b16 %v236, %v235
  %v259 = vpack.c.b16 %v238, %v237
  %v260 = vpack.c.b16 %v240, %v239
  %v261 = vpack.c.b16 %v242, %v241
  %v262 = vpack.c.b16 %v244, %v243
  %vm281 = vcmask 261120
  %v283 = vsel %vm281, %v165, 0
  %v286 = vsel %vm281, %v168, 0
  %288 = vmatprep.subr.bf16.mxu0 0
  %289 = vmatpush1.bf16.msra.mxu0 %v245
  %290 = vmatprep.subr.bf16.mxu0 0
  %291 = vmatpush1.bf16.msra.mxu0 %v246
  %292 = vmatprep.subr.bf16.mxu0 0
  %293 = vmatpush1.bf16.msra.mxu0 %v247
  %294 = vmatprep.subr.bf16.mxu0 0
  %295 = vmatpush1.bf16.msra.mxu0 %v248
  %296 = vmatprep.subr.bf16.mxu0 0
  %297 = vmatpush1.bf16.msra.mxu0 %v249
  %298 = vmatprep.subr.bf16.mxu0 0
  %299 = vmatpush1.bf16.msra.mxu0 %v250
  %300 = vmatprep.subr.bf16.mxu0 0
  %301 = vmatpush1.bf16.msra.mxu0 %v251
  %302 = vmatprep.subr.bf16.mxu0 0
  %303 = vmatpush1.bf16.msra.mxu0 %v252
  %304 = vmatprep.subr.bf16.mxu0 0
  %305 = vmatpush1.bf16.msra.mxu0 %v253
  %306 = vmatprep.subr.bf16.mxu0 0
  %307 = vmatpush1.bf16.msra.mxu0 %v254
  %308 = vmatprep.subr.bf16.mxu0 0
  %309 = vmatpush1.bf16.msra.mxu0 %v255
  %310 = vmatprep.subr.bf16.mxu0 0
  %311 = vmatpush1.bf16.msra.mxu0 %v256
  %312 = vmatprep.subr.bf16.mxu0 0
  %313 = vmatpush1.bf16.msra.mxu0 %v257
  %314 = vmatprep.subr.bf16.mxu0 0
  %315 = vmatpush1.bf16.msra.mxu0 %v258
  %316 = vmatprep.subr.bf16.mxu0 0
  %317 = vmatpush1.bf16.msra.mxu0 %v259
  %318 = vmatprep.subr.bf16.mxu0 0
  %319 = vmatpush1.bf16.msra.mxu0 %v260
  %320 = vmatprep.mubr.bf16.mxu0 %v164
  %321 = vmatmul.mubr.bf16.gmra.mrb[0].mxu0 %v163
  %v322 = vpop.f32.mrb[0].mxu0
  %v323 = vadd.f32 %v129, %v322
  %v324 = vpop.f32.mrb[0].mxu0
  %v325 = vpop.f32.mrb[0].mxu0
  %v326 = vadd.f32 %v132, %v325
  %v327 = vpop.f32.mrb[0].mxu0
  %328 = vmatprep.mubr.bf16.mxu0 %v167
  %329 = vmatmul.mubr.bf16.gmra.mrb[0].mxu0 %v166
  %v330 = vpop.f32.mrb[0].mxu0
  %v331 = vadd.f32 %v137, %v330
  %v332 = vpop.f32.mrb[0].mxu0
  %v333 = vpop.f32.mrb[0].mxu0
  %v334 = vadd.f32 %v140, %v333
  %v335 = vpop.f32.mrb[0].mxu0
  %336 = vdwg.mxu0
  %337 = vmatprep.subr.bf16.mxu0 0
  %338 = vmatpush1.bf16.msra.mxu0 %v261
  %339 = vmatprep.subr.bf16.mxu0 0
  %340 = vmatpush1.bf16.msra.mxu0 %v262
  %341 = vmatprep.subr.bf16.mxu0 0
  %342 = vmatpush1.bf16.msra.mxu0 0
  %343 = vmatprep.subr.bf16.mxu0 0
  %344 = vmatpush1.bf16.msra.mxu0 0
  %345 = vmatprep.subr.bf16.mxu0 0
  %346 = vmatpush1.bf16.msra.mxu0 0
  %347 = vmatprep.subr.bf16.mxu0 0
  %348 = vmatpush1.bf16.msra.mxu0 0
  %349 = vmatprep.subr.bf16.mxu0 0
  %350 = vmatpush1.bf16.msra.mxu0 0
  %351 = vmatprep.subr.bf16.mxu0 0
  %352 = vmatpush1.bf16.msra.mxu0 0
  %353 = vmatprep.subr.bf16.mxu0 0
  %354 = vmatpush1.bf16.msra.mxu0 0
  %355 = vmatprep.subr.bf16.mxu0 0
  %356 = vmatpush1.bf16.msra.mxu0 0
  %357 = vmatprep.subr.bf16.mxu0 0
  %358 = vmatpush1.bf16.msra.mxu0 0
  %359 = vmatprep.subr.bf16.mxu0 0
  %360 = vmatpush1.bf16.msra.mxu0 0
  %361 = vmatprep.subr.bf16.mxu0 0
  %362 = vmatpush1.bf16.msra.mxu0 0
  %363 = vmatprep.subr.bf16.mxu0 0
  %364 = vmatpush1.bf16.msra.mxu0 0
  %365 = vmatprep.subr.bf16.mxu0 0
  %366 = vmatpush1.bf16.msra.mxu0 0
  %367 = vmatprep.subr.bf16.mxu0 0
  %368 = vmatpush1.bf16.msra.mxu0 0
  %369 = vmatprep.mubr.bf16.mxu0 0
  %370 = vmatmul.mubr.bf16.gmra.mrb[0].mxu0 %v283
  %v371 = vpop.f32.mrb[0].mxu0
  %v372 = vadd.f32 %v323, %v371
  %v373 = vpop.f32.mrb[0].mxu0
  %v374 = vpop.f32.mrb[0].mxu0
  %v375 = vadd.f32 %v326, %v374
  %v376 = vpop.f32.mrb[0].mxu0
  %377 = vmatprep.mubr.bf16.mxu0 0
  %378 = vmatmul.mubr.bf16.gmra.mrb[0].mxu0 %v286
  %v379 = vpop.f32.mrb[0].mxu0
  %v380 = vadd.f32 %v331, %v379
  %v381 = vpop.f32.mrb[0].mxu0
  %v382 = vpop.f32.mrb[0].mxu0
  %v383 = vadd.f32 %v334, %v382
  %v384 = vpop.f32.mrb[0].mxu0
  %385 = vdwg.mxu0
  %v386 = vld [vmem:[%s2] sm:$0xff]
  %v387 = vld [vmem:[%s2 + $0x8] sm:$0xff]
  %v388 = vld [vmem:[%s2 + $0x10] sm:$0xff]
  %v389 = vld [vmem:[%s2 + $0x18] sm:$0xff]
  %391 = vset.pattern.permute.xlu0 0
  %392 = vperm.xlu0 %391, %v386
  %v393 = vpop.permute.xlu0 %392
  %396 = vset.pattern.permute.xlu0 0
  %397 = vperm.xlu0 %396, %v387
  %v398 = vpop.permute.xlu0 %397
  %401 = vset.pattern.permute.xlu0 0
  %402 = vperm.xlu0 %401, %v388
  %v403 = vpop.permute.xlu0 %402
  %406 = vset.pattern.permute.xlu0 0
  %407 = vperm.xlu0 %406, %v389
  %v408 = vpop.permute.xlu0 %407
  %v410 = vadd.f32 %v372, %v393
  %v411 = vadd.f32 %v375, %v398
  %v412 = vadd.f32 %v380, %v403
  %v413 = vadd.f32 %v383, %v408
  %v414 = vmax.f32 %v410, 0.0
  %v415 = vmax.f32 %v411, 0.0
  %v416 = vmax.f32 %v412, 0.0
  %v417 = vmax.f32 %v413, 0.0
  %v418 = vpack.c.bf16 %v415, %v414
  %v419 = vpack.c.bf16 %v417, %v416
  %v422 = vunpack.c.l.b16 %v418
  %v423 = vunpack.c.h.b16 %v418
  %v424 = vunpack.c.l.b16 %v419
  %v425 = vunpack.c.h.b16 %v419
  %v426 = vpack.c.b16 %v422, %v422
  %v427 = vpack.c.b16 %v423, %v423
  %v428 = vpack.c.b16 %v424, %v424
  %v429 = vpack.c.b16 %v425, %v425
  %434 = vst [vmem:[%s5] sm:$0xf] %v426
  %435 = vst [vmem:[%s5 + $0x4] sm:$0xf] %v427
  %436 = vst [vmem:[%s5 + $0x8] sm:$0xf] %v428
  %437 = vst [vmem:[%s5 + $0xc] sm:$0xf] %v429
  // Predicated region
  $region22: #{resnet_forward.16} parent=0 // pred_check
    _
  $region23: #{resnet_forward.16} parent=0 // pred_check_branch
    %439 = sbr.rel (0) target = $region25
  $region24: #{resnet_forward.16} parent=0 // pred_region
    _
  $region25: #{resnet_forward.16} parent=0 // pred_fallthru
    _
  // Predicated region
  $region26: #{resnet_forward.16} parent=0 // pred_check
    _
  $region27: #{resnet_forward.16} parent=0 // pred_check_branch
    %441 = sbr.rel (0) target = $region29
  $region28: #{resnet_forward.16} parent=0 // pred_region
    _
  $region29: #{resnet_forward.16} parent=0 // pred_fallthru
    _

// kernel: resnet_forward.17
$region0: #{resnet_forward.17}
  #allocation0 [shape = 'u32[]', space=smem, size = 0x4, offset = 0x4, fixed_abs, tag = 'smem constant byte address 0x4 - core index']
  #allocation1 [shape = 'u32[144,128]{1,0:T(1,128)}', space=vmem, size = 0x12000, scoped, tag = 'internal scratch']
  %s0 = inlined_call_operand.vmem [shape: bf16[64,288], index: 0, kind: input, shape index: {}]
  %s1 = inlined_call_operand.vmem [shape: bf16[288,32], index: 1, kind: input, shape index: {}]
  %s2 = inlined_call_operand.vmem [shape: f32[64,1], index: 2, kind: input, shape index: {}]
  %s3 = inlined_call_operand.vmem [shape: bf16[64,32], index: 3, kind: output, shape index: {}]
  %s4 = sld [smem:[#allocation0]]
  $region22: #{resnet_forward.17} parent=0
    _
  %s6 = ssub.s32 1, %s4
  %s7 = scalar_select 0, %s6, %s4
  // Predicated region
  $region2: #{resnet_forward.17} parent=0 // pred_check
    _
  $region3: #{resnet_forward.17} parent=0 // pred_check_branch
    %9 = sbr.rel (0) target = $region5
  $region4: #{resnet_forward.17} parent=0 // pred_region
    _
  $region5: #{resnet_forward.17} parent=0 // pred_fallthru
    _
  // Predicated region
  $region6: #{resnet_forward.17} parent=0 // pred_check
    _
  $region7: #{resnet_forward.17} parent=0 // pred_check_branch
    %11 = sbr.rel (0) target = $region9
  $region8: #{resnet_forward.17} parent=0 // pred_region
    _
  $region9: #{resnet_forward.17} parent=0 // pred_fallthru
    _
  // Predicated region
  $region10: #{resnet_forward.17} parent=0 // pred_check
    _
  $region11: #{resnet_forward.17} parent=0 // pred_check_branch
    %13 = sbr.rel (0) target = $region13
  $region12: #{resnet_forward.17} parent=0 // pred_region
    _
  $region13: #{resnet_forward.17} parent=0 // pred_fallthru
    _
  %v15 = vld [vmem:[%s0] sm:$0xff]
  %v16 = vld [vmem:[%s0 + $0x8] sm:$0xf]
  %v17 = vld [vmem:[%s0 + $0xc] sm:$0xff]
  %v18 = vld [vmem:[%s0 + $0x14] sm:$0xf]
  %v19 = vld [vmem:[%s0 + $0x18] sm:$0xff]
  %v20 = vld [vmem:[%s0 + $0x20] sm:$0xf]
  %v21 = vld [vmem:[%s0 + $0x24] sm:$0xff]
  %v22 = vld [vmem:[%s0 + $0x2c] sm:$0xf]
  %v23 = vld [vmem:[%s0 + $0x30] sm:$0xff]
  %v24 = vld [vmem:[%s0 + $0x38] sm:$0xf]
  %v25 = vld [vmem:[%s0 + $0x3c] sm:$0xff]
  %v26 = vld [vmem:[%s0 + $0x44] sm:$0xf]
  %v27 = vld [vmem:[%s0 + $0x48] sm:$0xff]
  %v28 = vld [vmem:[%s0 + $0x50] sm:$0xf]
  %v29 = vld [vmem:[%s0 + $0x54] sm:$0xff]
  %v30 = vld [vmem:[%s0 + $0x5c] sm:$0xf]
  %v31 = vld [vmem:[%s1] sm:$0xf]
  %v32 = vld [vmem:[%s1 + $0x4] sm:$0xf]
  %v33 = vld [vmem:[%s1 + $0x8] sm:$0xf]
  %v34 = vld [vmem:[%s1 + $0xc] sm:$0xf]
  %v35 = vld [vmem:[%s1 + $0x10] sm:$0xf]
  %v36 = vld [vmem:[%s1 + $0x14] sm:$0xf]
  %v37 = vld [vmem:[%s1 + $0x18] sm:$0xf]
  %v38 = vld [vmem:[%s1 + $0x1c] sm:$0xf]
  %v39 = vld [vmem:[%s1 + $0x20] sm:$0xf]
  %v40 = vld [vmem:[%s1 + $0x24] sm:$0xf]
  %v41 = vld [vmem:[%s1 + $0x28] sm:$0xf]
  %v42 = vld [vmem:[%s1 + $0x2c] sm:$0xf]
  %v43 = vld [vmem:[%s1 + $0x30] sm:$0xf]
  %v44 = vld [vmem:[%s1 + $0x34] sm:$0xf]
  %v45 = vld [vmem:[%s1 + $0x38] sm:$0xf]
  %v46 = vld [vmem:[%s1 + $0x3c] sm:$0xf]
  %v47 = vld [vmem:[%s1 + $0x40] sm:$0xf]
  %v48 = vld [vmem:[%s1 + $0x44] sm:$0xf]
  %v49 = vld [vmem:[%s1 + $0x48] sm:$0xf]
  %v50 = vld [vmem:[%s1 + $0x4c] sm:$0xf]
  %v51 = vld [vmem:[%s1 + $0x50] sm:$0xf]
  %v52 = vld [vmem:[%s1 + $0x54] sm:$0xf]
  %v53 = vld [vmem:[%s1 + $0x58] sm:$0xf]
  %v54 = vld [vmem:[%s1 + $0x5c] sm:$0xf]
  %v55 = vld [vmem:[%s1 + $0x60] sm:$0xf]
  %v56 = vld [vmem:[%s1 + $0x64] sm:$0xf]
  %v57 = vld [vmem:[%s1 + $0x68] sm:$0xf]
  %v58 = vld [vmem:[%s1 + $0x6c] sm:$0xf]
  %v59 = vld [vmem:[%s1 + $0x70] sm:$0xf]
  %v60 = vld [vmem:[%s1 + $0x74] sm:$0xf]
  %v61 = vld [vmem:[%s1 + $0x78] sm:$0xf]
  %v62 = vld [vmem:[%s1 + $0x7c] sm:$0xf]
  %v63 = vld [vmem:[%s1 + $0x80] sm:$0xf]
  %v64 = vld [vmem:[%s1 + $0x84] sm:$0xf]
  %v65 = vld [vmem:[%s1 + $0x88] sm:$0xf]
  %v66 = vld [vmem:[%s1 + $0x8c] sm:$0xf]
  %v67 = vld [vmem:[%s2] sm:$0xff]
  %v68 = vld [vmem:[%s2 + $0x8] sm:$0xff]
  %v69 = vld [vmem:[%s2 + $0x10] sm:$0xff]
  %v70 = vld [vmem:[%s2 + $0x18] sm:$0xff]
  %v71 = vld [vmem:[%s2 + $0x20] sm:$0xff]
  %v72 = vld [vmem:[%s2 + $0x28] sm:$0xff]
  %v73 = vld [vmem:[%s2 + $0x30] sm:$0xff]
  %v74 = vld [vmem:[%s2 + $0x38] sm:$0xff]
  %76 = vset.pattern.permute.xlu0 0
  %77 = vperm.xlu0 %76, %v67
  %v78 = vpop.permute.xlu0 %77
  %81 = vset.pattern.permute.xlu0 0
  %82 = vperm.xlu0 %81, %v68
  %v83 = vpop.permute.xlu0 %82
  %86 = vset.pattern.permute.xlu0 0
  %87 = vperm.xlu0 %86, %v69
  %v88 = vpop.permute.xlu0 %87
  %91 = vset.pattern.permute.xlu0 0
  %92 = vperm.xlu0 %91, %v70
  %v93 = vpop.permute.xlu0 %92
  %96 = vset.pattern.permute.xlu0 0
  %97 = vperm.xlu0 %96, %v71
  %v98 = vpop.permute.xlu0 %97
  %101 = vset.pattern.permute.xlu0 0
  %102 = vperm.xlu0 %101, %v72
  %v103 = vpop.permute.xlu0 %102
  %106 = vset.pattern.permute.xlu0 0
  %107 = vperm.xlu0 %106, %v73
  %v108 = vpop.permute.xlu0 %107
  %111 = vset.pattern.permute.xlu0 0
  %112 = vperm.xlu0 %111, %v74
  %v113 = vpop.permute.xlu0 %112
  %v131 = vunpack.c.l.b16 %v15
  %v132 = vunpack.c.h.b16 %v15
  %v133 = vunpack.c.l.b16 %v16
  %v134 = vunpack.c.l.b16 %v17
  %v135 = vunpack.c.h.b16 %v17
  %v136 = vunpack.c.l.b16 %v18
  %v137 = vunpack.c.l.b16 %v19
  %v138 = vunpack.c.h.b16 %v19
  %v139 = vunpack.c.l.b16 %v20
  %v140 = vunpack.c.l.b16 %v21
  %v141 = vunpack.c.h.b16 %v21
  %v142 = vunpack.c.l.b16 %v22
  %v143 = vunpack.c.l.b16 %v23
  %v144 = vunpack.c.h.b16 %v23
  %v145 = vunpack.c.l.b16 %v24
  %v146 = vunpack.c.l.b16 %v25
  %v147 = vunpack.c.h.b16 %v25
  %v148 = vunpack.c.l.b16 %v26
  %v149 = vunpack.c.l.b16 %v27
  %v150 = vunpack.c.h.b16 %v27
  %v151 = vunpack.c.l.b16 %v28
  %v152 = vunpack.c.l.b16 %v29
  %v153 = vunpack.c.h.b16 %v29
  %v154 = vunpack.c.l.b16 %v30
  %v155 = vpack.c.b16 %v134, %v131
  %v156 = vpack.c.b16 %v135, %v132
  %v157 = vpack.c.b16 %v136, %v133
  %v158 = vpack.c.b16 %v140, %v137
  %v159 = vpack.c.b16 %v141, %v138
  %v160 = vpack.c.b16 %v142, %v139
  %v161 = vpack.c.b16 %v146, %v143
  %v162 = vpack.c.b16 %v147, %v144
  %v163 = vpack.c.b16 %v148, %v145
  %v164 = vpack.c.b16 %v152, %v149
  %v165 = vpack.c.b16 %v153, %v150
  %v166 = vpack.c.b16 %v154, %v151
  %v211 = vunpack.c.l.b16 %v31
  %v212 = vunpack.c.l.b16 %v32
  %v213 = vunpack.c.l.b16 %v33
  %v214 = vunpack.c.l.b16 %v34
  %v215 = vunpack.c.l.b16 %v35
  %v216 = vunpack.c.l.b16 %v36
  %v217 = vunpack.c.l.b16 %v37
  %v218 = vunpack.c.l.b16 %v38
  %v219 = vunpack.c.l.b16 %v39
  %v220 = vunpack.c.l.b16 %v40
  %v221 = vunpack.c.l.b16 %v41
  %v222 = vunpack.c.l.b16 %v42
  %v223 = vunpack.c.l.b16 %v43
  %v224 = vunpack.c.l.b16 %v44
  %v225 = vunpack.c.l.b16 %v45
  %v226 = vunpack.c.l.b16 %v46
  %v227 = vunpack.c.l.b16 %v47
  %v228 = vunpack.c.l.b16 %v48
  %v229 = vunpack.c.l.b16 %v49
  %v230 = vunpack.c.l.b16 %v50
  %v231 = vunpack.c.l.b16 %v51
  %v232 = vunpack.c.l.b16 %v52
  %v233 = vunpack.c.l.b16 %v53
  %v234 = vunpack.c.l.b16 %v54
  %v235 = vunpack.c.l.b16 %v55
  %v236 = vunpack.c.l.b16 %v56
  %v237 = vunpack.c.l.b16 %v57
  %v238 = vunpack.c.l.b16 %v58
  %v239 = vunpack.c.l.b16 %v59
  %v240 = vunpack.c.l.b16 %v60
  %v241 = vunpack.c.l.b16 %v61
  %v242 = vunpack.c.l.b16 %v62
  %v243 = vunpack.c.l.b16 %v63
  %v244 = vunpack.c.l.b16 %v64
  %v245 = vunpack.c.l.b16 %v65
  %v246 = vunpack.c.l.b16 %v66
  %v247 = vpack.c.b16 %v212, %v211
  %v248 = vpack.c.b16 %v214, %v213
  %v249 = vpack.c.b16 %v216, %v215
  %v250 = vpack.c.b16 %v218, %v217
  %v251 = vpack.c.b16 %v220, %v219
  %v252 = vpack.c.b16 %v222, %v221
  %v253 = vpack.c.b16 %v224, %v223
  %v254 = vpack.c.b16 %v226, %v225
  %v255 = vpack.c.b16 %v228, %v227
  %v256 = vpack.c.b16 %v230, %v229
  %v257 = vpack.c.b16 %v232, %v231
  %v258 = vpack.c.b16 %v234, %v233
  %v259 = vpack.c.b16 %v236, %v235
  %v260 = vpack.c.b16 %v238, %v237
  %v261 = vpack.c.b16 %v240, %v239
  %v262 = vpack.c.b16 %v242, %v241
  %v263 = vpack.c.b16 %v244, %v243
  %v264 = vpack.c.b16 %v246, %v245
  %vm283 = vcmask 261120
  %v285 = vsel %vm283, %v157, 0
  %v288 = vsel %vm283, %v160, 0
  %v291 = vsel %vm283, %v163, 0
  %v294 = vsel %vm283, %v166, 0
  %296 = vmatprep.subr.bf16.mxu0 0
  %297 = vmatpush1.bf16.msra.mxu0 %v247
  %298 = vmatprep.subr.bf16.mxu0 0
  %299 = vmatpush1.bf16.msra.mxu0 %v248
  %300 = vmatprep.subr.bf16.mxu0 0
  %301 = vmatpush1.bf16.msra.mxu0 %v249
  %302 = vmatprep.subr.bf16.mxu0 0
  %303 = vmatpush1.bf16.msra.mxu0 %v250
  %304 = vmatprep.subr.bf16.mxu0 0
  %305 = vmatpush1.bf16.msra.mxu0 %v251
  %306 = vmatprep.subr.bf16.mxu0 0
  %307 = vmatpush1.bf16.msra.mxu0 %v252
  %308 = vmatprep.subr.bf16.mxu0 0
  %309 = vmatpush1.bf16.msra.mxu0 %v253
  %310 = vmatprep.subr.bf16.mxu0 0
  %311 = vmatpush1.bf16.msra.mxu0 %v254
  %312 = vmatprep.subr.bf16.mxu0 0
  %313 = vmatpush1.bf16.msra.mxu0 %v255
  %314 = vmatprep.subr.bf16.mxu0 0
  %315 = vmatpush1.bf16.msra.mxu0 %v256
  %316 = vmatprep.subr.bf16.mxu0 0
  %317 = vmatpush1.bf16.msra.mxu0 %v257
  %318 = vmatprep.subr.bf16.mxu0 0
  %319 = vmatpush1.bf16.msra.mxu0 %v258
  %320 = vmatprep.subr.bf16.mxu0 0
  %321 = vmatpush1.bf16.msra.mxu0 %v259
  %322 = vmatprep.subr.bf16.mxu0 0
  %323 = vmatpush1.bf16.msra.mxu0 %v260
  %324 = vmatprep.subr.bf16.mxu0 0
  %325 = vmatpush1.bf16.msra.mxu0 %v261
  %326 = vmatprep.subr.bf16.mxu0 0
  %327 = vmatpush1.bf16.msra.mxu0 %v262
  %328 = vmatprep.mubr.bf16.mxu0 %v156
  %329 = vmatmul.mubr.bf16.gmra.mrb[0].mxu0 %v155
  %v330 = vpop.f32.mrb[0].mxu0
  %v331 = vadd.f32 %v78, %v330
  %v332 = vpop.f32.mrb[0].mxu0
  %v333 = vpop.f32.mrb[0].mxu0
  %v334 = vadd.f32 %v83, %v333
  %v335 = vpop.f32.mrb[0].mxu0
  %336 = vmatprep.mubr.bf16.mxu0 %v159
  %337 = vmatmul.mubr.bf16.gmra.mrb[0].mxu0 %v158
  %v338 = vpop.f32.mrb[0].mxu0
  %v339 = vadd.f32 %v88, %v338
  %v340 = vpop.f32.mrb[0].mxu0
  %v341 = vpop.f32.mrb[0].mxu0
  %v342 = vadd.f32 %v93, %v341
  %v343 = vpop.f32.mrb[0].mxu0
  %344 = vmatprep.mubr.bf16.mxu0 %v162
  %345 = vmatmul.mubr.bf16.gmra.mrb[0].mxu0 %v161
  %v346 = vpop.f32.mrb[0].mxu0
  %v347 = vadd.f32 %v98, %v346
  %v348 = vpop.f32.mrb[0].mxu0
  %v349 = vpop.f32.mrb[0].mxu0
  %v350 = vadd.f32 %v103, %v349
  %v351 = vpop.f32.mrb[0].mxu0
  %352 = vmatprep.mubr.bf16.mxu0 %v165
  %353 = vmatmul.mubr.bf16.gmra.mrb[0].mxu0 %v164
  %v354 = vpop.f32.mrb[0].mxu0
  %v355 = vadd.f32 %v108, %v354
  %v356 = vpop.f32.mrb[0].mxu0
  %v357 = vpop.f32.mrb[0].mxu0
  %v358 = vadd.f32 %v113, %v357
  %v359 = vpop.f32.mrb[0].mxu0
  %360 = vdwg.mxu0
  %361 = vmatprep.subr.bf16.mxu0 0
  %362 = vmatpush1.bf16.msra.mxu0 %v263
  %363 = vmatprep.subr.bf16.mxu0 0
  %364 = vmatpush1.bf16.msra.mxu0 %v264
  %365 = vmatprep.subr.bf16.mxu0 0
  %366 = vmatpush1.bf16.msra.mxu0 0
  %367 = vmatprep.subr.bf16.mxu0 0
  %368 = vmatpush1.bf16.msra.mxu0 0
  %369 = vmatprep.subr.bf16.mxu0 0
  %370 = vmatpush1.bf16.msra.mxu0 0
  %371 = vmatprep.subr.bf16.mxu0 0
  %372 = vmatpush1.bf16.msra.mxu0 0
  %373 = vmatprep.subr.bf16.mxu0 0
  %374 = vmatpush1.bf16.msra.mxu0 0
  %375 = vmatprep.subr.bf16.mxu0 0
  %376 = vmatpush1.bf16.msra.mxu0 0
  %377 = vmatprep.subr.bf16.mxu0 0
  %378 = vmatpush1.bf16.msra.mxu0 0
  %379 = vmatprep.subr.bf16.mxu0 0
  %380 = vmatpush1.bf16.msra.mxu0 0
  %381 = vmatprep.subr.bf16.mxu0 0
  %382 = vmatpush1.bf16.msra.mxu0 0
  %383 = vmatprep.subr.bf16.mxu0 0
  %384 = vmatpush1.bf16.msra.mxu0 0
  %385 = vmatprep.subr.bf16.mxu0 0
  %386 = vmatpush1.bf16.msra.mxu0 0
  %387 = vmatprep.subr.bf16.mxu0 0
  %388 = vmatpush1.bf16.msra.mxu0 0
  %389 = vmatprep.subr.bf16.mxu0 0
  %390 = vmatpush1.bf16.msra.mxu0 0
  %391 = vmatprep.subr.bf16.mxu0 0
  %392 = vmatpush1.bf16.msra.mxu0 0
  %393 = vmatprep.mubr.bf16.mxu0 0
  %394 = vmatmul.mubr.bf16.gmra.mrb[0].mxu0 %v285
  %v395 = vpop.f32.mrb[0].mxu0
  %v396 = vadd.f32 %v331, %v395
  %v397 = vpop.f32.mrb[0].mxu0
  %v398 = vpop.f32.mrb[0].mxu0
  %v399 = vadd.f32 %v334, %v398
  %v400 = vpop.f32.mrb[0].mxu0
  %401 = vmatprep.mubr.bf16.mxu0 0
  %402 = vmatmul.mubr.bf16.gmra.mrb[0].mxu0 %v288
  %v403 = vpop.f32.mrb[0].mxu0
  %v404 = vadd.f32 %v339, %v403
  %v405 = vpop.f32.mrb[0].mxu0
  %v406 = vpop.f32.mrb[0].mxu0
  %v407 = vadd.f32 %v342, %v406
  %v408 = vpop.f32.mrb[0].mxu0
  %409 = vmatprep.mubr.bf16.mxu0 0
  %410 = vmatmul.mubr.bf16.gmra.mrb[0].mxu0 %v291
  %v411 = vpop.f32.mrb[0].mxu0
  %v412 = vadd.f32 %v347, %v411
  %v413 = vpop.f32.mrb[0].mxu0
  %v414 = vpop.f32.mrb[0].mxu0
  %v415 = vadd.f32 %v350, %v414
  %v416 = vpop.f32.mrb[0].mxu0
  %417 = vmatprep.mubr.bf16.mxu0 0
  %418 = vmatmul.mubr.bf16.gmra.mrb[0].mxu0 %v294
  %v419 = vpop.f32.mrb[0].mxu0
  %v420 = vadd.f32 %v355, %v419
  %v421 = vpop.f32.mrb[0].mxu0
  %v422 = vpop.f32.mrb[0].mxu0
  %v423 = vadd.f32 %v358, %v422
  %v424 = vpop.f32.mrb[0].mxu0
  %425 = vdwg.mxu0
  %v426 = vmax.f32 %v396, 0.0
  %v427 = vmax.f32 %v399, 0.0
  %v428 = vmax.f32 %v404, 0.0
  %v429 = vmax.f32 %v407, 0.0
  %v430 = vmax.f32 %v412, 0.0
  %v431 = vmax.f32 %v415, 0.0
  %v432 = vmax.f32 %v420, 0.0
  %v433 = vmax.f32 %v423, 0.0
  %v434 = vpack.c.bf16 %v427, %v426
  %v435 = vpack.c.bf16 %v429, %v428
  %v436 = vpack.c.bf16 %v431, %v430
  %v437 = vpack.c.bf16 %v433, %v432
  %v442 = vunpack.c.l.b16 %v434
  %v443 = vunpack.c.h.b16 %v434
  %v444 = vunpack.c.l.b16 %v435
  %v445 = vunpack.c.h.b16 %v435
  %v446 = vunpack.c.l.b16 %v436
  %v447 = vunpack.c.h.b16 %v436
  %v448 = vunpack.c.l.b16 %v437
  %v449 = vunpack.c.h.b16 %v437
  %v450 = vpack.c.b16 %v442, %v442
  %v451 = vpack.c.b16 %v443, %v443
  %v452 = vpack.c.b16 %v444, %v444
  %v453 = vpack.c.b16 %v445, %v445
  %v454 = vpack.c.b16 %v446, %v446
  %v455 = vpack.c.b16 %v447, %v447
  %v456 = vpack.c.b16 %v448, %v448
  %v457 = vpack.c.b16 %v449, %v449
  %vm466 = vcmask 257024
  %467 = vst.msk [vmem:[%s3] sm:$0xf] %vm466, %v450
  %468 = vst.msk [vmem:[%s3 + $0x4] sm:$0xf] %vm466, %v451
  %469 = vst.msk [vmem:[%s3 + $0x8] sm:$0xf] %vm466, %v452
  %470 = vst.msk [vmem:[%s3 + $0xc] sm:$0xf] %vm466, %v453
  %471 = vst.msk [vmem:[%s3 + $0x10] sm:$0xf] %vm466, %v454
  %472 = vst.msk [vmem:[%s3 + $0x14] sm:$0xf] %vm466, %v455
  %473 = vst.msk [vmem:[%s3 + $0x18] sm:$0xf] %vm466, %v456
  %474 = vst.msk [vmem:[%s3 + $0x1c] sm:$0xf] %vm466, %v457
  // Predicated region
  $region14: #{resnet_forward.17} parent=0 // pred_check
    _
  $region15: #{resnet_forward.17} parent=0 // pred_check_branch
    %476 = sbr.rel (0) target = $region17
  $region16: #{resnet_forward.17} parent=0 // pred_region
    _
  $region17: #{resnet_forward.17} parent=0 // pred_fallthru
    _
  // Predicated region
  $region18: #{resnet_forward.17} parent=0 // pred_check
    _
  $region19: #{resnet_forward.17} parent=0 // pred_check_branch
    %478 = sbr.rel (0) target = $region21
  $region20: #{resnet_forward.17} parent=0 // pred_region
    _
  $region21: #{resnet_forward.17} parent=0 // pred_fallthru
    _

// kernel: resnet_forward.19
$region0: #{resnet_forward.19}
  #allocation0 [shape = 'u32[]', space=smem, size = 0x4, offset = 0x4, fixed_abs, tag = 'smem constant byte address 0x4 - core index']
  #allocation1 [shape = 'u32[144,128]{1,0:T(1,128)}', space=vmem, size = 0x12000, scoped, tag = 'internal scratch']
  %s0 = inlined_call_operand.vmem [shape: bf16[64,32], index: 0, kind: input, shape index: {}]
  %s1 = inlined_call_operand.vmem [shape: bf16[32,2], index: 1, kind: input, shape index: {}]
  %s2 = inlined_call_operand.vmem [shape: bf16[10,64], index: 2, kind: input, shape index: {}]
  %s3 = inlined_call_operand.vmem [shape: f32[10,1], index: 3, kind: input, shape index: {}]
  %s4 = inlined_call_operand.vmem [shape: f32[10,2], index: 4, kind: output, shape index: {}]
  %s5 = sld [smem:[#allocation0]]
  $region26: #{resnet_forward.19} parent=0
    _
  %s7 = ssub.s32 1, %s5
  %s8 = scalar_select 0, %s7, %s5
  // Predicated region
  $region2: #{resnet_forward.19} parent=0 // pred_check
    _
  $region3: #{resnet_forward.19} parent=0 // pred_check_branch
    %10 = sbr.rel (0) target = $region5
  $region4: #{resnet_forward.19} parent=0 // pred_region
    _
  $region5: #{resnet_forward.19} parent=0 // pred_fallthru
    _
  // Predicated region
  $region6: #{resnet_forward.19} parent=0 // pred_check
    _
  $region7: #{resnet_forward.19} parent=0 // pred_check_branch
    %12 = sbr.rel (0) target = $region9
  $region8: #{resnet_forward.19} parent=0 // pred_region
    _
  $region9: #{resnet_forward.19} parent=0 // pred_fallthru
    _
  // Predicated region
  $region10: #{resnet_forward.19} parent=0 // pred_check
    _
  $region11: #{resnet_forward.19} parent=0 // pred_check_branch
    %14 = sbr.rel (0) target = $region13
  $region12: #{resnet_forward.19} parent=0 // pred_region
    _
  $region13: #{resnet_forward.19} parent=0 // pred_fallthru
    _
  // Predicated region
  $region14: #{resnet_forward.19} parent=0 // pred_check
    _
  $region15: #{resnet_forward.19} parent=0 // pred_check_branch
    %16 = sbr.rel (0) target = $region17
  $region16: #{resnet_forward.19} parent=0 // pred_region
    _
  $region17: #{resnet_forward.19} parent=0 // pred_fallthru
    _
  %v18 = vld [vmem:[%s0] sm:$0xf]
  %v19 = vld [vmem:[%s0 + $0x4] sm:$0xf]
  %v20 = vld [vmem:[%s0 + $0x8] sm:$0xf]
  %v21 = vld [vmem:[%s0 + $0xc] sm:$0xf]
  %v22 = vld [vmem:[%s0 + $0x10] sm:$0xf]
  %v23 = vld [vmem:[%s0 + $0x14] sm:$0xf]
  %v24 = vld [vmem:[%s0 + $0x18] sm:$0xf]
  %v25 = vld [vmem:[%s0 + $0x1c] sm:$0xf]
  %v26 = vld [vmem:[%s1] sm:$0xf]
  %v27 = vld [vmem:[%s1 + $0x4] sm:$0xf]
  %v28 = vld [vmem:[%s1 + $0x8] sm:$0xf]
  %v29 = vld [vmem:[%s1 + $0xc] sm:$0xf]
  %v38 = vunpack.c.l.b16 %v18
  %v39 = vunpack.c.l.b16 %v19
  %v40 = vunpack.c.l.b16 %v20
  %v41 = vunpack.c.l.b16 %v21
  %v42 = vunpack.c.l.b16 %v22
  %v43 = vunpack.c.l.b16 %v23
  %v44 = vunpack.c.l.b16 %v24
  %v45 = vunpack.c.l.b16 %v25
  %v46 = vpack.c.b16 %v39, %v38
  %v47 = vpack.c.b16 %v41, %v40
  %v48 = vpack.c.b16 %v43, %v42
  %v49 = vpack.c.b16 %v45, %v44
  %v54 = vunpack.c.l.b16 %v26
  %v55 = vunpack.c.l.b16 %v27
  %v56 = vunpack.c.l.b16 %v28
  %v57 = vunpack.c.l.b16 %v29
  %v58 = vpack.c.b16 %v55, %v54
  %v59 = vpack.c.b16 %v57, %v56
  %vm62 = vcmask 261120
  %v64 = vsel %vm62, %v46, 0
  %v67 = vsel %vm62, %v47, 0
  %v70 = vsel %vm62, %v48, 0
  %v73 = vsel %vm62, %v49, 0
  %75 = vmatprep.subr.bf16.mxu0 0
  %76 = vmatpush1.bf16.msra.mxu0 %v58
  %77 = vmatprep.subr.bf16.mxu0 0
  %78 = vmatpush1.bf16.msra.mxu0 %v59
  %79 = vmatprep.subr.bf16.mxu0 0
  %80 = vmatpush1.bf16.msra.mxu0 0
  %81 = vmatprep.subr.bf16.mxu0 0
  %82 = vmatpush1.bf16.msra.mxu0 0
  %83 = vmatprep.subr.bf16.mxu0 0
  %84 = vmatpush1.bf16.msra.mxu0 0
  %85 = vmatprep.subr.bf16.mxu0 0
  %86 = vmatpush1.bf16.msra.mxu0 0
  %87 = vmatprep.subr.bf16.mxu0 0
  %88 = vmatpush1.bf16.msra.mxu0 0
  %89 = vmatprep.subr.bf16.mxu0 0
  %90 = vmatpush1.bf16.msra.mxu0 0
  %91 = vmatprep.subr.bf16.mxu0 0
  %92 = vmatpush1.bf16.msra.mxu0 0
  %93 = vmatprep.subr.bf16.mxu0 0
  %94 = vmatpush1.bf16.msra.mxu0 0
  %95 = vmatprep.subr.bf16.mxu0 0
  %96 = vmatpush1.bf16.msra.mxu0 0
  %97 = vmatprep.subr.bf16.mxu0 0
  %98 = vmatpush1.bf16.msra.mxu0 0
  %99 = vmatprep.subr.bf16.mxu0 0
  %100 = vmatpush1.bf16.msra.mxu0 0
  %101 = vmatprep.subr.bf16.mxu0 0
  %102 = vmatpush1.bf16.msra.mxu0 0
  %103 = vmatprep.subr.bf16.mxu0 0
  %104 = vmatpush1.bf16.msra.mxu0 0
  %105 = vmatprep.subr.bf16.mxu0 0
  %106 = vmatpush1.bf16.msra.mxu0 0
  %107 = vmatprep.mubr.bf16.mxu0 0
  %108 = vmatmul.mubr.bf16.gmra.mrb[0].mxu0 %v64
  %v109 = vpop.f32.mrb[0].mxu0
  %v110 = vadd.f32 0.0, %v109
  %v111 = vpop.f32.mrb[0].mxu0
  %v112 = vpop.f32.mrb[0].mxu0
  %v113 = vadd.f32 0.0, %v112
  %v114 = vpop.f32.mrb[0].mxu0
  %115 = vmatprep.mubr.bf16.mxu0 0
  %116 = vmatmul.mubr.bf16.gmra.mrb[0].mxu0 %v67
  %v117 = vpop.f32.mrb[0].mxu0
  %v118 = vadd.f32 0.0, %v117
  %v119 = vpop.f32.mrb[0].mxu0
  %v120 = vpop.f32.mrb[0].mxu0
  %v121 = vadd.f32 0.0, %v120
  %v122 = vpop.f32.mrb[0].mxu0
  %123 = vmatprep.mubr.bf16.mxu0 0
  %124 = vmatmul.mubr.bf16.gmra.mrb[0].mxu0 %v70
  %v125 = vpop.f32.mrb[0].mxu0
  %v126 = vadd.f32 0.0, %v125
  %v127 = vpop.f32.mrb[0].mxu0
  %v128 = vpop.f32.mrb[0].mxu0
  %v129 = vadd.f32 0.0, %v128
  %v130 = vpop.f32.mrb[0].mxu0
  %131 = vmatprep.mubr.bf16.mxu0 0
  %132 = vmatmul.mubr.bf16.gmra.mrb[0].mxu0 %v73
  %v133 = vpop.f32.mrb[0].mxu0
  %v134 = vadd.f32 0.0, %v133
  %v135 = vpop.f32.mrb[0].mxu0
  %v136 = vpop.f32.mrb[0].mxu0
  %v137 = vadd.f32 0.0, %v136
  %v138 = vpop.f32.mrb[0].mxu0
  %139 = vdwg.mxu0
  %v140 = vld [vmem:[%s2] sm:$0xf]
  %v141 = vld [vmem:[%s2 + $0x4] sm:$0x1]
  %v142 = vpack.c.bf16 %v113, %v110
  %v143 = vpack.c.bf16 %v121, %v118
  %v144 = vpack.c.bf16 %v129, %v126
  %v145 = vpack.c.bf16 %v137, %v134
  %v146 = vld [vmem:[%s3] sm:$0xff]
  %v147 = vld [vmem:[%s3 + $0x8] sm:$0x3]
  %149 = vset.pattern.permute.xlu0 0
  %150 = vperm.xlu0 %149, %v146
  %v151 = vpop.permute.xlu0 %150
  %154 = vset.pattern.permute.xlu0 0
  %155 = vperm.xlu0 %154, %v147
  %v156 = vpop.permute.xlu0 %155
  %v160 = vunpack.c.l.b16 %v140
  %v161 = vunpack.c.l.b16 %v141
  %v162 = vpack.c.b16 %v161, %v160
  %vm163 = vcmask 523264
  %v165 = vsel %vm163, %v162, 0
  %167 = vmatprep.subr.bf16.mxu0 0
  %168 = vmatpush1.bf16.msra.mxu0 %v142
  %169 = vmatprep.subr.bf16.mxu0 0
  %170 = vmatpush1.bf16.msra.mxu0 %v143
  %171 = vmatprep.subr.bf16.mxu0 0
  %172 = vmatpush1.bf16.msra.mxu0 %v144
  %173 = vmatprep.subr.bf16.mxu0 0
  %174 = vmatpush1.bf16.msra.mxu0 %v145
  %175 = vmatprep.subr.bf16.mxu0 0
  %176 = vmatpush1.bf16.msra.mxu0 0
  %177 = vmatprep.subr.bf16.mxu0 0
  %178 = vmatpush1.bf16.msra.mxu0 0
  %179 = vmatprep.subr.bf16.mxu0 0
  %180 = vmatpush1.bf16.msra.mxu0 0
  %181 = vmatprep.subr.bf16.mxu0 0
  %182 = vmatpush1.bf16.msra.mxu0 0
  %183 = vmatprep.subr.bf16.mxu0 0
  %184 = vmatpush1.bf16.msra.mxu0 0
  %185 = vmatprep.subr.bf16.mxu0 0
  %186 = vmatpush1.bf16.msra.mxu0 0
  %187 = vmatprep.subr.bf16.mxu0 0
  %188 = vmatpush1.bf16.msra.mxu0 0
  %189 = vmatprep.subr.bf16.mxu0 0
  %190 = vmatpush1.bf16.msra.mxu0 0
  %191 = vmatprep.subr.bf16.mxu0 0
  %192 = vmatpush1.bf16.msra.mxu0 0
  %193 = vmatprep.subr.bf16.mxu0 0
  %194 = vmatpush1.bf16.msra.mxu0 0
  %195 = vmatprep.subr.bf16.mxu0 0
  %196 = vmatpush1.bf16.msra.mxu0 0
  %197 = vmatprep.subr.bf16.mxu0 0
  %198 = vmatpush1.bf16.msra.mxu0 0
  %199 = vmatprep.mubr.bf16.mxu0 0
  %200 = vmatmul.mubr.bf16.gmra.mrb[0].mxu0 %v165
  %v201 = vpop.f32.mrb[0].mxu0
  %v202 = vadd.f32 %v151, %v201
  %v203 = vpop.f32.mrb[0].mxu0
  %v204 = vpop.f32.mrb[0].mxu0
  %v205 = vadd.f32 %v156, %v204
  %v206 = vpop.f32.mrb[0].mxu0
  %207 = vdwg.mxu0
  %vm208 = vcmask 15360
  %209 = vst.msk [vmem:[%s4] sm:$0xff] %vm208, %v202
  %vm210 = vcmask 9216
  %211 = vst.msk [vmem:[%s4 + $0x8] sm:$0x3] %vm210, %v205
  // Predicated region
  $region18: #{resnet_forward.19} parent=0 // pred_check
    _
  $region19: #{resnet_forward.19} parent=0 // pred_check_branch
    %213 = sbr.rel (0) target = $region21
  $region20: #{resnet_forward.19} parent=0 // pred_region
    _
  $region21: #{resnet_forward.19} parent=0 // pred_fallthru
    _
  // Predicated region
  $region22: #{resnet_forward.19} parent=0 // pred_check
    _
  $region23: #{resnet_forward.19} parent=0 // pred_check_branch
    %215 = sbr.rel (0) target = $region25
  $region24: #{resnet_forward.19} parent=0 // pred_region
    _
  $region25: #{resnet_forward.19} parent=0 // pred_fallthru
    _

// kernel: resnet_forward.18
$region0: #{resnet_forward.18}
  #allocation0 [shape = 'u32[]', space=smem, size = 0x4, offset = 0x4, fixed_abs, tag = 'smem constant byte address 0x4 - core index']
  #allocation1 [shape = 'u32[144,128]{1,0:T(1,128)}', space=vmem, size = 0x12000, scoped, tag = 'internal scratch']
  %s0 = inlined_call_operand.vmem [shape: bf16[64,576], index: 0, kind: input, shape index: {}]
  %s1 = inlined_call_operand.vmem [shape: bf16[576,32], index: 1, kind: input, shape index: {}]
  %s2 = inlined_call_operand.vmem [shape: f32[64,1], index: 2, kind: input, shape index: {}]
  %s3 = inlined_call_operand.vmem [shape: bf16[64,32], index: 3, kind: input, shape index: {}]
  %s4 = inlined_call_operand.vmem [shape: bf16[32,32], index: 4, kind: input, shape index: {}]
  %s5 = inlined_call_operand.vmem [shape: bf16[64,32], index: 5, kind: output, shape index: {}]
  %s6 = sld [smem:[#allocation0]]
  $region30: #{resnet_forward.18} parent=0
    _
  %s8 = ssub.s32 1, %s6
  %s9 = scalar_select 0, %s8, %s6
  // Predicated region
  $region2: #{resnet_forward.18} parent=0 // pred_check
    _
  $region3: #{resnet_forward.18} parent=0 // pred_check_branch
    %11 = sbr.rel (0) target = $region5
  $region4: #{resnet_forward.18} parent=0 // pred_region
    _
  $region5: #{resnet_forward.18} parent=0 // pred_fallthru
    _
  // Predicated region
  $region6: #{resnet_forward.18} parent=0 // pred_check
    _
  $region7: #{resnet_forward.18} parent=0 // pred_check_branch
    %13 = sbr.rel (0) target = $region9
  $region8: #{resnet_forward.18} parent=0 // pred_region
    _
  $region9: #{resnet_forward.18} parent=0 // pred_fallthru
    _
  // Predicated region
  $region10: #{resnet_forward.18} parent=0 // pred_check
    _
  $region11: #{resnet_forward.18} parent=0 // pred_check_branch
    %15 = sbr.rel (0) target = $region13
  $region12: #{resnet_forward.18} parent=0 // pred_region
    _
  $region13: #{resnet_forward.18} parent=0 // pred_fallthru
    _
  // Predicated region
  $region14: #{resnet_forward.18} parent=0 // pred_check
    _
  $region15: #{resnet_forward.18} parent=0 // pred_check_branch
    %17 = sbr.rel (0) target = $region17
  $region16: #{resnet_forward.18} parent=0 // pred_region
    _
  $region17: #{resnet_forward.18} parent=0 // pred_fallthru
    _
  // Predicated region
  $region18: #{resnet_forward.18} parent=0 // pred_check
    _
  $region19: #{resnet_forward.18} parent=0 // pred_check_branch
    %19 = sbr.rel (0) target = $region21
  $region20: #{resnet_forward.18} parent=0 // pred_region
    _
  $region21: #{resnet_forward.18} parent=0 // pred_fallthru
    _
  %v21 = vld [vmem:[%s0] sm:$0xff]
  %v22 = vld [vmem:[%s0 + $0x8] sm:$0xff]
  %v23 = vld [vmem:[%s0 + $0x10] sm:$0xf]
  %v24 = vld [vmem:[%s0 + $0x14] sm:$0xff]
  %v25 = vld [vmem:[%s0 + $0x1c] sm:$0xff]
  %v26 = vld [vmem:[%s0 + $0x24] sm:$0xf]
  %v27 = vld [vmem:[%s0 + $0x28] sm:$0xff]
  %v28 = vld [vmem:[%s0 + $0x30] sm:$0xff]
  %v29 = vld [vmem:[%s0 + $0x38] sm:$0xf]
  %v30 = vld [vmem:[%s0 + $0x3c] sm:$0xff]
  %v31 = vld [vmem:[%s0 + $0x44] sm:$0xff]
  %v32 = vld [vmem:[%s0 + $0x4c] sm:$0xf]
  %v33 = vld [vmem:[%s0 + $0x50] sm:$0xff]
  %v34 = vld [vmem:[%s0 + $0x58] sm:$0xff]
  %v35 = vld [vmem:[%s0 + $0x60] sm:$0xf]
  %v36 = vld [vmem:[%s0 + $0x64] sm:$0xff]
  %v37 = vld [vmem:[%s0 + $0x6c] sm:$0xff]
  %v38 = vld [vmem:[%s0 + $0x74] sm:$0xf]
  %v39 = vld [vmem:[%s0 + $0x78] sm:$0xff]
  %v40 = vld [vmem:[%s0 + $0x80] sm:$0xff]
  %v41 = vld [vmem:[%s0 + $0x88] sm:$0xf]
  %v42 = vld [vmem:[%s0 + $0x8c] sm:$0xff]
  %v43 = vld [vmem:[%s0 + $0x94] sm:$0xff]
  %v44 = vld [vmem:[%s0 + $0x9c] sm:$0xf]
  %v45 = vld [vmem:[%s1] sm:$0xf]
  %v46 = vld [vmem:[%s1 + $0x4] sm:$0xf]
  %v47 = vld [vmem:[%s1 + $0x8] sm:$0xf]
  %v48 = vld [vmem:[%s1 + $0xc] sm:$0xf]
  %v49 = vld [vmem:[%s1 + $0x10] sm:$0xf]
  %v50 = vld [vmem:[%s1 + $0x14] sm:$0xf]
  %v51 = vld [vmem:[%s1 + $0x18] sm:$0xf]
  %v52 = vld [vmem:[%s1 + $0x1c] sm:$0xf]
  %v53 = vld [vmem:[%s1 + $0x20] sm:$0xf]
  %v54 = vld [vmem:[%s1 + $0x24] sm:$0xf]
  %v55 = vld [vmem:[%s1 + $0x28] sm:$0xf]
  %v56 = vld [vmem:[%s1 + $0x2c] sm:$0xf]
  %v57 = vld [vmem:[%s1 + $0x30] sm:$0xf]
  %v58 = vld [vmem:[%s1 + $0x34] sm:$0xf]
  %v59 = vld [vmem:[%s1 + $0x38] sm:$0xf]
  %v60 = vld [vmem:[%s1 + $0x3c] sm:$0xf]
  %v61 = vld [vmem:[%s1 + $0x40] sm:$0xf]
  %v62 = vld [vmem:[%s1 + $0x44] sm:$0xf]
  %v63 = vld [vmem:[%s1 + $0x48] sm:$0xf]
  %v64 = vld [vmem:[%s1 + $0x4c] sm:$0xf]
  %v65 = vld [vmem:[%s1 + $0x50] sm:$0xf]
  %v66 = vld [vmem:[%s1 + $0x54] sm:$0xf]
  %v67 = vld [vmem:[%s1 + $0x58] sm:$0xf]
  %v68 = vld [vmem:[%s1 + $0x5c] sm:$0xf]
  %v69 = vld [vmem:[%s1 + $0x60] sm:$0xf]
  %v70 = vld [vmem:[%s1 + $0x64] sm:$0xf]
  %v71 = vld [vmem:[%s1 + $0x68] sm:$0xf]
  %v72 = vld [vmem:[%s1 + $0x6c] sm:$0xf]
  %v73 = vld [vmem:[%s1 + $0x70] sm:$0xf]
  %v74 = vld [vmem:[%s1 + $0x74] sm:$0xf]
  %v75 = vld [vmem:[%s1 + $0x78] sm:$0xf]
  %v76 = vld [vmem:[%s1 + $0x7c] sm:$0xf]
  %v77 = vld [vmem:[%s1 + $0x80] sm:$0xf]
  %v78 = vld [vmem:[%s1 + $0x84] sm:$0xf]
  %v79 = vld [vmem:[%s1 + $0x88] sm:$0xf]
  %v80 = vld [vmem:[%s1 + $0x8c] sm:$0xf]
  %v81 = vld [vmem:[%s1 + $0x90] sm:$0xf]
  %v82 = vld [vmem:[%s1 + $0x94] sm:$0xf]
  %v83 = vld [vmem:[%s1 + $0x98] sm:$0xf]
  %v84 = vld [vmem:[%s1 + $0x9c] sm:$0xf]
  %v85 = vld [vmem:[%s1 + $0xa0] sm:$0xf]
  %v86 = vld [vmem:[%s1 + $0xa4] sm:$0xf]
  %v87 = vld [vmem:[%s1 + $0xa8] sm:$0xf]
  %v88 = vld [vmem:[%s1 + $0xac] sm:$0xf]
  %v89 = vld [vmem:[%s1 + $0xb0] sm:$0xf]
  %v90 = vld [vmem:[%s1 + $0xb4] sm:$0xf]
  %v91 = vld [vmem:[%s1 + $0xb8] sm:$0xf]
  %v92 = vld [vmem:[%s1 + $0xbc] sm:$0xf]
  %v93 = vld [vmem:[%s1 + $0xc0] sm:$0xf]
  %v94 = vld [vmem:[%s1 + $0xc4] sm:$0xf]
  %v95 = vld [vmem:[%s1 + $0xc8] sm:$0xf]
  %v96 = vld [vmem:[%s1 + $0xcc] sm:$0xf]
  %v97 = vld [vmem:[%s1 + $0xd0] sm:$0xf]
  %v98 = vld [vmem:[%s1 + $0xd4] sm:$0xf]
  %v99 = vld [vmem:[%s1 + $0xd8] sm:$0xf]
  %v100 = vld [vmem:[%s1 + $0xdc] sm:$0xf]
  %v101 = vld [vmem:[%s1 + $0xe0] sm:$0xf]
  %v102 = vld [vmem:[%s1 + $0xe4] sm:$0xf]
  %v103 = vld [vmem:[%s1 + $0xe8] sm:$0xf]
  %v104 = vld [vmem:[%s1 + $0xec] sm:$0xf]
  %v105 = vld [vmem:[%s1 + $0xf0] sm:$0xf]
  %v106 = vld [vmem:[%s1 + $0xf4] sm:$0xf]
  %v107 = vld [vmem:[%s1 + $0xf8] sm:$0xf]
  %v108 = vld [vmem:[%s1 + $0xfc] sm:$0xf]
  %v109 = vld [vmem:[%s1 + $0x100] sm:$0xf]
  %v110 = vld [vmem:[%s1 + $0x104] sm:$0xf]
  %v111 = vld [vmem:[%s1 + $0x108] sm:$0xf]
  %v112 = vld [vmem:[%s1 + $0x10c] sm:$0xf]
  %v113 = vld [vmem:[%s1 + $0x110] sm:$0xf]
  %v114 = vld [vmem:[%s1 + $0x114] sm:$0xf]
  %v115 = vld [vmem:[%s1 + $0x118] sm:$0xf]
  %v116 = vld [vmem:[%s1 + $0x11c] sm:$0xf]
  %v117 = vld [vmem:[%s3] sm:$0xf]
  %v118 = vld [vmem:[%s3 + $0x4] sm:$0xf]
  %v119 = vld [vmem:[%s3 + $0x8] sm:$0xf]
  %v120 = vld [vmem:[%s3 + $0xc] sm:$0xf]
  %v121 = vld [vmem:[%s3 + $0x10] sm:$0xf]
  %v122 = vld [vmem:[%s3 + $0x14] sm:$0xf]
  %v123 = vld [vmem:[%s3 + $0x18] sm:$0xf]
  %v124 = vld [vmem:[%s3 + $0x1c] sm:$0xf]
  %v125 = vld [vmem:[%s4] sm:$0xf]
  %v126 = vld [vmem:[%s4 + $0x4] sm:$0xf]
  %v127 = vld [vmem:[%s4 + $0x8] sm:$0xf]
  %v128 = vld [vmem:[%s4 + $0xc] sm:$0xf]
  %v137 = vunpack.c.l.b16 %v117
  %v138 = vunpack.c.l.b16 %v118
  %v139 = vunpack.c.l.b16 %v119
  %v140 = vunpack.c.l.b16 %v120
  %v141 = vunpack.c.l.b16 %v121
  %v142 = vunpack.c.l.b16 %v122
  %v143 = vunpack.c.l.b16 %v123
  %v144 = vunpack.c.l.b16 %v124
  %v145 = vpack.c.b16 %v138, %v137
  %v146 = vpack.c.b16 %v140, %v139
  %v147 = vpack.c.b16 %v142, %v141
  %v148 = vpack.c.b16 %v144, %v143
  %v153 = vunpack.c.l.b16 %v125
  %v154 = vunpack.c.l.b16 %v126
  %v155 = vunpack.c.l.b16 %v127
  %v156 = vunpack.c.l.b16 %v128
  %v157 = vpack.c.b16 %v154, %v153
  %v158 = vpack.c.b16 %v156, %v155
  %vm161 = vcmask 261120
  %v163 = vsel %vm161, %v145, 0
  %v166 = vsel %vm161, %v146, 0
  %v169 = vsel %vm161, %v147, 0
  %v172 = vsel %vm161, %v148, 0
  %174 = vmatprep.subr.bf16.mxu0 0
  %175 = vmatpush1.bf16.msra.mxu0 %v157
  %176 = vmatprep.subr.bf16.mxu0 0
  %177 = vmatpush1.bf16.msra.mxu0 %v158
  %178 = vmatprep.subr.bf16.mxu0 0
  %179 = vmatpush1.bf16.msra.mxu0 0
  %180 = vmatprep.subr.bf16.mxu0 0
  %181 = vmatpush1.bf16.msra.mxu0 0
  %182 = vmatprep.subr.bf16.mxu0 0
  %183 = vmatpush1.bf16.msra.mxu0 0
  %184 = vmatprep.subr.bf16.mxu0 0
  %185 = vmatpush1.bf16.msra.mxu0 0
  %186 = vmatprep.subr.bf16.mxu0 0
  %187 = vmatpush1.bf16.msra.mxu0 0
  %188 = vmatprep.subr.bf16.mxu0 0
  %189 = vmatpush1.bf16.msra.mxu0 0
  %190 = vmatprep.subr.bf16.mxu0 0
  %191 = vmatpush1.bf16.msra.mxu0 0
  %192 = vmatprep.subr.bf16.mxu0 0
  %193 = vmatpush1.bf16.msra.mxu0 0
  %194 = vmatprep.subr.bf16.mxu0 0
  %195 = vmatpush1.bf16.msra.mxu0 0
  %196 = vmatprep.subr.bf16.mxu0 0
  %197 = vmatpush1.bf16.msra.mxu0 0
  %198 = vmatprep.subr.bf16.mxu0 0
  %199 = vmatpush1.bf16.msra.mxu0 0
  %200 = vmatprep.subr.bf16.mxu0 0
  %201 = vmatpush1.bf16.msra.mxu0 0
  %202 = vmatprep.subr.bf16.mxu0 0
  %203 = vmatpush1.bf16.msra.mxu0 0
  %204 = vmatprep.subr.bf16.mxu0 0
  %205 = vmatpush1.bf16.msra.mxu0 0
  %206 = vmatprep.mubr.bf16.mxu0 0
  %207 = vmatmul.mubr.bf16.gmra.mrb[0].mxu0 %v163
  %v208 = vpop.f32.mrb[0].mxu0
  %v209 = vadd.f32 0.0, %v208
  %v210 = vpop.f32.mrb[0].mxu0
  %v211 = vpop.f32.mrb[0].mxu0
  %v212 = vadd.f32 0.0, %v211
  %v213 = vpop.f32.mrb[0].mxu0
  %214 = vmatprep.mubr.bf16.mxu0 0
  %215 = vmatmul.mubr.bf16.gmra.mrb[0].mxu0 %v166
  %v216 = vpop.f32.mrb[0].mxu0
  %v217 = vadd.f32 0.0, %v216
  %v218 = vpop.f32.mrb[0].mxu0
  %v219 = vpop.f32.mrb[0].mxu0
  %v220 = vadd.f32 0.0, %v219
  %v221 = vpop.f32.mrb[0].mxu0
  %222 = vmatprep.mubr.bf16.mxu0 0
  %223 = vmatmul.mubr.bf16.gmra.mrb[0].mxu0 %v169
  %v224 = vpop.f32.mrb[0].mxu0
  %v225 = vadd.f32 0.0, %v224
  %v226 = vpop.f32.mrb[0].mxu0
  %v227 = vpop.f32.mrb[0].mxu0
  %v228 = vadd.f32 0.0, %v227
  %v229 = vpop.f32.mrb[0].mxu0
  %230 = vmatprep.mubr.bf16.mxu0 0
  %231 = vmatmul.mubr.bf16.gmra.mrb[0].mxu0 %v172
  %v232 = vpop.f32.mrb[0].mxu0
  %v233 = vadd.f32 0.0, %v232
  %v234 = vpop.f32.mrb[0].mxu0
  %v235 = vpop.f32.mrb[0].mxu0
  %v236 = vadd.f32 0.0, %v235
  %v237 = vpop.f32.mrb[0].mxu0
  %238 = vdwg.mxu0
  %v263 = vunpack.c.l.b16 %v21
  %v264 = vunpack.c.h.b16 %v21
  %v265 = vunpack.c.l.b16 %v22
  %v266 = vunpack.c.h.b16 %v22
  %v267 = vunpack.c.l.b16 %v23
  %v268 = vunpack.c.l.b16 %v24
  %v269 = vunpack.c.h.b16 %v24
  %v270 = vunpack.c.l.b16 %v25
  %v271 = vunpack.c.h.b16 %v25
  %v272 = vunpack.c.l.b16 %v26
  %v273 = vunpack.c.l.b16 %v27
  %v274 = vunpack.c.h.b16 %v27
  %v275 = vunpack.c.l.b16 %v28
  %v276 = vunpack.c.h.b16 %v28
  %v277 = vunpack.c.l.b16 %v29
  %v278 = vunpack.c.l.b16 %v30
  %v279 = vunpack.c.h.b16 %v30
  %v280 = vunpack.c.l.b16 %v31
  %v281 = vunpack.c.h.b16 %v31
  %v282 = vunpack.c.l.b16 %v32
  %v283 = vunpack.c.l.b16 %v33
  %v284 = vunpack.c.h.b16 %v33
  %v285 = vunpack.c.l.b16 %v34
  %v286 = vunpack.c.h.b16 %v34
  %v287 = vunpack.c.l.b16 %v35
  %v288 = vunpack.c.l.b16 %v36
  %v289 = vunpack.c.h.b16 %v36
  %v290 = vunpack.c.l.b16 %v37
  %v291 = vunpack.c.h.b16 %v37
  %v292 = vunpack.c.l.b16 %v38
  %v293 = vunpack.c.l.b16 %v39
  %v294 = vunpack.c.h.b16 %v39
  %v295 = vunpack.c.l.b16 %v40
  %v296 = vunpack.c.h.b16 %v40
  %v297 = vunpack.c.l.b16 %v41
  %v298 = vunpack.c.l.b16 %v42
  %v299 = vunpack.c.h.b16 %v42
  %v300 = vunpack.c.l.b16 %v43
  %v301 = vunpack.c.h.b16 %v43
  %v302 = vunpack.c.l.b16 %v44
  %v303 = vpack.c.b16 %v268, %v263
  %v304 = vpack.c.b16 %v269, %v264
  %v305 = vpack.c.b16 %v270, %v265
  %v306 = vpack.c.b16 %v271, %v266
  %v307 = vpack.c.b16 %v272, %v267
  %v308 = vpack.c.b16 %v278, %v273
  %v309 = vpack.c.b16 %v279, %v274
  %v310 = vpack.c.b16 %v280, %v275
  %v311 = vpack.c.b16 %v281, %v276
  %v312 = vpack.c.b16 %v282, %v277
  %v313 = vpack.c.b16 %v288, %v283
  %v314 = vpack.c.b16 %v289, %v284
  %v315 = vpack.c.b16 %v290, %v285
  %v316 = vpack.c.b16 %v291, %v286
  %v317 = vpack.c.b16 %v292, %v287
  %v318 = vpack.c.b16 %v298, %v293
  %v319 = vpack.c.b16 %v299, %v294
  %v320 = vpack.c.b16 %v300, %v295
  %v321 = vpack.c.b16 %v301, %v296
  %v322 = vpack.c.b16 %v302, %v297
  %v411 = vunpack.c.l.b16 %v45
  %v412 = vunpack.c.l.b16 %v46
  %v413 = vunpack.c.l.b16 %v47
  %v414 = vunpack.c.l.b16 %v48
  %v415 = vunpack.c.l.b16 %v49
  %v416 = vunpack.c.l.b16 %v50
  %v417 = vunpack.c.l.b16 %v51
  %v418 = vunpack.c.l.b16 %v52
  %v419 = vunpack.c.l.b16 %v53
  %v420 = vunpack.c.l.b16 %v54
  %v421 = vunpack.c.l.b16 %v55
  %v422 = vunpack.c.l.b16 %v56
  %v423 = vunpack.c.l.b16 %v57
  %v424 = vunpack.c.l.b16 %v58
  %v425 = vunpack.c.l.b16 %v59
  %v426 = vunpack.c.l.b16 %v60
  %v427 = vunpack.c.l.b16 %v61
  %v428 = vunpack.c.l.b16 %v62
  %v429 = vunpack.c.l.b16 %v63
  %v430 = vunpack.c.l.b16 %v64
  %v431 = vunpack.c.l.b16 %v65
  %v432 = vunpack.c.l.b16 %v66
  %v433 = vunpack.c.l.b16 %v67
  %v434 = vunpack.c.l.b16 %v68
  %v435 = vunpack.c.l.b16 %v69
  %v436 = vunpack.c.l.b16 %v70
  %v437 = vunpack.c.l.b16 %v71
  %v438 = vunpack.c.l.b16 %v72
  %v439 = vunpack.c.l.b16 %v73
  %v440 = vunpack.c.l.b16 %v74
  %v441 = vunpack.c.l.b16 %v75
  %v442 = vunpack.c.l.b16 %v76
  %v443 = vunpack.c.l.b16 %v77
  %v444 = vunpack.c.l.b16 %v78
  %v445 = vunpack.c.l.b16 %v79
  %v446 = vunpack.c.l.b16 %v80
  %v447 = vunpack.c.l.b16 %v81
  %v448 = vunpack.c.l.b16 %v82
  %v449 = vunpack.c.l.b16 %v83
  %v450 = vunpack.c.l.b16 %v84
  %v451 = vunpack.c.l.b16 %v85
  %v452 = vunpack.c.l.b16 %v86
  %v453 = vunpack.c.l.b16 %v87
  %v454 = vunpack.c.l.b16 %v88
  %v455 = vunpack.c.l.b16 %v89
  %v456 = vunpack.c.l.b16 %v90
  %v457 = vunpack.c.l.b16 %v91
  %v458 = vunpack.c.l.b16 %v92
  %v459 = vunpack.c.l.b16 %v93
  %v460 = vunpack.c.l.b16 %v94
  %v461 = vunpack.c.l.b16 %v95
  %v462 = vunpack.c.l.b16 %v96
  %v463 = vunpack.c.l.b16 %v97
  %v464 = vunpack.c.l.b16 %v98
  %v465 = vunpack.c.l.b16 %v99
  %v466 = vunpack.c.l.b16 %v100
  %v467 = vunpack.c.l.b16 %v101
  %v468 = vunpack.c.l.b16 %v102
  %v469 = vunpack.c.l.b16 %v103
  %v470 = vunpack.c.l.b16 %v104
  %v471 = vunpack.c.l.b16 %v105
  %v472 = vunpack.c.l.b16 %v106
  %v473 = vunpack.c.l.b16 %v107
  %v474 = vunpack.c.l.b16 %v108
  %v475 = vunpack.c.l.b16 %v109
  %v476 = vunpack.c.l.b16 %v110
  %v477 = vunpack.c.l.b16 %v111
  %v478 = vunpack.c.l.b16 %v112
  %v479 = vunpack.c.l.b16 %v113
  %v480 = vunpack.c.l.b16 %v114
  %v481 = vunpack.c.l.b16 %v115
  %v482 = vunpack.c.l.b16 %v116
  %v483 = vpack.c.b16 %v412, %v411
  %v484 = vpack.c.b16 %v414, %v413
  %v485 = vpack.c.b16 %v416, %v415
  %v486 = vpack.c.b16 %v418, %v417
  %v487 = vpack.c.b16 %v420, %v419
  %v488 = vpack.c.b16 %v422, %v421
  %v489 = vpack.c.b16 %v424, %v423
  %v490 = vpack.c.b16 %v426, %v425
  %v491 = vpack.c.b16 %v428, %v427
  %v492 = vpack.c.b16 %v430, %v429
  %v493 = vpack.c.b16 %v432, %v431
  %v494 = vpack.c.b16 %v434, %v433
  %v495 = vpack.c.b16 %v436, %v435
  %v496 = vpack.c.b16 %v438, %v437
  %v497 = vpack.c.b16 %v440, %v439
  %v498 = vpack.c.b16 %v442, %v441
  %v499 = vpack.c.b16 %v444, %v443
  %v500 = vpack.c.b16 %v446, %v445
  %v501 = vpack.c.b16 %v448, %v447
  %v502 = vpack.c.b16 %v450, %v449
  %v503 = vpack.c.b16 %v452, %v451
  %v504 = vpack.c.b16 %v454, %v453
  %v505 = vpack.c.b16 %v456, %v455
  %v506 = vpack.c.b16 %v458, %v457
  %v507 = vpack.c.b16 %v460, %v459
  %v508 = vpack.c.b16 %v462, %v461
  %v509 = vpack.c.b16 %v464, %v463
  %v510 = vpack.c.b16 %v466, %v465
  %v511 = vpack.c.b16 %v468, %v467
  %v512 = vpack.c.b16 %v470, %v469
  %v513 = vpack.c.b16 %v472, %v471
  %v514 = vpack.c.b16 %v474, %v473
  %v515 = vpack.c.b16 %v476, %v475
  %v516 = vpack.c.b16 %v478, %v477
  %v517 = vpack.c.b16 %v480, %v479
  %v518 = vpack.c.b16 %v482, %v481
  %vm555 = vcmask 523264
  %v557 = vsel %vm555, %v307, 0
  %v560 = vsel %vm555, %v312, 0
  %v563 = vsel %vm555, %v317, 0
  %v566 = vsel %vm555, %v322, 0
  %568 = vmatprep.subr.bf16.mxu0 0
  %569 = vmatpush1.bf16.msra.mxu0 %v483
  %570 = vmatprep.subr.bf16.mxu0 0
  %571 = vmatpush1.bf16.msra.mxu0 %v484
  %572 = vmatprep.subr.bf16.mxu0 0
  %573 = vmatpush1.bf16.msra.mxu0 %v485
  %574 = vmatprep.subr.bf16.mxu0 0
  %575 = vmatpush1.bf16.msra.mxu0 %v486
  %576 = vmatprep.subr.bf16.mxu0 0
  %577 = vmatpush1.bf16.msra.mxu0 %v487
  %578 = vmatprep.subr.bf16.mxu0 0
  %579 = vmatpush1.bf16.msra.mxu0 %v488
  %580 = vmatprep.subr.bf16.mxu0 0
  %581 = vmatpush1.bf16.msra.mxu0 %v489
  %582 = vmatprep.subr.bf16.mxu0 0
  %583 = vmatpush1.bf16.msra.mxu0 %v490
  %584 = vmatprep.subr.bf16.mxu0 0
  %585 = vmatpush1.bf16.msra.mxu0 %v491
  %586 = vmatprep.subr.bf16.mxu0 0
  %587 = vmatpush1.bf16.msra.mxu0 %v492
  %588 = vmatprep.subr.bf16.mxu0 0
  %589 = vmatpush1.bf16.msra.mxu0 %v493
  %590 = vmatprep.subr.bf16.mxu0 0
  %591 = vmatpush1.bf16.msra.mxu0 %v494
  %592 = vmatprep.subr.bf16.mxu0 0
  %593 = vmatpush1.bf16.msra.mxu0 %v495
  %594 = vmatprep.subr.bf16.mxu0 0
  %595 = vmatpush1.bf16.msra.mxu0 %v496
  %596 = vmatprep.subr.bf16.mxu0 0
  %597 = vmatpush1.bf16.msra.mxu0 %v497
  %598 = vmatprep.subr.bf16.mxu0 0
  %599 = vmatpush1.bf16.msra.mxu0 %v498
  %600 = vmatprep.mubr.bf16.mxu0 %v304
  %601 = vmatmul.mubr.bf16.gmra.mrb[0].mxu0 %v303
  %v602 = vpop.f32.mrb[0].mxu0
  %v603 = vadd.f32 %v209, %v602
  %v604 = vpop.f32.mrb[0].mxu0
  %v605 = vpop.f32.mrb[0].mxu0
  %v606 = vadd.f32 %v212, %v605
  %v607 = vpop.f32.mrb[0].mxu0
  %608 = vmatprep.mubr.bf16.mxu0 %v309
  %609 = vmatmul.mubr.bf16.gmra.mrb[0].mxu0 %v308
  %v610 = vpop.f32.mrb[0].mxu0
  %v611 = vadd.f32 %v217, %v610
  %v612 = vpop.f32.mrb[0].mxu0
  %v613 = vpop.f32.mrb[0].mxu0
  %v614 = vadd.f32 %v220, %v613
  %v615 = vpop.f32.mrb[0].mxu0
  %616 = vmatprep.mubr.bf16.mxu0 %v314
  %617 = vmatmul.mubr.bf16.gmra.mrb[0].mxu0 %v313
  %v618 = vpop.f32.mrb[0].mxu0
  %v619 = vadd.f32 %v225, %v618
  %v620 = vpop.f32.mrb[0].mxu0
  %v621 = vpop.f32.mrb[0].mxu0
  %v622 = vadd.f32 %v228, %v621
  %v623 = vpop.f32.mrb[0].mxu0
  %624 = vmatprep.mubr.bf16.mxu0 %v319
  %625 = vmatmul.mubr.bf16.gmra.mrb[0].mxu0 %v318
  %v626 = vpop.f32.mrb[0].mxu0
  %v627 = vadd.f32 %v233, %v626
  %v628 = vpop.f32.mrb[0].mxu0
  %v629 = vpop.f32.mrb[0].mxu0
  %v630 = vadd.f32 %v236, %v629
  %v631 = vpop.f32.mrb[0].mxu0
  %632 = vdwg.mxu0
  %633 = vmatprep.subr.bf16.mxu0 0
  %634 = vmatpush1.bf16.msra.mxu0 %v499
  %635 = vmatprep.subr.bf16.mxu0 0
  %636 = vmatpush1.bf16.msra.mxu0 %v500
  %637 = vmatprep.subr.bf16.mxu0 0
  %638 = vmatpush1.bf16.msra.mxu0 %v501
  %639 = vmatprep.subr.bf16.mxu0 0
  %640 = vmatpush1.bf16.msra.mxu0 %v502
  %641 = vmatprep.subr.bf16.mxu0 0
  %642 = vmatpush1.bf16.msra.mxu0 %v503
  %643 = vmatprep.subr.bf16.mxu0 0
  %644 = vmatpush1.bf16.msra.mxu0 %v504
  %645 = vmatprep.subr.bf16.mxu0 0
  %646 = vmatpush1.bf16.msra.mxu0 %v505
  %647 = vmatprep.subr.bf16.mxu0 0
  %648 = vmatpush1.bf16.msra.mxu0 %v506
  %649 = vmatprep.subr.bf16.mxu0 0
  %650 = vmatpush1.bf16.msra.mxu0 %v507
  %651 = vmatprep.subr.bf16.mxu0 0
  %652 = vmatpush1.bf16.msra.mxu0 %v508
  %653 = vmatprep.subr.bf16.mxu0 0
  %654 = vmatpush1.bf16.msra.mxu0 %v509
  %655 = vmatprep.subr.bf16.mxu0 0
  %656 = vmatpush1.bf16.msra.mxu0 %v510
  %657 = vmatprep.subr.bf16.mxu0 0
  %658 = vmatpush1.bf16.msra.mxu0 %v511
  %659 = vmatprep.subr.bf16.mxu0 0
  %660 = vmatpush1.bf16.msra.mxu0 %v512
  %661 = vmatprep.subr.bf16.mxu0 0
  %662 = vmatpush1.bf16.msra.mxu0 %v513
  %663 = vmatprep.subr.bf16.mxu0 0
  %664 = vmatpush1.bf16.msra.mxu0 %v514
  %665 = vmatprep.mubr.bf16.mxu0 %v306
  %666 = vmatmul.mubr.bf16.gmra.mrb[0].mxu0 %v305
  %v667 = vpop.f32.mrb[0].mxu0
  %v668 = vadd.f32 %v603, %v667
  %v669 = vpop.f32.mrb[0].mxu0
  %v670 = vpop.f32.mrb[0].mxu0
  %v671 = vadd.f32 %v606, %v670
  %v672 = vpop.f32.mrb[0].mxu0
  %673 = vmatprep.mubr.bf16.mxu0 %v311
  %674 = vmatmul.mubr.bf16.gmra.mrb[0].mxu0 %v310
  %v675 = vpop.f32.mrb[0].mxu0
  %v676 = vadd.f32 %v611, %v675
  %v677 = vpop.f32.mrb[0].mxu0
  %v678 = vpop.f32.mrb[0].mxu0
  %v679 = vadd.f32 %v614, %v678
  %v680 = vpop.f32.mrb[0].mxu0
  %681 = vmatprep.mubr.bf16.mxu0 %v316
  %682 = vmatmul.mubr.bf16.gmra.mrb[0].mxu0 %v315
  %v683 = vpop.f32.mrb[0].mxu0
  %v684 = vadd.f32 %v619, %v683
  %v685 = vpop.f32.mrb[0].mxu0
  %v686 = vpop.f32.mrb[0].mxu0
  %v687 = vadd.f32 %v622, %v686
  %v688 = vpop.f32.mrb[0].mxu0
  %689 = vmatprep.mubr.bf16.mxu0 %v321
  %690 = vmatmul.mubr.bf16.gmra.mrb[0].mxu0 %v320
  %v691 = vpop.f32.mrb[0].mxu0
  %v692 = vadd.f32 %v627, %v691
  %v693 = vpop.f32.mrb[0].mxu0
  %v694 = vpop.f32.mrb[0].mxu0
  %v695 = vadd.f32 %v630, %v694
  %v696 = vpop.f32.mrb[0].mxu0
  %697 = vdwg.mxu0
  %698 = vmatprep.subr.bf16.mxu0 0
  %699 = vmatpush1.bf16.msra.mxu0 %v515
  %700 = vmatprep.subr.bf16.mxu0 0
  %701 = vmatpush1.bf16.msra.mxu0 %v516
  %702 = vmatprep.subr.bf16.mxu0 0
  %703 = vmatpush1.bf16.msra.mxu0 %v517
  %704 = vmatprep.subr.bf16.mxu0 0
  %705 = vmatpush1.bf16.msra.mxu0 %v518
  %706 = vmatprep.subr.bf16.mxu0 0
  %707 = vmatpush1.bf16.msra.mxu0 0
  %708 = vmatprep.subr.bf16.mxu0 0
  %709 = vmatpush1.bf16.msra.mxu0 0
  %710 = vmatprep.subr.bf16.mxu0 0
  %711 = vmatpush1.bf16.msra.mxu0 0
  %712 = vmatprep.subr.bf16.mxu0 0
  %713 = vmatpush1.bf16.msra.mxu0 0
  %714 = vmatprep.subr.bf16.mxu0 0
  %715 = vmatpush1.bf16.msra.mxu0 0
  %716 = vmatprep.subr.bf16.mxu0 0
  %717 = vmatpush1.bf16.msra.mxu0 0
  %718 = vmatprep.subr.bf16.mxu0 0
  %719 = vmatpush1.bf16.msra.mxu0 0
  %720 = vmatprep.subr.bf16.mxu0 0
  %721 = vmatpush1.bf16.msra.mxu0 0
  %722 = vmatprep.subr.bf16.mxu0 0
  %723 = vmatpush1.bf16.msra.mxu0 0
  %724 = vmatprep.subr.bf16.mxu0 0
  %725 = vmatpush1.bf16.msra.mxu0 0
  %726 = vmatprep.subr.bf16.mxu0 0
  %727 = vmatpush1.bf16.msra.mxu0 0
  %728 = vmatprep.subr.bf16.mxu0 0
  %729 = vmatpush1.bf16.msra.mxu0 0
  %730 = vmatprep.mubr.bf16.mxu0 0
  %731 = vmatmul.mubr.bf16.gmra.mrb[0].mxu0 %v557
  %v732 = vpop.f32.mrb[0].mxu0
  %v733 = vadd.f32 %v668, %v732
  %v734 = vpop.f32.mrb[0].mxu0
  %v735 = vpop.f32.mrb[0].mxu0
  %v736 = vadd.f32 %v671, %v735
  %v737 = vpop.f32.mrb[0].mxu0
  %738 = vmatprep.mubr.bf16.mxu0 0
  %739 = vmatmul.mubr.bf16.gmra.mrb[0].mxu0 %v560
  %v740 = vpop.f32.mrb[0].mxu0
  %v741 = vadd.f32 %v676, %v740
  %v742 = vpop.f32.mrb[0].mxu0
  %v743 = vpop.f32.mrb[0].mxu0
  %v744 = vadd.f32 %v679, %v743
  %v745 = vpop.f32.mrb[0].mxu0
  %746 = vmatprep.mubr.bf16.mxu0 0
  %747 = vmatmul.mubr.bf16.gmra.mrb[0].mxu0 %v563
  %v748 = vpop.f32.mrb[0].mxu0
  %v749 = vadd.f32 %v684, %v748
  %v750 = vpop.f32.mrb[0].mxu0
  %v751 = vpop.f32.mrb[0].mxu0
  %v752 = vadd.f32 %v687, %v751
  %v753 = vpop.f32.mrb[0].mxu0
  %754 = vmatprep.mubr.bf16.mxu0 0
  %755 = vmatmul.mubr.bf16.gmra.mrb[0].mxu0 %v566
  %v756 = vpop.f32.mrb[0].mxu0
  %v757 = vadd.f32 %v692, %v756
  %v758 = vpop.f32.mrb[0].mxu0
  %v759 = vpop.f32.mrb[0].mxu0
  %v760 = vadd.f32 %v695, %v759
  %v761 = vpop.f32.mrb[0].mxu0
  %762 = vdwg.mxu0
  %v763 = vld [vmem:[%s2] sm:$0xff]
  %v764 = vld [vmem:[%s2 + $0x8] sm:$0xff]
  %v765 = vld [vmem:[%s2 + $0x10] sm:$0xff]
  %v766 = vld [vmem:[%s2 + $0x18] sm:$0xff]
  %v767 = vld [vmem:[%s2 + $0x20] sm:$0xff]
  %v768 = vld [vmem:[%s2 + $0x28] sm:$0xff]
  %v769 = vld [vmem:[%s2 + $0x30] sm:$0xff]
  %v770 = vld [vmem:[%s2 + $0x38] sm:$0xff]
  %772 = vset.pattern.permute.xlu0 0
  %773 = vperm.xlu0 %772, %v763
  %v774 = vpop.permute.xlu0 %773
  %777 = vset.pattern.permute.xlu0 0
  %778 = vperm.xlu0 %777, %v764
  %v779 = vpop.permute.xlu0 %778
  %782 = vset.pattern.permute.xlu0 0
  %783 = vperm.xlu0 %782, %v765
  %v784 = vpop.permute.xlu0 %783
  %787 = vset.pattern.permute.xlu0 0
  %788 = vperm.xlu0 %787, %v766
  %v789 = vpop.permute.xlu0 %788
  %792 = vset.pattern.permute.xlu0 0
  %793 = vperm.xlu0 %792, %v767
  %v794 = vpop.permute.xlu0 %793
  %797 = vset.pattern.permute.xlu0 0
  %798 = vperm.xlu0 %797, %v768
  %v799 = vpop.permute.xlu0 %798
  %802 = vset.pattern.permute.xlu0 0
  %803 = vperm.xlu0 %802, %v769
  %v804 = vpop.permute.xlu0 %803
  %807 = vset.pattern.permute.xlu0 0
  %808 = vperm.xlu0 %807, %v770
  %v809 = vpop.permute.xlu0 %808
  %v811 = vadd.f32 %v733, %v774
  %v812 = vadd.f32 %v736, %v779
  %v813 = vadd.f32 %v741, %v784
  %v814 = vadd.f32 %v744, %v789
  %v815 = vadd.f32 %v749, %v794
  %v816 = vadd.f32 %v752, %v799
  %v817 = vadd.f32 %v757, %v804
  %v818 = vadd.f32 %v760, %v809
  %v819 = vmax.f32 %v811, 0.0
  %v820 = vmax.f32 %v812, 0.0
  %v821 = vmax.f32 %v813, 0.0
  %v822 = vmax.f32 %v814, 0.0
  %v823 = vmax.f32 %v815, 0.0
  %v824 = vmax.f32 %v816, 0.0
  %v825 = vmax.f32 %v817, 0.0
  %v826 = vmax.f32 %v818, 0.0
  %v827 = vpack.c.bf16 %v820, %v819
  %v828 = vpack.c.bf16 %v822, %v821
  %v829 = vpack.c.bf16 %v824, %v823
  %v830 = vpack.c.bf16 %v826, %v825
  %v835 = vunpack.c.l.b16 %v827
  %v836 = vunpack.c.h.b16 %v827
  %v837 = vunpack.c.l.b16 %v828
  %v838 = vunpack.c.h.b16 %v828
  %v839 = vunpack.c.l.b16 %v829
  %v840 = vunpack.c.h.b16 %v829
  %v841 = vunpack.c.l.b16 %v830
  %v842 = vunpack.c.h.b16 %v830
  %v843 = vpack.c.b16 %v835, %v835
  %v844 = vpack.c.b16 %v836, %v836
  %v845 = vpack.c.b16 %v837, %v837
  %v846 = vpack.c.b16 %v838, %v838
  %v847 = vpack.c.b16 %v839, %v839
  %v848 = vpack.c.b16 %v840, %v840
  %v849 = vpack.c.b16 %v841, %v841
  %v850 = vpack.c.b16 %v842, %v842
  %vm859 = vcmask 257024
  %860 = vst.msk [vmem:[%s5] sm:$0xf] %vm859, %v843
  %861 = vst.msk [vmem:[%s5 + $0x4] sm:$0xf] %vm859, %v844
  %862 = vst.msk [vmem:[%s5 + $0x8] sm:$0xf] %vm859, %v845
  %863 = vst.msk [vmem:[%s5 + $0xc] sm:$0xf] %vm859, %v846
  %864 = vst.msk [vmem:[%s5 + $0x10] sm:$0xf] %vm859, %v847
  %865 = vst.msk [vmem:[%s5 + $0x14] sm:$0xf] %vm859, %v848
  %866 = vst.msk [vmem:[%s5 + $0x18] sm:$0xf] %vm859, %v849
  %867 = vst.msk [vmem:[%s5 + $0x1c] sm:$0xf] %vm859, %v850
  // Predicated region
  $region22: #{resnet_forward.18} parent=0 // pred_check
    _
  $region23: #{resnet_forward.18} parent=0 // pred_check_branch
    %869 = sbr.rel (0) target = $region25
  $region24: #{resnet_forward.18} parent=0 // pred_region
    _
  $region25: #{resnet_forward.18} parent=0 // pred_fallthru
    _
  // Predicated region
  $region26: #{resnet_forward.18} parent=0 // pred_check
    _
  $region27: #{resnet_forward.18} parent=0 // pred_check_branch
    %871 = sbr.rel (0) target = $region29
  $region28: #{resnet_forward.18} parent=0 // pred_region
    _
  $region29: #{resnet_forward.18} parent=0 // pred_fallthru
    _

</llo_original>
